<compile_context>
chip_gen: v7x
topology: tpu7x:2x2x1
jax: 0.10.0
libtpu: 0.0.40
codegen_flags: <defaults>
</compile_context>

<pallas_src>
import functools

import jax
import jax.numpy as jnp
import numpy as np
from jax.experimental import pallas as pl
from jax.experimental.pallas import tpu as pltpu


# Left-pad columns inside the VMEM scratch so the interior image store starts at a
# bf16-tile-aligned sublane offset (16 rows per packed bf16 vreg).  Column _WPAD-1 is the
# conv's left halo (zero), columns [_WPAD, _WPAD+W) hold the image, column _WPAD+W is the
# right halo (zero).
_WPAD = 16


@functools.lru_cache(maxsize=None)
def _vmem_limit_bytes():
    """~3/4 of physical VMEM; conservative 48 MiB if the query is unavailable (v7x-safe)."""
    try:
        cap = int(pltpu.get_tpu_info().vmem_capacity_bytes)
    except Exception:  # noqa: BLE001 - attribute/availability differences across versions
        cap = 64 * 1024 * 1024
    return min((cap * 3) // 4, 100 * 1024 * 1024)


def _pick_row_tile(H, W, Cin, tn, pool, fuse_k, out_bytes, vmem_limit):
    """Largest row tile that divides H (even if pooling) and fits the VMEM budget."""
    step = 2 if pool else 1
    fixed = (H + 2) * (W + _WPAD + 1) * Cin * 2      # padded-image scratch (single buffer)
    fixed += 2 * H * W * Cin * 2                      # double-buffered input block
    fixed += 2 * 9 * Cin * tn * 2                     # double-buffered weight slab
    budget = int(vmem_limit * 0.8) - fixed
    best = step
    for t in range(step, H + 1, step):
        if H % t:
            continue
        rows = t * W
        per = rows * tn * 4                           # f32 accumulator
        per += 2 * rows * Cin * 2                     # tap-slice temporaries (rough)
        if fuse_k:
            per += rows * 9 * Cin * 2                 # fused im2col operand
        orows = (t // 2) * (W // 2) if pool else rows
        per += 2 * orows * tn * out_bytes             # double-buffered output block
        if per <= budget:
            best = t
    return best


# ---------------------------------------------------------------------------
# Fused 3x3 "same" conv (+ bias, optional ReLU, optional 2x2 maxpool) kernel.
#
# Blocks per grid step (n, co, r):
#   x_ref    : (1, H, W, Cin)              bf16  unpadded image, resident across (co, r)
#   w_ref    : (9, Cin, tn)                bf16  weight slab, resident across r
#   b_ref    : (1, tn)                     f32
#   o_ref    : (1, tho, Wo, tn)            out dtype (tho = th or th//2 if pooled)
#   xpad_ref : (1, H+2, W+_WPAD+1, Cin)    bf16  VMEM scratch, zero-padded copy per n
# ---------------------------------------------------------------------------
def _conv3x3_kernel(x_ref, w_ref, b_ref, o_ref, xpad_ref, *,
                    th, H, W, apply_relu, fuse_pool, fuse_k):
    Cin = x_ref.shape[3]
    tn = w_ref.shape[2]
    row0 = pl.program_id(2) * th          # first output row of this tile (unpadded)

    @pl.when((pl.program_id(1) == 0) & (pl.program_id(2) == 0))
    def _():
        # Zero-pad this batch element's image into VMEM once per n.  Replaces the old
        # per-layer jnp.pad pass that round-tripped the whole activation through HBM.
        xpad_ref[...] = jnp.zeros_like(xpad_ref)
        xpad_ref[0, pl.ds(1, H), pl.ds(_WPAD, W), :] = x_ref[0]

    def tap(dy, dx):
        # One shifted view of the padded image: (th, W, Cin) -> (th*W, Cin).
        t = xpad_ref[0, pl.ds(row0 + dy, th), pl.ds(_WPAD - 1 + dx, W), :]
        return t.reshape(th * W, Cin)

    if fuse_k:
        # Cin == 128 only: fold the 9 taps into one K = 1152 matmul (lane-aligned concat).
        lhs = jnp.concatenate(
            [tap(dy, dx) for dy in range(3) for dx in range(3)], axis=-1)
        wk = w_ref[...].reshape(9 * Cin, tn)
        acc = jnp.dot(lhs, wk, preferred_element_type=jnp.float32)
    else:
        # Cin = 3 / 64 (narrow) and Cin >= 256 (per-tap K already fills the MXU):
        # 9 accumulated dots, no im2col materialization.
        acc = jnp.zeros((th * W, tn), jnp.float32)
        for k in range(9):
            acc = acc + jnp.dot(tap(k // 3, k % 3), w_ref[k],
                                preferred_element_type=jnp.float32)

    acc = acc + b_ref[...]                 # f32 bias
    if apply_relu:
        acc = jnp.maximum(acc, 0.0)

    if fuse_pool:
        # Fused MaxPool2d(2, 2) on the f32 accumulator (rows are (y, x) row-major).
        y = acc.reshape(th * (W // 2), 2, tn)
        y = jnp.max(y, axis=1)                      # pool along W
        y = y.reshape(th // 2, 2, W // 2, tn)
        y = jnp.max(y, axis=1)                      # pool along H
        o_ref[0] = y.astype(o_ref.dtype)
    else:
        o_ref[0] = acc.reshape(th, W, tn).astype(o_ref.dtype)


def conv3x3_block(x, w, b, *, apply_relu, fuse_pool, out_dtype=jnp.bfloat16):
    """x: (N, H, W, Cin) unpadded NHWC ; w: (3, 3, Cin, Cout) HWIO ; b: (Cout,)."""
    N, H, W, Cin = x.shape
    Cout = w.shape[-1]
    if fuse_pool:
        assert H % 2 == 0 and W % 2 == 0, "MaxPool2d(2,2) fusion requires even H, W"

    tn = Cout if Cout <= 128 else 256                 # 256-wide MXU tile on conv3/conv4
    assert Cout % tn == 0
    fuse_k = (Cin == 128)                             # fused K only where it helps
    out_bytes = jnp.dtype(out_dtype).itemsize
    vmem_limit = _vmem_limit_bytes()
    th = _pick_row_tile(H, W, Cin, tn, fuse_pool, fuse_k, out_bytes, vmem_limit)

    Ho, Wo = (H // 2, W // 2) if fuse_pool else (H, W)
    tho = th // 2 if fuse_pool else th

    xb = x.astype(jnp.bfloat16)
    wf = w.reshape(9, Cin, Cout).astype(jnp.bfloat16)
    bf = b.reshape(1, Cout).astype(jnp.float32)

    kernel = functools.partial(
        _conv3x3_kernel, th=th, H=H, W=W,
        apply_relu=apply_relu, fuse_pool=fuse_pool, fuse_k=fuse_k)

    return pl.pallas_call(
        kernel,
        out_shape=jax.ShapeDtypeStruct((N, Ho, Wo, Cout), out_dtype),
        grid=(N, Cout // tn, H // th),
        in_specs=[
            # Unpadded image: resident per batch element across (co, r).
            pl.BlockSpec((1, H, W, Cin), lambda n, co, r: (n, 0, 0, 0)),
            # Weight slab: resident across the inner spatial axis.
            pl.BlockSpec((9, Cin, tn), lambda n, co, r: (0, 0, co)),
            pl.BlockSpec((1, tn), lambda n, co, r: (0, co)),
        ],
        out_specs=pl.BlockSpec((1, tho, Wo, tn), lambda n, co, r: (n, r, 0, co)),
        scratch_shapes=[pltpu.VMEM((1, H + 2, W + _WPAD + 1, Cin), jnp.bfloat16)],
        compiler_params=pltpu.CompilerParams(
            # n is megacore-parallel; co/r reuse the per-n padded-image scratch.
            dimension_semantics=("parallel", "arbitrary", "arbitrary"),
            vmem_limit_bytes=vmem_limit),
    )(xb, wf, bf)


# ---------------------------------------------------------------------------
# VGG16 features[:conv4_3+1]  (slice ends at conv4_3: no relu4_3, no pool4).
# Each entry: (Cin, Cout, relu_after, maxpool_after)
# ---------------------------------------------------------------------------
VGG_CFG = [
    (3,   64,  True,  False),   # conv1_1 + relu
    (64,  64,  True,  True),    # conv1_2 + relu + pool1
    (64,  128, True,  False),   # conv2_1 + relu
    (128, 128, True,  True),    # conv2_2 + relu + pool2
    (128, 256, True,  False),   # conv3_1 + relu
    (256, 256, True,  False),   # conv3_2 + relu
    (256, 256, True,  True),    # conv3_3 + relu + pool3
    (256, 512, True,  False),   # conv4_1 + relu
    (512, 512, True,  False),   # conv4_2 + relu
    (512, 512, False, False),   # conv4_3 (last layer of the slice)
]
NUM_CHANNELS = 512


def init_params(key):
    """Deterministic synthetic weights (He-style init); HWIO conv layout, f32."""
    params = []
    for cin, cout, _, _ in VGG_CFG:
        key, kw, kb = jax.random.split(key, 3)
        std = (2.0 / (9 * cin)) ** 0.5
        w = jax.random.normal(kw, (3, 3, cin, cout), jnp.float32) * std
        b = jax.random.normal(kb, (cout,), jnp.float32) * 0.01
        params.append((w, b))
    return params


def dense_feature_extraction(x_nchw, params):
    x = jnp.transpose(x_nchw, (0, 2, 3, 1))                      # NCHW -> NHWC
    n_layers = len(VGG_CFG)
    for i, ((_, _, relu, pool), (w, b)) in enumerate(zip(VGG_CFG, params)):
        last = (i == n_layers - 1)
        x = conv3x3_block(x, w, b, apply_relu=relu, fuse_pool=pool,
                          out_dtype=jnp.float32 if last else jnp.bfloat16)
    return jnp.transpose(x, (0, 3, 1, 2))                        # NHWC -> NCHW


# ---------------------------------------------------------------------------
# Pure-JAX reference (XLA conv / reduce_window) mirroring the kernel's dtype strategy
# (bf16 storage, f32 accumulation).  Used for per-layer and end-to-end checks.
# ---------------------------------------------------------------------------
def reference_layer(x_nhwc, w, b, relu, pool):
    y = jax.lax.conv_general_dilated(
        x_nhwc.astype(jnp.bfloat16), w.astype(jnp.bfloat16),
        window_strides=(1, 1), padding="SAME",
        dimension_numbers=("NHWC", "HWIO", "NHWC"),
        preferred_element_type=jnp.float32)
    y = y + b.astype(jnp.float32)
    if relu:
        y = jnp.maximum(y, 0.0)
    if pool:
        y = jax.lax.reduce_window(y, -jnp.inf, jax.lax.max,
                                  (1, 2, 2, 1), (1, 2, 2, 1), "VALID")
    return y


def _to_np_f32(a):
    return np.asarray(jnp.asarray(a, jnp.float32))


if __name__ == "__main__":
    key = jax.random.PRNGKey(0)
    kx, kp = jax.random.split(key)

    # PyTorch-style NCHW input: batch=2, 3 input channels, 16x16 spatial.
    x = jax.random.normal(kx, (2, 3, 16, 16), jnp.float32)
    params = init_params(kp)

    # Per-layer check: feed each layer the *reference* chain's bf16 input so kernel vs XLA
    # differences do not accumulate (catches tap/weight ordering and pooling bugs tightly).
    n_layers = len(VGG_CFG)
    xl = jnp.transpose(x, (0, 2, 3, 1)).astype(jnp.bfloat16)
    for i, ((_, _, relu, pool), (w, b)) in enumerate(zip(VGG_CFG, params)):
        last = (i == n_layers - 1)
        odt = jnp.float32 if last else jnp.bfloat16
        y_k = jax.block_until_ready(
            conv3x3_block(xl, w, b, apply_relu=relu, fuse_pool=pool, out_dtype=odt))
        y_r = jax.block_until_ready(reference_layer(xl, w, b, relu, pool))
        np.testing.assert_allclose(_to_np_f32(y_k), _to_np_f32(y_r.astype(odt)),
                                   rtol=2e-2, atol=2e-2, err_msg=f"layer {i}")
        xl = y_r.astype(odt)
    ref_nchw = _to_np_f32(jnp.transpose(xl, (0, 3, 1, 2)))

    # End-to-end chained run (kernel outputs feed kernel inputs).
    out = jax.block_until_ready(jax.jit(dense_feature_extraction)(x, params))
    assert out.shape == (2, NUM_CHANNELS, 2, 2), out.shape
    np.testing.assert_allclose(_to_np_f32(out), ref_nchw, rtol=3e-2, atol=3e-2)

    print("KERNEL_OK")
</pallas_src>

<mosaic_0001>
module attributes {stable_mosaic.version = 11 : i64} {
  func.func @_conv3x3_kernel(%arg0: i32, %arg1: i32, %arg2: i32, %arg3: memref<1x16x16x3xbf16, #tpu.memory_space<vmem>>, %arg4: memref<9x3x64xbf16, #tpu.memory_space<vmem>>, %arg5: memref<1x64xf32, #tpu.memory_space<vmem>>, %arg6: memref<1x16x16x64xbf16, #tpu.memory_space<vmem>>, %arg7: memref<1x18x33x3xbf16, #tpu.memory_space<vmem>>) attributes {dimension_semantics = [#tpu.dimension_semantics<parallel>, #tpu.dimension_semantics<arbitrary>, #tpu.dimension_semantics<arbitrary>], iteration_bounds = array<i64: 2, 1, 1>, scalar_prefetch = 0 : i64, scratch_operands = 1 : i64, tpu.core_type = #tpu.core_type<tc>, window_params = [{transform_indices = @transform_0, window_bounds = array<i64: 1, 16, 16, 3>}, {transform_indices = @transform_1, window_bounds = array<i64: 9, 3, 64>}, {transform_indices = @transform_2, window_bounds = array<i64: 1, 64>}, {transform_indices = @transform_3, window_bounds = array<i64: 1, 16, 16, 64>}]} {
    %c16_i32 = arith.constant 16 : i32
    %0 = arith.muli %arg2, %c16_i32 : i32
    %c0_i32 = arith.constant 0 : i32
    %1 = arith.cmpi eq, %arg1, %c0_i32 : i32
    %c0_i32_0 = arith.constant 0 : i32
    %2 = arith.cmpi eq, %arg2, %c0_i32_0 : i32
    %3 = arith.andi %1, %2 : i1
    %4 = arith.extui %3 : i1 to i32
    %c0_i32_1 = arith.constant 0 : i32
    %5 = arith.cmpi ne, %4, %c0_i32_1 : i32
    scf.if %5 {
      %cst_67 = arith.constant 0.000000e+00 : bf16
      %98 = vector.broadcast %cst_67 : bf16 to vector<1x18x33x3xbf16>
      %c0_68 = arith.constant 0 : index
      %c0_69 = arith.constant 0 : index
      %c0_70 = arith.constant 0 : index
      %c0_71 = arith.constant 0 : index
      %99 = vector.load %arg7[%c0_68, %c0_69, %c0_70, %c0_71] : memref<1x18x33x3xbf16, #tpu.memory_space<vmem>>, vector<1x18x33x3xbf16>
      tpu.vector_store %arg7[%c0_68, %c0_69, %c0_70, %c0_71], %98 {strides = array<i32>} : memref<1x18x33x3xbf16, #tpu.memory_space<vmem>>, vector<1x18x33x3xbf16>,
      %c0_72 = arith.constant 0 : index
      %c0_73 = arith.constant 0 : index
      %c0_74 = arith.constant 0 : index
      %c0_75 = arith.constant 0 : index
      %100 = vector.load %arg3[%c0_72, %c0_73, %c0_74, %c0_75] : memref<1x16x16x3xbf16, #tpu.memory_space<vmem>>, vector<1x16x16x3xbf16>
      %101 = vector.shape_cast %100 : vector<1x16x16x3xbf16> to vector<16x16x3xbf16>
      %c0_76 = arith.constant 0 : index
      %c1_77 = arith.constant 1 : index
      %c16_78 = arith.constant 16 : index
      %c0_79 = arith.constant 0 : index
      %102 = vector.load %arg7[%c0_76, %c1_77, %c16_78, %c0_79] : memref<1x18x33x3xbf16, #tpu.memory_space<vmem>>, vector<1x16x16x3xbf16>
      %103 = vector.shape_cast %102 : vector<1x16x16x3xbf16> to vector<16x16x3xbf16>
      %104 = vector.shape_cast %101 : vector<16x16x3xbf16> to vector<1x16x16x3xbf16>
      tpu.vector_store %arg7[%c0_76, %c1_77, %c16_78, %c0_79], %104 {strides = array<i32>} : memref<1x18x33x3xbf16, #tpu.memory_space<vmem>>, vector<1x16x16x3xbf16>,
    } else {
    }
    %cst = arith.constant 0.000000e+00 : f32
    %6 = vector.broadcast %cst : f32 to vector<256x64xf32>
    %c0_i32_2 = arith.constant 0 : i32
    %7 = arith.addi %0, %c0_i32_2 : i32
    %c0 = arith.constant 0 : index
    %8 = arith.index_cast %7 : i32 to index
    %c15 = arith.constant 15 : index
    %c0_3 = arith.constant 0 : index
    %9 = vector.load %arg7[%c0, %8, %c15, %c0_3] : memref<1x18x33x3xbf16, #tpu.memory_space<vmem>>, vector<1x16x16x3xbf16>
    %10 = vector.shape_cast %9 : vector<1x16x16x3xbf16> to vector<16x16x3xbf16>
    %11 = vector.shape_cast %10 : vector<16x16x3xbf16> to vector<256x3xbf16>
    %c0_4 = arith.constant 0 : index
    %c0_5 = arith.constant 0 : index
    %c0_6 = arith.constant 0 : index
    %12 = vector.load %arg4[%c0_4, %c0_5, %c0_6] : memref<9x3x64xbf16, #tpu.memory_space<vmem>>, vector<1x3x64xbf16>
    %13 = vector.shape_cast %12 : vector<1x3x64xbf16> to vector<3x64xbf16>
    %cst_7 = arith.constant dense<0.000000e+00> : vector<256x64xf32>
    %14 = tpu.matmul %11, %13, %cst_7 {dimension_numbers = #tpu.dot_dimension_numbers<[1], [0], [0], [1], [0, 0, 1, 1], [], []>} : vector<256x3xbf16>, vector<3x64xbf16>, vector<256x64xf32> -> vector<256x64xf32>
    %15 = arith.addf %6, %14 : vector<256x64xf32>
    %c0_i32_8 = arith.constant 0 : i32
    %16 = arith.addi %0, %c0_i32_8 : i32
    %c0_9 = arith.constant 0 : index
    %17 = arith.index_cast %16 : i32 to index
    %c16 = arith.constant 16 : index
    %c0_10 = arith.constant 0 : index
    %18 = vector.load %arg7[%c0_9, %17, %c16, %c0_10] : memref<1x18x33x3xbf16, #tpu.memory_space<vmem>>, vector<1x16x16x3xbf16>
    %19 = vector.shape_cast %18 : vector<1x16x16x3xbf16> to vector<16x16x3xbf16>
    %20 = vector.shape_cast %19 : vector<16x16x3xbf16> to vector<256x3xbf16>
    %c1 = arith.constant 1 : index
    %c0_11 = arith.constant 0 : index
    %c0_12 = arith.constant 0 : index
    %21 = vector.load %arg4[%c1, %c0_11, %c0_12] : memref<9x3x64xbf16, #tpu.memory_space<vmem>>, vector<1x3x64xbf16>
    %22 = vector.shape_cast %21 : vector<1x3x64xbf16> to vector<3x64xbf16>
    %cst_13 = arith.constant dense<0.000000e+00> : vector<256x64xf32>
    %23 = tpu.matmul %20, %22, %cst_13 {dimension_numbers = #tpu.dot_dimension_numbers<[1], [0], [0], [1], [0, 0, 1, 1], [], []>} : vector<256x3xbf16>, vector<3x64xbf16>, vector<256x64xf32> -> vector<256x64xf32>
    %24 = arith.addf %15, %23 : vector<256x64xf32>
    %c0_i32_14 = arith.constant 0 : i32
    %25 = arith.addi %0, %c0_i32_14 : i32
    %c0_15 = arith.constant 0 : index
    %26 = arith.index_cast %25 : i32 to index
    %c17 = arith.constant 17 : index
    %c0_16 = arith.constant 0 : index
    %27 = vector.load %arg7[%c0_15, %26, %c17, %c0_16] : memref<1x18x33x3xbf16, #tpu.memory_space<vmem>>, vector<1x16x16x3xbf16>
    %28 = vector.shape_cast %27 : vector<1x16x16x3xbf16> to vector<16x16x3xbf16>
    %29 = vector.shape_cast %28 : vector<16x16x3xbf16> to vector<256x3xbf16>
    %c2 = arith.constant 2 : index
    %c0_17 = arith.constant 0 : index
    %c0_18 = arith.constant 0 : index
    %30 = vector.load %arg4[%c2, %c0_17, %c0_18] : memref<9x3x64xbf16, #tpu.memory_space<vmem>>, vector<1x3x64xbf16>
    %31 = vector.shape_cast %30 : vector<1x3x64xbf16> to vector<3x64xbf16>
    %cst_19 = arith.constant dense<0.000000e+00> : vector<256x64xf32>
    %32 = tpu.matmul %29, %31, %cst_19 {dimension_numbers = #tpu.dot_dimension_numbers<[1], [0], [0], [1], [0, 0, 1, 1], [], []>} : vector<256x3xbf16>, vector<3x64xbf16>, vector<256x64xf32> -> vector<256x64xf32>
    %33 = arith.addf %24, %32 : vector<256x64xf32>
    %c1_i32 = arith.constant 1 : i32
    %34 = arith.addi %0, %c1_i32 : i32
    %c0_20 = arith.constant 0 : index
    %35 = arith.index_cast %34 : i32 to index
    %c15_21 = arith.constant 15 : index
    %c0_22 = arith.constant 0 : index
    %36 = vector.load %arg7[%c0_20, %35, %c15_21, %c0_22] : memref<1x18x33x3xbf16, #tpu.memory_space<vmem>>, vector<1x16x16x3xbf16>
    %37 = vector.shape_cast %36 : vector<1x16x16x3xbf16> to vector<16x16x3xbf16>
    %38 = vector.shape_cast %37 : vector<16x16x3xbf16> to vector<256x3xbf16>
    %c3 = arith.constant 3 : index
    %c0_23 = arith.constant 0 : index
    %c0_24 = arith.constant 0 : index
    %39 = vector.load %arg4[%c3, %c0_23, %c0_24] : memref<9x3x64xbf16, #tpu.memory_space<vmem>>, vector<1x3x64xbf16>
    %40 = vector.shape_cast %39 : vector<1x3x64xbf16> to vector<3x64xbf16>
    %cst_25 = arith.constant dense<0.000000e+00> : vector<256x64xf32>
    %41 = tpu.matmul %38, %40, %cst_25 {dimension_numbers = #tpu.dot_dimension_numbers<[1], [0], [0], [1], [0, 0, 1, 1], [], []>} : vector<256x3xbf16>, vector<3x64xbf16>, vector<256x64xf32> -> vector<256x64xf32>
    %42 = arith.addf %33, %41 : vector<256x64xf32>
    %c1_i32_26 = arith.constant 1 : i32
    %43 = arith.addi %0, %c1_i32_26 : i32
    %c0_27 = arith.constant 0 : index
    %44 = arith.index_cast %43 : i32 to index
    %c16_28 = arith.constant 16 : index
    %c0_29 = arith.constant 0 : index
    %45 = vector.load %arg7[%c0_27, %44, %c16_28, %c0_29] : memref<1x18x33x3xbf16, #tpu.memory_space<vmem>>, vector<1x16x16x3xbf16>
    %46 = vector.shape_cast %45 : vector<1x16x16x3xbf16> to vector<16x16x3xbf16>
    %47 = vector.shape_cast %46 : vector<16x16x3xbf16> to vector<256x3xbf16>
    %c4 = arith.constant 4 : index
    %c0_30 = arith.constant 0 : index
    %c0_31 = arith.constant 0 : index
    %48 = vector.load %arg4[%c4, %c0_30, %c0_31] : memref<9x3x64xbf16, #tpu.memory_space<vmem>>, vector<1x3x64xbf16>
    %49 = vector.shape_cast %48 : vector<1x3x64xbf16> to vector<3x64xbf16>
    %cst_32 = arith.constant dense<0.000000e+00> : vector<256x64xf32>
    %50 = tpu.matmul %47, %49, %cst_32 {dimension_numbers = #tpu.dot_dimension_numbers<[1], [0], [0], [1], [0, 0, 1, 1], [], []>} : vector<256x3xbf16>, vector<3x64xbf16>, vector<256x64xf32> -> vector<256x64xf32>
    %51 = arith.addf %42, %50 : vector<256x64xf32>
    %c1_i32_33 = arith.constant 1 : i32
    %52 = arith.addi %0, %c1_i32_33 : i32
    %c0_34 = arith.constant 0 : index
    %53 = arith.index_cast %52 : i32 to index
    %c17_35 = arith.constant 17 : index
    %c0_36 = arith.constant 0 : index
    %54 = vector.load %arg7[%c0_34, %53, %c17_35, %c0_36] : memref<1x18x33x3xbf16, #tpu.memory_space<vmem>>, vector<1x16x16x3xbf16>
    %55 = vector.shape_cast %54 : vector<1x16x16x3xbf16> to vector<16x16x3xbf16>
    %56 = vector.shape_cast %55 : vector<16x16x3xbf16> to vector<256x3xbf16>
    %c5 = arith.constant 5 : index
    %c0_37 = arith.constant 0 : index
    %c0_38 = arith.constant 0 : index
    %57 = vector.load %arg4[%c5, %c0_37, %c0_38] : memref<9x3x64xbf16, #tpu.memory_space<vmem>>, vector<1x3x64xbf16>
    %58 = vector.shape_cast %57 : vector<1x3x64xbf16> to vector<3x64xbf16>
    %cst_39 = arith.constant dense<0.000000e+00> : vector<256x64xf32>
    %59 = tpu.matmul %56, %58, %cst_39 {dimension_numbers = #tpu.dot_dimension_numbers<[1], [0], [0], [1], [0, 0, 1, 1], [], []>} : vector<256x3xbf16>, vector<3x64xbf16>, vector<256x64xf32> -> vector<256x64xf32>
    %60 = arith.addf %51, %59 : vector<256x64xf32>
    %c2_i32 = arith.constant 2 : i32
    %61 = arith.addi %0, %c2_i32 : i32
    %c0_40 = arith.constant 0 : index
    %62 = arith.index_cast %61 : i32 to index
    %c15_41 = arith.constant 15 : index
    %c0_42 = arith.constant 0 : index
    %63 = vector.load %arg7[%c0_40, %62, %c15_41, %c0_42] : memref<1x18x33x3xbf16, #tpu.memory_space<vmem>>, vector<1x16x16x3xbf16>
    %64 = vector.shape_cast %63 : vector<1x16x16x3xbf16> to vector<16x16x3xbf16>
    %65 = vector.shape_cast %64 : vector<16x16x3xbf16> to vector<256x3xbf16>
    %c6 = arith.constant 6 : index
    %c0_43 = arith.constant 0 : index
    %c0_44 = arith.constant 0 : index
    %66 = vector.load %arg4[%c6, %c0_43, %c0_44] : memref<9x3x64xbf16, #tpu.memory_space<vmem>>, vector<1x3x64xbf16>
    %67 = vector.shape_cast %66 : vector<1x3x64xbf16> to vector<3x64xbf16>
    %cst_45 = arith.constant dense<0.000000e+00> : vector<256x64xf32>
    %68 = tpu.matmul %65, %67, %cst_45 {dimension_numbers = #tpu.dot_dimension_numbers<[1], [0], [0], [1], [0, 0, 1, 1], [], []>} : vector<256x3xbf16>, vector<3x64xbf16>, vector<256x64xf32> -> vector<256x64xf32>
    %69 = arith.addf %60, %68 : vector<256x64xf32>
    %c2_i32_46 = arith.constant 2 : i32
    %70 = arith.addi %0, %c2_i32_46 : i32
    %c0_47 = arith.constant 0 : index
    %71 = arith.index_cast %70 : i32 to index
    %c16_48 = arith.constant 16 : index
    %c0_49 = arith.constant 0 : index
    %72 = vector.load %arg7[%c0_47, %71, %c16_48, %c0_49] : memref<1x18x33x3xbf16, #tpu.memory_space<vmem>>, vector<1x16x16x3xbf16>
    %73 = vector.shape_cast %72 : vector<1x16x16x3xbf16> to vector<16x16x3xbf16>
    %74 = vector.shape_cast %73 : vector<16x16x3xbf16> to vector<256x3xbf16>
    %c7 = arith.constant 7 : index
    %c0_50 = arith.constant 0 : index
    %c0_51 = arith.constant 0 : index
    %75 = vector.load %arg4[%c7, %c0_50, %c0_51] : memref<9x3x64xbf16, #tpu.memory_space<vmem>>, vector<1x3x64xbf16>
    %76 = vector.shape_cast %75 : vector<1x3x64xbf16> to vector<3x64xbf16>
    %cst_52 = arith.constant dense<0.000000e+00> : vector<256x64xf32>
    %77 = tpu.matmul %74, %76, %cst_52 {dimension_numbers = #tpu.dot_dimension_numbers<[1], [0], [0], [1], [0, 0, 1, 1], [], []>} : vector<256x3xbf16>, vector<3x64xbf16>, vector<256x64xf32> -> vector<256x64xf32>
    %78 = arith.addf %69, %77 : vector<256x64xf32>
    %c2_i32_53 = arith.constant 2 : i32
    %79 = arith.addi %0, %c2_i32_53 : i32
    %c0_54 = arith.constant 0 : index
    %80 = arith.index_cast %79 : i32 to index
    %c17_55 = arith.constant 17 : index
    %c0_56 = arith.constant 0 : index
    %81 = vector.load %arg7[%c0_54, %80, %c17_55, %c0_56] : memref<1x18x33x3xbf16, #tpu.memory_space<vmem>>, vector<1x16x16x3xbf16>
    %82 = vector.shape_cast %81 : vector<1x16x16x3xbf16> to vector<16x16x3xbf16>
    %83 = vector.shape_cast %82 : vector<16x16x3xbf16> to vector<256x3xbf16>
    %c8 = arith.constant 8 : index
    %c0_57 = arith.constant 0 : index
    %c0_58 = arith.constant 0 : index
    %84 = vector.load %arg4[%c8, %c0_57, %c0_58] : memref<9x3x64xbf16, #tpu.memory_space<vmem>>, vector<1x3x64xbf16>
    %85 = vector.shape_cast %84 : vector<1x3x64xbf16> to vector<3x64xbf16>
    %cst_59 = arith.constant dense<0.000000e+00> : vector<256x64xf32>
    %86 = tpu.matmul %83, %85, %cst_59 {dimension_numbers = #tpu.dot_dimension_numbers<[1], [0], [0], [1], [0, 0, 1, 1], [], []>} : vector<256x3xbf16>, vector<3x64xbf16>, vector<256x64xf32> -> vector<256x64xf32>
    %87 = arith.addf %78, %86 : vector<256x64xf32>
    %c0_60 = arith.constant 0 : index
    %c0_61 = arith.constant 0 : index
    %88 = vector.load %arg5[%c0_60, %c0_61] : memref<1x64xf32, #tpu.memory_space<vmem>>, vector<1x64xf32>
    %89 = vector.broadcast %88 : vector<1x64xf32> to vector<256x64xf32>
    %90 = arith.addf %87, %89 : vector<256x64xf32>
    %cst_62 = arith.constant 0.000000e+00 : f32
    %91 = vector.broadcast %cst_62 : f32 to vector<256x64xf32>
    %92 = arith.maximumf %90, %91 : vector<256x64xf32>
    %93 = vector.shape_cast %92 : vector<256x64xf32> to vector<16x16x64xf32>
    %94 = arith.truncf %93 : vector<16x16x64xf32> to vector<16x16x64xbf16>
    %c0_63 = arith.constant 0 : index
    %c0_64 = arith.constant 0 : index
    %c0_65 = arith.constant 0 : index
    %c0_66 = arith.constant 0 : index
    %95 = vector.load %arg6[%c0_63, %c0_64, %c0_65, %c0_66] : memref<1x16x16x64xbf16, #tpu.memory_space<vmem>>, vector<1x16x16x64xbf16>
    %96 = vector.shape_cast %95 : vector<1x16x16x64xbf16> to vector<16x16x64xbf16>
    %97 = vector.shape_cast %94 : vector<16x16x64xbf16> to vector<1x16x16x64xbf16>
    tpu.vector_store %arg6[%c0_63, %c0_64, %c0_65, %c0_66], %97 {strides = array<i32>} : memref<1x16x16x64xbf16, #tpu.memory_space<vmem>>, vector<1x16x16x64xbf16>,
    return
  }
  func.func @transform_0(%arg0: i32, %arg1: i32, %arg2: i32) -> (i32, i32, i32, i32) {
    %c0_i32 = arith.constant 0 : i32
    %c0_i32_0 = arith.constant 0 : i32
    %c0_i32_1 = arith.constant 0 : i32
    %c0_i32_2 = arith.constant 0 : i32
    return %arg0, %c0_i32, %c0_i32_0, %c0_i32_1 : i32, i32, i32, i32
  }
  func.func @transform_1(%arg0: i32, %arg1: i32, %arg2: i32) -> (i32, i32, i32) {
    %c0_i32 = arith.constant 0 : i32
    %c0_i32_0 = arith.constant 0 : i32
    %c0_i32_1 = arith.constant 0 : i32
    return %c0_i32, %c0_i32_0, %arg1 : i32, i32, i32
  }
  func.func @transform_2(%arg0: i32, %arg1: i32, %arg2: i32) -> (i32, i32) {
    %c0_i32 = arith.constant 0 : i32
    %c0_i32_0 = arith.constant 0 : i32
    return %c0_i32, %arg1 : i32, i32
  }
  func.func @transform_3(%arg0: i32, %arg1: i32, %arg2: i32) -> (i32, i32, i32, i32) {
    %c0_i32 = arith.constant 0 : i32
    %c0_i32_0 = arith.constant 0 : i32
    return %arg0, %arg2, %c0_i32, %arg1 : i32, i32, i32, i32
  }
}

</mosaic_0001>

<llo_original>
// kernel: tpu_custom_call.1
$region0: #{tpu_custom_call.1}
  #allocation0 [shape = 'u32[]', space=smem, size = 0x4, offset = 0x4, fixed_abs, tag = 'smem constant byte address 0x4 - core index']
  #allocation1 [shape = 'u32[144,128]{1,0:T(1,128)}', space=vmem, size = 0x12000, scoped, tag = 'internal scratch']
  #allocation2 [shape = 'bf16[1,18,33,3]{3,2,1,0:T(8,128)(2,1)}', space=vmem, size = 0x2d000, scoped, tag = 'scratch operand']
  %s0 = inlined_call_operand.vmem [shape: bf16[2,16,16,3], index: 0, kind: input, shape index: {}]
  %s1 = inlined_call_operand.vmem [shape: bf16[9,3,64], index: 1, kind: input, shape index: {}]
  %s2 = inlined_call_operand.vmem [shape: f32[1,64], index: 2, kind: input, shape index: {}]
  %s3 = inlined_call_operand.hbm [shape: bf16[2,16,16,64], index: 3, kind: output, shape index: {}]
  %s4 = sld [smem:[#allocation0]]
  $region49: #{tpu_custom_call.1} parent=0
    _
  %s6 = ssub.s32 1, %s4
  %s7 = scalar_select 0, %s6, %s4
  $region1: #{tpu_custom_call.1} parent=0
    #allocation3 [shape = 'u8[131072]{0}', space=vmem, size = 0x20000, scoped, tag = 'output window, operand 0']
    #allocation4 [shape = 's32[2]{0}', space=sflag, size = 0x8, scoped, tag = 'scoped memory for tpu_custom_call.1']
    %8 = vsyncpa [#allocation4], 0
    %s9 = scalar_lea.sflag [#allocation4], 1
    %10 = vsyncpa %s9, 0
    loop: start=0, step=1, limit=4
    $region2: #{tpu_custom_call.1} parent=1 // loop_pre_header
      _
    $region3: #{tpu_custom_call.1} parent=1 // loop_header
      %s12 = sphi 0, %s16
      %p13 = scmp.ge.s32.totalorder %s12, 4
      %s19 = sphi 0, %s38
      %s20 = sphi 0, %s34
      %s21 = sphi 0, %s30
      %s22 = sphi 0, %s19
      %s23 = sphi 0, %s20
      %s24 = sphi 0, %s21
      %s25 = sphi 0, %s22
      %s26 = sphi 0, %s23
      %s27 = sphi 0, %s24
      %s41 = sphi 0, %s43
      %s44 = sphi 0, %s41
      %s45 = sphi 0, %s44
      %s61 = sphi 0, %s45
      %s67 = sphi 0, %s69
      %s70 = sphi 0, %s67
      %s71 = sphi 0, %s70
      %s87 = sphi 0, %s71
      %s93 = sphi 0, %s95
      %s96 = sphi 0, %s93
      %s97 = sphi 0, %s96
      %s113 = sphi 0, %s97
      %s123 = sphi 0, %s125
      %s126 = sphi 0, %s123
      %s127 = sphi 0, %s126
      %s143 = sphi 0, %s127
    $region4: #{tpu_custom_call.1} parent=1 // loop_header_branch
      %15 = sbr.rel (%p13) target = $region8
    $region5: #{tpu_custom_call.1} parent=1 // loop_body
      %s17 = ssub.s32 %s12, 1
      %s18 = ssub.s32 %s12, 2
      %s28 = sadd.s32 1, %s21
      %p29 = scmp.ge.s32.totalorder %s28, 1
      %s30 = scalar_select %p29, 0, %s28
      %s31 = sadd.s32 1, %s20
      %s32 = scalar_select %p29, %s31, %s20
      %p33 = scmp.ge.s32.totalorder %s32, 1
      %s34 = scalar_select %p33, 0, %s32
      %s35 = sadd.s32 1, %s19
      %s36 = scalar_select %p33, %s35, %s19
      %p37 = scmp.ge.s32.totalorder %s36, 2
      %s38 = scalar_select %p37, 0, %s36
      %s39 = ssub.s32 %s19, %s38
      %p40 = scmp.eq.s32.totalorder %s39, 0
      %s42 = sadd.s32 %s41, 1
      %s43 = scalar_select %p40, %s41, %s42
      %p46 = pneg %p40
      %p47 = scmp.eq.s32.totalorder %s12, 1
      %p48 = por %p46, %p47
      %p49 = scmp.ne.s32.totalorder %s41, %s44
      %p50 = scmp.eq.s32.totalorder %s12, 0
      %p51 = por %p49, %p50
      %p52 = scmp.ne.s32.totalorder %s41, %s44
      %p53 = scmp.eq.s32.totalorder %s17, 1
      %p54 = por %p52, %p53
      %p55 = scmp.ne.s32.totalorder %s44, %s45
      %p56 = scmp.eq.s32.totalorder %s17, 0
      %p57 = por %p55, %p56
      %p58 = scmp.ne.s32.totalorder %s44, %s45
      %p59 = scmp.eq.s32.totalorder %s18, 1
      %p60 = por %p58, %p59
      %p62 = scmp.ne.s32.totalorder %s45, %s61
      %p63 = scmp.eq.s32.totalorder %s18, 0
      %p64 = por %p62, %p63
      %s65 = ssub.s32 %s20, %s34
      %p66 = scmp.eq.s32.totalorder %s65, 0
      %s68 = sadd.s32 %s67, 1
      %s69 = scalar_select %p66, %s67, %s68
      %p72 = pneg %p66
      %p73 = scmp.eq.s32.totalorder %s12, 1
      %p74 = por %p72, %p73
      %p75 = scmp.ne.s32.totalorder %s67, %s70
      %p76 = scmp.eq.s32.totalorder %s12, 0
      %p77 = por %p75, %p76
      %p78 = scmp.ne.s32.totalorder %s67, %s70
      %p79 = scmp.eq.s32.totalorder %s17, 1
      %p80 = por %p78, %p79
      %p81 = scmp.ne.s32.totalorder %s70, %s71
      %p82 = scmp.eq.s32.totalorder %s17, 0
      %p83 = por %p81, %p82
      %p84 = scmp.ne.s32.totalorder %s70, %s71
      %p85 = scmp.eq.s32.totalorder %s18, 1
      %p86 = por %p84, %p85
      %p88 = scmp.ne.s32.totalorder %s71, %s87
      %p89 = scmp.eq.s32.totalorder %s18, 0
      %p90 = por %p88, %p89
      %s91 = ssub.s32 %s20, %s34
      %p92 = scmp.eq.s32.totalorder %s91, 0
      %s94 = sadd.s32 %s93, 1
      %s95 = scalar_select %p92, %s93, %s94
      %p98 = pneg %p92
      %p99 = scmp.eq.s32.totalorder %s12, 1
      %p100 = por %p98, %p99
      %p101 = scmp.ne.s32.totalorder %s93, %s96
      %p102 = scmp.eq.s32.totalorder %s12, 0
      %p103 = por %p101, %p102
      %p104 = scmp.ne.s32.totalorder %s93, %s96
      %p105 = scmp.eq.s32.totalorder %s17, 1
      %p106 = por %p104, %p105
      %p107 = scmp.ne.s32.totalorder %s96, %s97
      %p108 = scmp.eq.s32.totalorder %s17, 0
      %p109 = por %p107, %p108
      %p110 = scmp.ne.s32.totalorder %s96, %s97
      %p111 = scmp.eq.s32.totalorder %s18, 1
      %p112 = por %p110, %p111
      %p114 = scmp.ne.s32.totalorder %s97, %s113
      %p115 = scmp.eq.s32.totalorder %s18, 0
      %p116 = por %p114, %p115
      %s117 = ssub.s32 %s19, %s38
      %s118 = ssub.s32 %s21, %s30
      %s119 = sor.u32 %s117, %s118
      %s120 = ssub.s32 %s20, %s34
      %s121 = sor.u32 %s119, %s120
      %p122 = scmp.eq.s32.totalorder %s121, 0
      %s124 = sadd.s32 %s123, 1
      %s125 = scalar_select %p122, %s123, %s124
      %p128 = pneg %p122
      %p129 = scmp.eq.s32.totalorder %s12, 1
      %p130 = por %p128, %p129
      %p131 = scmp.ne.s32.totalorder %s123, %s126
      %p132 = scmp.eq.s32.totalorder %s12, 0
      %p133 = por %p131, %p132
      %p134 = scmp.ne.s32.totalorder %s123, %s126
      %p135 = scmp.eq.s32.totalorder %s17, 1
      %p136 = por %p134, %p135
      %p137 = scmp.ne.s32.totalorder %s126, %s127
      %p138 = scmp.eq.s32.totalorder %s17, 0
      %p139 = por %p137, %p138
      %p140 = scmp.ne.s32.totalorder %s126, %s127
      %p141 = scmp.eq.s32.totalorder %s18, 1
      %p142 = por %p140, %p141
      %p144 = scmp.ne.s32.totalorder %s127, %s143
      %p145 = scmp.eq.s32.totalorder %s18, 0
      %p146 = por %p144, %p145
      %p147 = scmp.le.s32.totalorder 1, %s12
      %p148 = scmp.lt.s32.totalorder %s12, 3
      %p149 = pnand %p147, %p148
      %p150 = pneg %p149
      // Predicated region
      $region9: #{tpu_custom_call.1} parent=5 // pred_check
        _
      $region10: #{tpu_custom_call.1} parent=5 // pred_check_branch
        %152 = sbr.rel (%p149) target = $region12
      $region11: #{tpu_custom_call.1} parent=5 // pred_region
        %s153 = ssub.s32 %s12, 1
        // Predicated region
        $region13: #{tpu_custom_call.1} parent=11 // pred_check
          %p154 = pneg %p83
        $region14: #{tpu_custom_call.1} parent=11 // pred_check_branch
          %156 = sbr.rel (%p154) target = $region16
        $region15: #{tpu_custom_call.1} parent=11 // pred_region
          %p157 = scmp.lt.s32.totalorder %s23, 0
          %s158 = scalar_select %p157, %s23, 0
          %s159 = smul.addr %s158, 2
          %s160 = scalar_lea.vmem %s1, %s159
        $region16: #{tpu_custom_call.1} parent=11 // pred_fallthru
          _
        // Predicated region
        $region17: #{tpu_custom_call.1} parent=11 // pred_check
          %p161 = pneg %p109
        $region18: #{tpu_custom_call.1} parent=11 // pred_check_branch
          %163 = sbr.rel (%p161) target = $region20
        $region19: #{tpu_custom_call.1} parent=11 // pred_region
          %p164 = scmp.lt.s32.totalorder %s23, 0
          %s165 = scalar_select %p164, %s23, 0
          %s166 = scalar_lea.vmem %s2, %s165
        $region20: #{tpu_custom_call.1} parent=11 // pred_fallthru
          _
      $region12: #{tpu_custom_call.1} parent=5 // pred_fallthru
        _
      %p167 = scmp.lt.s32.totalorder %s12, 2
      // Predicated region
      $region21: #{tpu_custom_call.1} parent=5 // pred_check
        %p168 = pneg %p167
      $region22: #{tpu_custom_call.1} parent=5 // pred_check_branch
        %170 = sbr.rel (%p168) target = $region24
      $region23: #{tpu_custom_call.1} parent=5 // pred_region
        // Predicated region
        $region25: #{tpu_custom_call.1} parent=23 // pred_check
          %p171 = pneg %p51
        $region26: #{tpu_custom_call.1} parent=23 // pred_check_branch
          %173 = sbr.rel (%p171) target = $region28
        $region27: #{tpu_custom_call.1} parent=23 // pred_region
          %p174 = scmp.lt.s32.totalorder %s19, 1
          %s175 = scalar_select %p174, %s19, 1
          %s176 = smul.addr %s175, 32
          %s177 = smul.addr %s176, 4
          %s178 = scalar_lea.vmem %s0, %s177
        $region28: #{tpu_custom_call.1} parent=23 // pred_fallthru
          _
      $region24: #{tpu_custom_call.1} parent=5 // pred_fallthru
        _
      %p179 = scmp.le.s32.totalorder 1, %s12
      %p180 = scmp.lt.s32.totalorder %s12, 3
      %p181 = pnand %p179, %p180
      %p182 = pneg %p181
      // Predicated region
      $region29: #{tpu_custom_call.1} parent=5 // pred_check
        _
      $region30: #{tpu_custom_call.1} parent=5 // pred_check_branch
        %184 = sbr.rel (%p181) target = $region32
      $region31: #{tpu_custom_call.1} parent=5 // pred_region
        %s185 = ssub.s32 %s12, 1
        %p186 = scmp.lt.s32.totalorder %s22, 1
        %s187 = scalar_select %p186, %s22, 1
        %s188 = smul.addr %s187, 32
        %s189 = smul.addr %s188, 4
        %s190 = scalar_lea.vmem %s0, %s189
        %p191 = pneg %p57
        %p192 = pneg %p54
        %p193 = scmp.lt.s32.totalorder %s23, 0
        %s194 = scalar_select %p193, %s23, 0
        %s195 = smul.addr %s194, 2
        %s196 = scalar_lea.vmem %s1, %s195
        %p197 = pneg %p83
        %p198 = pneg %p80
        %p199 = scmp.lt.s32.totalorder %s23, 0
        %s200 = scalar_select %p199, %s23, 0
        %s201 = scalar_lea.vmem %s2, %s200
        %p202 = pneg %p109
        %p203 = pneg %p106
        %p204 = pneg %p139
        %p205 = pneg %p136
        %s206 = sand.u32 %s126, 1
        %s207 = scalar_lea.sflag [#allocation4], %s206
        %s208 = sand.u32 %s126, 1
        %s209 = smul.addr %s208, 128
        %s210 = scalar_lea.vmem [#allocation3], %s209
        %p211 = scmp.lt.s32.totalorder %s22, 1
        %s212 = scalar_select %p211, %s22, 1
        %s213 = smul.addr %s212, 32
        %s214 = smul.addr %s213, 4
        %s215 = scalar_lea.vmem %s0, %s214
        %p216 = scmp.lt.s32.totalorder %s23, 0
        %s217 = scalar_select %p216, %s23, 0
        %s218 = smul.addr %s217, 2
        %s219 = scalar_lea.vmem %s1, %s218
        %p220 = scmp.lt.s32.totalorder %s23, 0
        %s221 = scalar_select %p220, %s23, 0
        %s222 = scalar_lea.vmem %s2, %s221
        %s223 = smul.u32 16, %s24
        %s225 = smul.u32 %s24, 16
        %p226 = scmp.eq.s32.totalorder %s23, 0
        %p227 = scmp.eq.s32.totalorder %s24, 0
        %p228 = pnand %p226, %p227
        %p229 = pneg %p228
        // Predicated region
        $region33: #{tpu_custom_call.1} parent=31 // pred_check
          _
        $region34: #{tpu_custom_call.1} parent=31 // pred_check_branch
          %231 = sbr.rel (%p228) target = $region36
        $region35: #{tpu_custom_call.1} parent=31 // pred_region
          %vm232 = vcmask 19456
          %233 = vst.msk [vmem:[#allocation2] sm:$0xf] %vm232, 0
          %234 = vst.msk [vmem:[#allocation2 + $0x4] sm:$0xf] %vm232, 0
          %235 = vst.msk [vmem:[#allocation2 + $0x8] sm:$0xf] %vm232, 0
          %236 = vst.msk [vmem:[#allocation2 + $0xc] sm:$0xf] %vm232, 0
          %vm237 = vcmask 16384
          %vm238 = vsmask.f32 256
          %vm239 = vmand %vm237, %vm238
          %v240 = vld [vmem:[#allocation2 + $0x10] sm:$0x1]
          %v241 = vsel %vm239, 0, %v240
          %242 = vst [vmem:[#allocation2 + $0x10] sm:$0x1] %v241
          %243 = vst.msk [vmem:[#allocation2 + $0x14] sm:$0xf] %vm232, 0
          %244 = vst.msk [vmem:[#allocation2 + $0x18] sm:$0xf] %vm232, 0
          %245 = vst.msk [vmem:[#allocation2 + $0x1c] sm:$0xf] %vm232, 0
          %246 = vst.msk [vmem:[#allocation2 + $0x20] sm:$0xf] %vm232, 0
          %v247 = vld [vmem:[#allocation2 + $0x24] sm:$0x1]
          %v248 = vsel %vm239, 0, %v247
          %249 = vst [vmem:[#allocation2 + $0x24] sm:$0x1] %v248
          %250 = vst.msk [vmem:[#allocation2 + $0x28] sm:$0xf] %vm232, 0
          %251 = vst.msk [vmem:[#allocation2 + $0x2c] sm:$0xf] %vm232, 0
          %252 = vst.msk [vmem:[#allocation2 + $0x30] sm:$0xf] %vm232, 0
          %253 = vst.msk [vmem:[#allocation2 + $0x34] sm:$0xf] %vm232, 0
          %v254 = vld [vmem:[#allocation2 + $0x38] sm:$0x1]
          %v255 = vsel %vm239, 0, %v254
          %256 = vst [vmem:[#allocation2 + $0x38] sm:$0x1] %v255
          %257 = vst.msk [vmem:[#allocation2 + $0x3c] sm:$0xf] %vm232, 0
          %258 = vst.msk [vmem:[#allocation2 + $0x40] sm:$0xf] %vm232, 0
          %259 = vst.msk [vmem:[#allocation2 + $0x44] sm:$0xf] %vm232, 0
          %260 = vst.msk [vmem:[#allocation2 + $0x48] sm:$0xf] %vm232, 0
          %v261 = vld [vmem:[#allocation2 + $0x4c] sm:$0x1]
          %v262 = vsel %vm239, 0, %v261
          %263 = vst [vmem:[#allocation2 + $0x4c] sm:$0x1] %v262
          %264 = vst.msk [vmem:[#allocation2 + $0x50] sm:$0xf] %vm232, 0
          %265 = vst.msk [vmem:[#allocation2 + $0x54] sm:$0xf] %vm232, 0
          %266 = vst.msk [vmem:[#allocation2 + $0x58] sm:$0xf] %vm232, 0
          %267 = vst.msk [vmem:[#allocation2 + $0x5c] sm:$0xf] %vm232, 0
          %v268 = vld [vmem:[#allocation2 + $0x60] sm:$0x1]
          %v269 = vsel %vm239, 0, %v268
          %270 = vst [vmem:[#allocation2 + $0x60] sm:$0x1] %v269
          %271 = vst.msk [vmem:[#allocation2 + $0x64] sm:$0xf] %vm232, 0
          %272 = vst.msk [vmem:[#allocation2 + $0x68] sm:$0xf] %vm232, 0
          %273 = vst.msk [vmem:[#allocation2 + $0x6c] sm:$0xf] %vm232, 0
          %274 = vst.msk [vmem:[#allocation2 + $0x70] sm:$0xf] %vm232, 0
          %v275 = vld [vmem:[#allocation2 + $0x74] sm:$0x1]
          %v276 = vsel %vm239, 0, %v275
          %277 = vst [vmem:[#allocation2 + $0x74] sm:$0x1] %v276
          %278 = vst.msk [vmem:[#allocation2 + $0x78] sm:$0xf] %vm232, 0
          %279 = vst.msk [vmem:[#allocation2 + $0x7c] sm:$0xf] %vm232, 0
          %280 = vst.msk [vmem:[#allocation2 + $0x80] sm:$0xf] %vm232, 0
          %281 = vst.msk [vmem:[#allocation2 + $0x84] sm:$0xf] %vm232, 0
          %v282 = vld [vmem:[#allocation2 + $0x88] sm:$0x1]
          %v283 = vsel %vm239, 0, %v282
          %284 = vst [vmem:[#allocation2 + $0x88] sm:$0x1] %v283
          %285 = vst.msk [vmem:[#allocation2 + $0x8c] sm:$0xf] %vm232, 0
          %286 = vst.msk [vmem:[#allocation2 + $0x90] sm:$0xf] %vm232, 0
          %287 = vst.msk [vmem:[#allocation2 + $0x94] sm:$0xf] %vm232, 0
          %288 = vst.msk [vmem:[#allocation2 + $0x98] sm:$0xf] %vm232, 0
          %v289 = vld [vmem:[#allocation2 + $0x9c] sm:$0x1]
          %v290 = vsel %vm239, 0, %v289
          %291 = vst [vmem:[#allocation2 + $0x9c] sm:$0x1] %v290
          %292 = vst.msk [vmem:[#allocation2 + $0xa0] sm:$0xf] %vm232, 0
          %293 = vst.msk [vmem:[#allocation2 + $0xa4] sm:$0xf] %vm232, 0
          %294 = vst.msk [vmem:[#allocation2 + $0xa8] sm:$0xf] %vm232, 0
          %295 = vst.msk [vmem:[#allocation2 + $0xac] sm:$0xf] %vm232, 0
          %v296 = vld [vmem:[#allocation2 + $0xb0] sm:$0x1]
          %v297 = vsel %vm239, 0, %v296
          %298 = vst [vmem:[#allocation2 + $0xb0] sm:$0x1] %v297
          %299 = vst.msk [vmem:[#allocation2 + $0xb4] sm:$0xf] %vm232, 0
          %300 = vst.msk [vmem:[#allocation2 + $0xb8] sm:$0xf] %vm232, 0
          %301 = vst.msk [vmem:[#allocation2 + $0xbc] sm:$0xf] %vm232, 0
          %302 = vst.msk [vmem:[#allocation2 + $0xc0] sm:$0xf] %vm232, 0
          %v303 = vld [vmem:[#allocation2 + $0xc4] sm:$0x1]
          %v304 = vsel %vm239, 0, %v303
          %305 = vst [vmem:[#allocation2 + $0xc4] sm:$0x1] %v304
          %306 = vst.msk [vmem:[#allocation2 + $0xc8] sm:$0xf] %vm232, 0
          %307 = vst.msk [vmem:[#allocation2 + $0xcc] sm:$0xf] %vm232, 0
          %308 = vst.msk [vmem:[#allocation2 + $0xd0] sm:$0xf] %vm232, 0
          %309 = vst.msk [vmem:[#allocation2 + $0xd4] sm:$0xf] %vm232, 0
          %v310 = vld [vmem:[#allocation2 + $0xd8] sm:$0x1]
          %v311 = vsel %vm239, 0, %v310
          %312 = vst [vmem:[#allocation2 + $0xd8] sm:$0x1] %v311
          %313 = vst.msk [vmem:[#allocation2 + $0xdc] sm:$0xf] %vm232, 0
          %314 = vst.msk [vmem:[#allocation2 + $0xe0] sm:$0xf] %vm232, 0
          %315 = vst.msk [vmem:[#allocation2 + $0xe4] sm:$0xf] %vm232, 0
          %316 = vst.msk [vmem:[#allocation2 + $0xe8] sm:$0xf] %vm232, 0
          %v317 = vld [vmem:[#allocation2 + $0xec] sm:$0x1]
          %v318 = vsel %vm239, 0, %v317
          %319 = vst [vmem:[#allocation2 + $0xec] sm:$0x1] %v318
          %320 = vst.msk [vmem:[#allocation2 + $0xf0] sm:$0xf] %vm232, 0
          %321 = vst.msk [vmem:[#allocation2 + $0xf4] sm:$0xf] %vm232, 0
          %322 = vst.msk [vmem:[#allocation2 + $0xf8] sm:$0xf] %vm232, 0
          %323 = vst.msk [vmem:[#allocation2 + $0xfc] sm:$0xf] %vm232, 0
          %v324 = vld [vmem:[#allocation2 + $0x100] sm:$0x1]
          %v325 = vsel %vm239, 0, %v324
          %326 = vst [vmem:[#allocation2 + $0x100] sm:$0x1] %v325
          %327 = vst.msk [vmem:[#allocation2 + $0x104] sm:$0xf] %vm232, 0
          %328 = vst.msk [vmem:[#allocation2 + $0x108] sm:$0xf] %vm232, 0
          %329 = vst.msk [vmem:[#allocation2 + $0x10c] sm:$0xf] %vm232, 0
          %330 = vst.msk [vmem:[#allocation2 + $0x110] sm:$0xf] %vm232, 0
          %v331 = vld [vmem:[#allocation2 + $0x114] sm:$0x1]
          %v332 = vsel %vm239, 0, %v331
          %333 = vst [vmem:[#allocation2 + $0x114] sm:$0x1] %v332
          %334 = vst.msk [vmem:[#allocation2 + $0x118] sm:$0xf] %vm232, 0
          %335 = vst.msk [vmem:[#allocation2 + $0x11c] sm:$0xf] %vm232, 0
          %336 = vst.msk [vmem:[#allocation2 + $0x120] sm:$0xf] %vm232, 0
          %337 = vst.msk [vmem:[#allocation2 + $0x124] sm:$0xf] %vm232, 0
          %v338 = vld [vmem:[#allocation2 + $0x128] sm:$0x1]
          %v339 = vsel %vm239, 0, %v338
          %340 = vst [vmem:[#allocation2 + $0x128] sm:$0x1] %v339
          %341 = vst.msk [vmem:[#allocation2 + $0x12c] sm:$0xf] %vm232, 0
          %342 = vst.msk [vmem:[#allocation2 + $0x130] sm:$0xf] %vm232, 0
          %343 = vst.msk [vmem:[#allocation2 + $0x134] sm:$0xf] %vm232, 0
          %344 = vst.msk [vmem:[#allocation2 + $0x138] sm:$0xf] %vm232, 0
          %v345 = vld [vmem:[#allocation2 + $0x13c] sm:$0x1]
          %v346 = vsel %vm239, 0, %v345
          %347 = vst [vmem:[#allocation2 + $0x13c] sm:$0x1] %v346
          %348 = vst.msk [vmem:[#allocation2 + $0x140] sm:$0xf] %vm232, 0
          %349 = vst.msk [vmem:[#allocation2 + $0x144] sm:$0xf] %vm232, 0
          %350 = vst.msk [vmem:[#allocation2 + $0x148] sm:$0xf] %vm232, 0
          %351 = vst.msk [vmem:[#allocation2 + $0x14c] sm:$0xf] %vm232, 0
          %v352 = vld [vmem:[#allocation2 + $0x150] sm:$0x1]
          %v353 = vsel %vm239, 0, %v352
          %354 = vst [vmem:[#allocation2 + $0x150] sm:$0x1] %v353
          %355 = vst.msk [vmem:[#allocation2 + $0x154] sm:$0xf] %vm232, 0
          %356 = vst.msk [vmem:[#allocation2 + $0x158] sm:$0xf] %vm232, 0
          %357 = vst.msk [vmem:[#allocation2 + $0x15c] sm:$0xf] %vm232, 0
          %358 = vst.msk [vmem:[#allocation2 + $0x160] sm:$0xf] %vm232, 0
          %v359 = vld [vmem:[#allocation2 + $0x164] sm:$0x1]
          %v360 = vsel %vm239, 0, %v359
          %361 = vst [vmem:[#allocation2 + $0x164] sm:$0x1] %v360
          %v362 = vld [vmem:[%s215] sm:$0xf]
          %v363 = vld [vmem:[%s215 + $0x4] sm:$0xf]
          %v364 = vld [vmem:[%s215 + $0x8] sm:$0xf]
          %v365 = vld [vmem:[%s215 + $0xc] sm:$0xf]
          %v366 = vld [vmem:[%s215 + $0x10] sm:$0xf]
          %v367 = vld [vmem:[%s215 + $0x14] sm:$0xf]
          %v368 = vld [vmem:[%s215 + $0x18] sm:$0xf]
          %v369 = vld [vmem:[%s215 + $0x1c] sm:$0xf]
          %v370 = vld [vmem:[%s215 + $0x20] sm:$0xf]
          %v371 = vld [vmem:[%s215 + $0x24] sm:$0xf]
          %v372 = vld [vmem:[%s215 + $0x28] sm:$0xf]
          %v373 = vld [vmem:[%s215 + $0x2c] sm:$0xf]
          %v374 = vld [vmem:[%s215 + $0x30] sm:$0xf]
          %v375 = vld [vmem:[%s215 + $0x34] sm:$0xf]
          %v376 = vld [vmem:[%s215 + $0x38] sm:$0xf]
          %v377 = vld [vmem:[%s215 + $0x3c] sm:$0xf]
          %v378 = vld [vmem:[%s215 + $0x40] sm:$0xf]
          %v379 = vld [vmem:[%s215 + $0x44] sm:$0xf]
          %v380 = vld [vmem:[%s215 + $0x48] sm:$0xf]
          %v381 = vld [vmem:[%s215 + $0x4c] sm:$0xf]
          %v382 = vld [vmem:[%s215 + $0x50] sm:$0xf]
          %v383 = vld [vmem:[%s215 + $0x54] sm:$0xf]
          %v384 = vld [vmem:[%s215 + $0x58] sm:$0xf]
          %v385 = vld [vmem:[%s215 + $0x5c] sm:$0xf]
          %v386 = vld [vmem:[%s215 + $0x60] sm:$0xf]
          %v387 = vld [vmem:[%s215 + $0x64] sm:$0xf]
          %v388 = vld [vmem:[%s215 + $0x68] sm:$0xf]
          %v389 = vld [vmem:[%s215 + $0x6c] sm:$0xf]
          %v390 = vld [vmem:[%s215 + $0x70] sm:$0xf]
          %v391 = vld [vmem:[%s215 + $0x74] sm:$0xf]
          %v392 = vld [vmem:[%s215 + $0x78] sm:$0xf]
          %v393 = vld [vmem:[%s215 + $0x7c] sm:$0xf]
          %s394 = scalar_lea.vmem [#allocation2], 20
          %395 = vst.msk [vmem:[%s394 + $0x8] sm:$0xf] %vm232, %v362
          %396 = vst.msk [vmem:[%s394 + $0xc] sm:$0xf] %vm232, %v363
          %397 = vst.msk [vmem:[%s394 + $0x1c] sm:$0xf] %vm232, %v364
          %398 = vst.msk [vmem:[%s394 + $0x20] sm:$0xf] %vm232, %v365
          %399 = vst.msk [vmem:[%s394 + $0x30] sm:$0xf] %vm232, %v366
          %400 = vst.msk [vmem:[%s394 + $0x34] sm:$0xf] %vm232, %v367
          %401 = vst.msk [vmem:[%s394 + $0x44] sm:$0xf] %vm232, %v368
          %402 = vst.msk [vmem:[%s394 + $0x48] sm:$0xf] %vm232, %v369
          %403 = vst.msk [vmem:[%s394 + $0x58] sm:$0xf] %vm232, %v370
          %404 = vst.msk [vmem:[%s394 + $0x5c] sm:$0xf] %vm232, %v371
          %405 = vst.msk [vmem:[%s394 + $0x6c] sm:$0xf] %vm232, %v372
          %406 = vst.msk [vmem:[%s394 + $0x70] sm:$0xf] %vm232, %v373
          %407 = vst.msk [vmem:[%s394 + $0x80] sm:$0xf] %vm232, %v374
          %408 = vst.msk [vmem:[%s394 + $0x84] sm:$0xf] %vm232, %v375
          %409 = vst.msk [vmem:[%s394 + $0x94] sm:$0xf] %vm232, %v376
          %410 = vst.msk [vmem:[%s394 + $0x98] sm:$0xf] %vm232, %v377
          %411 = vst.msk [vmem:[%s394 + $0xa8] sm:$0xf] %vm232, %v378
          %412 = vst.msk [vmem:[%s394 + $0xac] sm:$0xf] %vm232, %v379
          %413 = vst.msk [vmem:[%s394 + $0xbc] sm:$0xf] %vm232, %v380
          %414 = vst.msk [vmem:[%s394 + $0xc0] sm:$0xf] %vm232, %v381
          %415 = vst.msk [vmem:[%s394 + $0xd0] sm:$0xf] %vm232, %v382
          %416 = vst.msk [vmem:[%s394 + $0xd4] sm:$0xf] %vm232, %v383
          %417 = vst.msk [vmem:[%s394 + $0xe4] sm:$0xf] %vm232, %v384
          %418 = vst.msk [vmem:[%s394 + $0xe8] sm:$0xf] %vm232, %v385
          %419 = vst.msk [vmem:[%s394 + $0xf8] sm:$0xf] %vm232, %v386
          %420 = vst.msk [vmem:[%s394 + $0xfc] sm:$0xf] %vm232, %v387
          %421 = vst.msk [vmem:[%s394 + $0x10c] sm:$0xf] %vm232, %v388
          %422 = vst.msk [vmem:[%s394 + $0x110] sm:$0xf] %vm232, %v389
          %423 = vst.msk [vmem:[%s394 + $0x120] sm:$0xf] %vm232, %v390
          %424 = vst.msk [vmem:[%s394 + $0x124] sm:$0xf] %vm232, %v391
          %425 = vst.msk [vmem:[%s394 + $0x134] sm:$0xf] %vm232, %v392
          %426 = vst.msk [vmem:[%s394 + $0x138] sm:$0xf] %vm232, %v393
        $region36: #{tpu_custom_call.1} parent=31 // pred_fallthru
          _
        %s427 = smul.u32 %s225, 5
        %s428 = smul.addr %s427, 4
        %s429 = scalar_lea.vmem [#allocation2], %s428
        %v430 = vld [vmem:[%s429 + $0x4] sm:$0x8]
        %v431 = vld [vmem:[%s429 + $0x8] sm:$0xf]
        %v432 = vld [vmem:[%s429 + $0xc] sm:$0xf]
        %v433 = vld [vmem:[%s429 + $0x18] sm:$0x8]
        %v434 = vld [vmem:[%s429 + $0x1c] sm:$0xf]
        %v435 = vld [vmem:[%s429 + $0x20] sm:$0xf]
        %v436 = vld [vmem:[%s429 + $0x2c] sm:$0x8]
        %v437 = vld [vmem:[%s429 + $0x30] sm:$0xf]
        %v438 = vld [vmem:[%s429 + $0x34] sm:$0xf]
        %v439 = vld [vmem:[%s429 + $0x40] sm:$0x8]
        %v440 = vld [vmem:[%s429 + $0x44] sm:$0xf]
        %v441 = vld [vmem:[%s429 + $0x48] sm:$0xf]
        %v442 = vld [vmem:[%s429 + $0x54] sm:$0x8]
        %v443 = vld [vmem:[%s429 + $0x58] sm:$0xf]
        %v444 = vld [vmem:[%s429 + $0x5c] sm:$0xf]
        %v445 = vld [vmem:[%s429 + $0x68] sm:$0x8]
        %v446 = vld [vmem:[%s429 + $0x6c] sm:$0xf]
        %v447 = vld [vmem:[%s429 + $0x70] sm:$0xf]
        %v448 = vld [vmem:[%s429 + $0x7c] sm:$0x8]
        %v449 = vld [vmem:[%s429 + $0x80] sm:$0xf]
        %v450 = vld [vmem:[%s429 + $0x84] sm:$0xf]
        %v451 = vld [vmem:[%s429 + $0x90] sm:$0x8]
        %v452 = vld [vmem:[%s429 + $0x94] sm:$0xf]
        %v453 = vld [vmem:[%s429 + $0x98] sm:$0xf]
        %v454 = vld [vmem:[%s429 + $0xa4] sm:$0x8]
        %v455 = vld [vmem:[%s429 + $0xa8] sm:$0xf]
        %v456 = vld [vmem:[%s429 + $0xac] sm:$0xf]
        %v457 = vld [vmem:[%s429 + $0xb8] sm:$0x8]
        %v458 = vld [vmem:[%s429 + $0xbc] sm:$0xf]
        %v459 = vld [vmem:[%s429 + $0xc0] sm:$0xf]
        %v460 = vld [vmem:[%s429 + $0xcc] sm:$0x8]
        %v461 = vld [vmem:[%s429 + $0xd0] sm:$0xf]
        %v462 = vld [vmem:[%s429 + $0xd4] sm:$0xf]
        %v463 = vld [vmem:[%s429 + $0xe0] sm:$0x8]
        %v464 = vld [vmem:[%s429 + $0xe4] sm:$0xf]
        %v465 = vld [vmem:[%s429 + $0xe8] sm:$0xf]
        %v466 = vld [vmem:[%s429 + $0xf4] sm:$0x8]
        %v467 = vld [vmem:[%s429 + $0xf8] sm:$0xf]
        %v468 = vld [vmem:[%s429 + $0xfc] sm:$0xf]
        %v469 = vld [vmem:[%s429 + $0x108] sm:$0x8]
        %v470 = vld [vmem:[%s429 + $0x10c] sm:$0xf]
        %v471 = vld [vmem:[%s429 + $0x110] sm:$0xf]
        %v472 = vld [vmem:[%s429 + $0x11c] sm:$0x8]
        %v473 = vld [vmem:[%s429 + $0x120] sm:$0xf]
        %v474 = vld [vmem:[%s429 + $0x124] sm:$0xf]
        %v475 = vld [vmem:[%s429 + $0x130] sm:$0x8]
        %v476 = vld [vmem:[%s429 + $0x134] sm:$0xf]
        %v477 = vld [vmem:[%s429 + $0x138] sm:$0xf]
        %vm478 = vsmask.f32 256
        %vm479 = vsmask.f32 4368
        %vm480 = vmor %vm478, %vm479
        %v482 = vshrl.u32 %v430, 16
        %v484 = vrot.slane %v482, 7
        %v485 = vrot.slane %v484, 4
        %v487 = vshrl.u32 %v431, 16
        %v489 = vrot.slane %v487, 7
        %v490 = vshll.u32 %v431, 16
        %v492 = vor.u32 %v489, %v490
        %v493 = vsel %vm480, %v485, %v492
        %v494 = vrot.slane %v489, 4
        %v496 = vshrl.u32 %v432, 16
        %v498 = vrot.slane %v496, 7
        %v499 = vshll.u32 %v432, 16
        %v501 = vor.u32 %v498, %v499
        %v502 = vsel %vm480, %v494, %v501
        %v504 = vshrl.u32 %v433, 16
        %v506 = vrot.slane %v504, 7
        %v507 = vrot.slane %v506, 4
        %v509 = vshrl.u32 %v434, 16
        %v511 = vrot.slane %v509, 7
        %v512 = vshll.u32 %v434, 16
        %v514 = vor.u32 %v511, %v512
        %v515 = vsel %vm480, %v507, %v514
        %v516 = vrot.slane %v511, 4
        %v518 = vshrl.u32 %v435, 16
        %v520 = vrot.slane %v518, 7
        %v521 = vshll.u32 %v435, 16
        %v523 = vor.u32 %v520, %v521
        %v524 = vsel %vm480, %v516, %v523
        %v526 = vshrl.u32 %v436, 16
        %v528 = vrot.slane %v526, 7
        %v529 = vrot.slane %v528, 4
        %v531 = vshrl.u32 %v437, 16
        %v533 = vrot.slane %v531, 7
        %v534 = vshll.u32 %v437, 16
        %v536 = vor.u32 %v533, %v534
        %v537 = vsel %vm480, %v529, %v536
        %v538 = vrot.slane %v533, 4
        %v540 = vshrl.u32 %v438, 16
        %v542 = vrot.slane %v540, 7
        %v543 = vshll.u32 %v438, 16
        %v545 = vor.u32 %v542, %v543
        %v546 = vsel %vm480, %v538, %v545
        %v548 = vshrl.u32 %v439, 16
        %v550 = vrot.slane %v548, 7
        %v551 = vrot.slane %v550, 4
        %v553 = vshrl.u32 %v440, 16
        %v555 = vrot.slane %v553, 7
        %v556 = vshll.u32 %v440, 16
        %v558 = vor.u32 %v555, %v556
        %v559 = vsel %vm480, %v551, %v558
        %v560 = vrot.slane %v555, 4
        %v562 = vshrl.u32 %v441, 16
        %v564 = vrot.slane %v562, 7
        %v565 = vshll.u32 %v441, 16
        %v567 = vor.u32 %v564, %v565
        %v568 = vsel %vm480, %v560, %v567
        %v570 = vshrl.u32 %v442, 16
        %v572 = vrot.slane %v570, 7
        %v573 = vrot.slane %v572, 4
        %v575 = vshrl.u32 %v443, 16
        %v577 = vrot.slane %v575, 7
        %v578 = vshll.u32 %v443, 16
        %v580 = vor.u32 %v577, %v578
        %v581 = vsel %vm480, %v573, %v580
        %v582 = vrot.slane %v577, 4
        %v584 = vshrl.u32 %v444, 16
        %v586 = vrot.slane %v584, 7
        %v587 = vshll.u32 %v444, 16
        %v589 = vor.u32 %v586, %v587
        %v590 = vsel %vm480, %v582, %v589
        %v592 = vshrl.u32 %v445, 16
        %v594 = vrot.slane %v592, 7
        %v595 = vrot.slane %v594, 4
        %v597 = vshrl.u32 %v446, 16
        %v599 = vrot.slane %v597, 7
        %v600 = vshll.u32 %v446, 16
        %v602 = vor.u32 %v599, %v600
        %v603 = vsel %vm480, %v595, %v602
        %v604 = vrot.slane %v599, 4
        %v606 = vshrl.u32 %v447, 16
        %v608 = vrot.slane %v606, 7
        %v609 = vshll.u32 %v447, 16
        %v611 = vor.u32 %v608, %v609
        %v612 = vsel %vm480, %v604, %v611
        %v614 = vshrl.u32 %v448, 16
        %v616 = vrot.slane %v614, 7
        %v617 = vrot.slane %v616, 4
        %v619 = vshrl.u32 %v449, 16
        %v621 = vrot.slane %v619, 7
        %v622 = vshll.u32 %v449, 16
        %v624 = vor.u32 %v621, %v622
        %v625 = vsel %vm480, %v617, %v624
        %v626 = vrot.slane %v621, 4
        %v628 = vshrl.u32 %v450, 16
        %v630 = vrot.slane %v628, 7
        %v631 = vshll.u32 %v450, 16
        %v633 = vor.u32 %v630, %v631
        %v634 = vsel %vm480, %v626, %v633
        %v636 = vshrl.u32 %v451, 16
        %v638 = vrot.slane %v636, 7
        %v639 = vrot.slane %v638, 4
        %v641 = vshrl.u32 %v452, 16
        %v643 = vrot.slane %v641, 7
        %v644 = vshll.u32 %v452, 16
        %v646 = vor.u32 %v643, %v644
        %v647 = vsel %vm480, %v639, %v646
        %v648 = vrot.slane %v643, 4
        %v650 = vshrl.u32 %v453, 16
        %v652 = vrot.slane %v650, 7
        %v653 = vshll.u32 %v453, 16
        %v655 = vor.u32 %v652, %v653
        %v656 = vsel %vm480, %v648, %v655
        %v658 = vshrl.u32 %v454, 16
        %v660 = vrot.slane %v658, 7
        %v661 = vrot.slane %v660, 4
        %v663 = vshrl.u32 %v455, 16
        %v665 = vrot.slane %v663, 7
        %v666 = vshll.u32 %v455, 16
        %v668 = vor.u32 %v665, %v666
        %v669 = vsel %vm480, %v661, %v668
        %v670 = vrot.slane %v665, 4
        %v672 = vshrl.u32 %v456, 16
        %v674 = vrot.slane %v672, 7
        %v675 = vshll.u32 %v456, 16
        %v677 = vor.u32 %v674, %v675
        %v678 = vsel %vm480, %v670, %v677
        %v680 = vshrl.u32 %v457, 16
        %v682 = vrot.slane %v680, 7
        %v683 = vrot.slane %v682, 4
        %v685 = vshrl.u32 %v458, 16
        %v687 = vrot.slane %v685, 7
        %v688 = vshll.u32 %v458, 16
        %v690 = vor.u32 %v687, %v688
        %v691 = vsel %vm480, %v683, %v690
        %v692 = vrot.slane %v687, 4
        %v694 = vshrl.u32 %v459, 16
        %v696 = vrot.slane %v694, 7
        %v697 = vshll.u32 %v459, 16
        %v699 = vor.u32 %v696, %v697
        %v700 = vsel %vm480, %v692, %v699
        %v702 = vshrl.u32 %v460, 16
        %v704 = vrot.slane %v702, 7
        %v705 = vrot.slane %v704, 4
        %v707 = vshrl.u32 %v461, 16
        %v709 = vrot.slane %v707, 7
        %v710 = vshll.u32 %v461, 16
        %v712 = vor.u32 %v709, %v710
        %v713 = vsel %vm480, %v705, %v712
        %v714 = vrot.slane %v709, 4
        %v716 = vshrl.u32 %v462, 16
        %v718 = vrot.slane %v716, 7
        %v719 = vshll.u32 %v462, 16
        %v721 = vor.u32 %v718, %v719
        %v722 = vsel %vm480, %v714, %v721
        %v724 = vshrl.u32 %v463, 16
        %v726 = vrot.slane %v724, 7
        %v727 = vrot.slane %v726, 4
        %v729 = vshrl.u32 %v464, 16
        %v731 = vrot.slane %v729, 7
        %v732 = vshll.u32 %v464, 16
        %v734 = vor.u32 %v731, %v732
        %v735 = vsel %vm480, %v727, %v734
        %v736 = vrot.slane %v731, 4
        %v738 = vshrl.u32 %v465, 16
        %v740 = vrot.slane %v738, 7
        %v741 = vshll.u32 %v465, 16
        %v743 = vor.u32 %v740, %v741
        %v744 = vsel %vm480, %v736, %v743
        %v746 = vshrl.u32 %v466, 16
        %v748 = vrot.slane %v746, 7
        %v749 = vrot.slane %v748, 4
        %v751 = vshrl.u32 %v467, 16
        %v753 = vrot.slane %v751, 7
        %v754 = vshll.u32 %v467, 16
        %v756 = vor.u32 %v753, %v754
        %v757 = vsel %vm480, %v749, %v756
        %v758 = vrot.slane %v753, 4
        %v760 = vshrl.u32 %v468, 16
        %v762 = vrot.slane %v760, 7
        %v763 = vshll.u32 %v468, 16
        %v765 = vor.u32 %v762, %v763
        %v766 = vsel %vm480, %v758, %v765
        %v768 = vshrl.u32 %v469, 16
        %v770 = vrot.slane %v768, 7
        %v771 = vrot.slane %v770, 4
        %v773 = vshrl.u32 %v470, 16
        %v775 = vrot.slane %v773, 7
        %v776 = vshll.u32 %v470, 16
        %v778 = vor.u32 %v775, %v776
        %v779 = vsel %vm480, %v771, %v778
        %v780 = vrot.slane %v775, 4
        %v782 = vshrl.u32 %v471, 16
        %v784 = vrot.slane %v782, 7
        %v785 = vshll.u32 %v471, 16
        %v787 = vor.u32 %v784, %v785
        %v788 = vsel %vm480, %v780, %v787
        %v790 = vshrl.u32 %v472, 16
        %v792 = vrot.slane %v790, 7
        %v793 = vrot.slane %v792, 4
        %v795 = vshrl.u32 %v473, 16
        %v797 = vrot.slane %v795, 7
        %v798 = vshll.u32 %v473, 16
        %v800 = vor.u32 %v797, %v798
        %v801 = vsel %vm480, %v793, %v800
        %v802 = vrot.slane %v797, 4
        %v804 = vshrl.u32 %v474, 16
        %v806 = vrot.slane %v804, 7
        %v807 = vshll.u32 %v474, 16
        %v809 = vor.u32 %v806, %v807
        %v810 = vsel %vm480, %v802, %v809
        %v812 = vshrl.u32 %v475, 16
        %v814 = vrot.slane %v812, 7
        %v815 = vrot.slane %v814, 4
        %v817 = vshrl.u32 %v476, 16
        %v819 = vrot.slane %v817, 7
        %v820 = vshll.u32 %v476, 16
        %v822 = vor.u32 %v819, %v820
        %v823 = vsel %vm480, %v815, %v822
        %v824 = vrot.slane %v819, 4
        %v826 = vshrl.u32 %v477, 16
        %v828 = vrot.slane %v826, 7
        %v829 = vshll.u32 %v477, 16
        %v831 = vor.u32 %v828, %v829
        %v832 = vsel %vm480, %v824, %v831
        %v833 = vld [vmem:[%s219] sm:$0x3]
        %s834 = scalar_lea.vmem %s219, 2
        %v835 = vld [vmem:[%s834] sm:$0x3]
        %v868 = vunpack.c.l.b16 %v431
        %v869 = vunpack.c.l.b16 %v432
        %v870 = vunpack.c.l.b16 %v434
        %v871 = vunpack.c.l.b16 %v435
        %v872 = vunpack.c.l.b16 %v437
        %v873 = vunpack.c.l.b16 %v438
        %v874 = vunpack.c.l.b16 %v440
        %v875 = vunpack.c.l.b16 %v441
        %v876 = vunpack.c.l.b16 %v443
        %v877 = vunpack.c.l.b16 %v444
        %v878 = vunpack.c.l.b16 %v446
        %v879 = vunpack.c.l.b16 %v447
        %v880 = vunpack.c.l.b16 %v449
        %v881 = vunpack.c.l.b16 %v450
        %v882 = vunpack.c.l.b16 %v452
        %v883 = vunpack.c.l.b16 %v453
        %v884 = vunpack.c.l.b16 %v455
        %v885 = vunpack.c.l.b16 %v456
        %v886 = vunpack.c.l.b16 %v458
        %v887 = vunpack.c.l.b16 %v459
        %v888 = vunpack.c.l.b16 %v461
        %v889 = vunpack.c.l.b16 %v462
        %v890 = vunpack.c.l.b16 %v464
        %v891 = vunpack.c.l.b16 %v465
        %v892 = vunpack.c.l.b16 %v467
        %v893 = vunpack.c.l.b16 %v468
        %v894 = vunpack.c.l.b16 %v470
        %v895 = vunpack.c.l.b16 %v471
        %v896 = vunpack.c.l.b16 %v473
        %v897 = vunpack.c.l.b16 %v474
        %v898 = vunpack.c.l.b16 %v476
        %v899 = vunpack.c.l.b16 %v477
        %v900 = vpack.c.b16 %v869, %v868
        %v901 = vpack.c.b16 %v871, %v870
        %v902 = vpack.c.b16 %v873, %v872
        %v903 = vpack.c.b16 %v875, %v874
        %v904 = vpack.c.b16 %v877, %v876
        %v905 = vpack.c.b16 %v879, %v878
        %v906 = vpack.c.b16 %v881, %v880
        %v907 = vpack.c.b16 %v883, %v882
        %v908 = vpack.c.b16 %v885, %v884
        %v909 = vpack.c.b16 %v887, %v886
        %v910 = vpack.c.b16 %v889, %v888
        %v911 = vpack.c.b16 %v891, %v890
        %v912 = vpack.c.b16 %v893, %v892
        %v913 = vpack.c.b16 %v895, %v894
        %v914 = vpack.c.b16 %v897, %v896
        %v915 = vpack.c.b16 %v899, %v898
        %vm916 = vcmask 23552
        %v918 = vsel %vm916, %v900, 0
        %v921 = vsel %vm916, %v901, 0
        %v924 = vsel %vm916, %v902, 0
        %v927 = vsel %vm916, %v903, 0
        %v930 = vsel %vm916, %v904, 0
        %v933 = vsel %vm916, %v905, 0
        %v936 = vsel %vm916, %v906, 0
        %v939 = vsel %vm916, %v907, 0
        %v942 = vsel %vm916, %v908, 0
        %v945 = vsel %vm916, %v909, 0
        %v948 = vsel %vm916, %v910, 0
        %v951 = vsel %vm916, %v911, 0
        %v954 = vsel %vm916, %v912, 0
        %v957 = vsel %vm916, %v913, 0
        %v960 = vsel %vm916, %v914, 0
        %v963 = vsel %vm916, %v915, 0
        %vm965 = vcmask 1040384
        %vm966 = vcmask 1041408
        %v967 = vsel %vm965, 4294967295, 65535
        %v968 = vsel %vm966, %v967, 0
        %v970 = vand.u32 %v835, %v968
        %972 = vmatprep.subr.bf16.mxu0 0
        %973 = vmatpush1.bf16.msra.mxu0 %v970
        %974 = vmatprep.subr.bf16.mxu0 0
        %975 = vmatpush1.bf16.msra.mxu0 0
        %976 = vmatprep.subr.bf16.mxu0 0
        %977 = vmatpush1.bf16.msra.mxu0 0
        %978 = vmatprep.subr.bf16.mxu0 0
        %979 = vmatpush1.bf16.msra.mxu0 0
        %980 = vmatprep.subr.bf16.mxu0 0
        %981 = vmatpush1.bf16.msra.mxu0 0
        %982 = vmatprep.subr.bf16.mxu0 0
        %983 = vmatpush1.bf16.msra.mxu0 0
        %984 = vmatprep.subr.bf16.mxu0 0
        %985 = vmatpush1.bf16.msra.mxu0 0
        %986 = vmatprep.subr.bf16.mxu0 0
        %987 = vmatpush1.bf16.msra.mxu0 0
        %988 = vmatprep.subr.bf16.mxu0 0
        %989 = vmatpush1.bf16.msra.mxu0 0
        %990 = vmatprep.subr.bf16.mxu0 0
        %991 = vmatpush1.bf16.msra.mxu0 0
        %992 = vmatprep.subr.bf16.mxu0 0
        %993 = vmatpush1.bf16.msra.mxu0 0
        %994 = vmatprep.subr.bf16.mxu0 0
        %995 = vmatpush1.bf16.msra.mxu0 0
        %996 = vmatprep.subr.bf16.mxu0 0
        %997 = vmatpush1.bf16.msra.mxu0 0
        %998 = vmatprep.subr.bf16.mxu0 0
        %999 = vmatpush1.bf16.msra.mxu0 0
        %1000 = vmatprep.subr.bf16.mxu0 0
        %1001 = vmatpush1.bf16.msra.mxu0 0
        %1002 = vmatprep.subr.bf16.mxu0 0
        %1003 = vmatpush1.bf16.msra.mxu0 0
        %1004 = vmatprep.mubr.bf16.mxu0 0
        %1005 = vmatmul.mubr.bf16.gmra.mrb[0].mxu0 %v918
        %v1006 = vpop.f32.mrb[0].mxu0
        %v1007 = vadd.f32 0.0, %v1006
        %v1008 = vpop.f32.mrb[0].mxu0
        %v1009 = vpop.f32.mrb[0].mxu0
        %v1010 = vadd.f32 0.0, %v1009
        %v1011 = vpop.f32.mrb[0].mxu0
        %1012 = vmatprep.mubr.bf16.mxu0 0
        %1013 = vmatmul.mubr.bf16.gmra.mrb[0].mxu0 %v921
        %v1014 = vpop.f32.mrb[0].mxu0
        %v1015 = vadd.f32 0.0, %v1014
        %v1016 = vpop.f32.mrb[0].mxu0
        %v1017 = vpop.f32.mrb[0].mxu0
        %v1018 = vadd.f32 0.0, %v1017
        %v1019 = vpop.f32.mrb[0].mxu0
        %1020 = vmatprep.mubr.bf16.mxu0 0
        %1021 = vmatmul.mubr.bf16.gmra.mrb[0].mxu0 %v924
        %v1022 = vpop.f32.mrb[0].mxu0
        %v1023 = vadd.f32 0.0, %v1022
        %v1024 = vpop.f32.mrb[0].mxu0
        %v1025 = vpop.f32.mrb[0].mxu0
        %v1026 = vadd.f32 0.0, %v1025
        %v1027 = vpop.f32.mrb[0].mxu0
        %1028 = vmatprep.mubr.bf16.mxu0 0
        %1029 = vmatmul.mubr.bf16.gmra.mrb[0].mxu0 %v927
        %v1030 = vpop.f32.mrb[0].mxu0
        %v1031 = vadd.f32 0.0, %v1030
        %v1032 = vpop.f32.mrb[0].mxu0
        %v1033 = vpop.f32.mrb[0].mxu0
        %v1034 = vadd.f32 0.0, %v1033
        %v1035 = vpop.f32.mrb[0].mxu0
        %1036 = vmatprep.mubr.bf16.mxu0 0
        %1037 = vmatmul.mubr.bf16.gmra.mrb[0].mxu0 %v930
        %v1038 = vpop.f32.mrb[0].mxu0
        %v1039 = vadd.f32 0.0, %v1038
        %v1040 = vpop.f32.mrb[0].mxu0
        %v1041 = vpop.f32.mrb[0].mxu0
        %v1042 = vadd.f32 0.0, %v1041
        %v1043 = vpop.f32.mrb[0].mxu0
        %1044 = vmatprep.mubr.bf16.mxu0 0
        %1045 = vmatmul.mubr.bf16.gmra.mrb[0].mxu0 %v933
        %v1046 = vpop.f32.mrb[0].mxu0
        %v1047 = vadd.f32 0.0, %v1046
        %v1048 = vpop.f32.mrb[0].mxu0
        %v1049 = vpop.f32.mrb[0].mxu0
        %v1050 = vadd.f32 0.0, %v1049
        %v1051 = vpop.f32.mrb[0].mxu0
        %1052 = vmatprep.mubr.bf16.mxu0 0
        %1053 = vmatmul.mubr.bf16.gmra.mrb[0].mxu0 %v936
        %v1054 = vpop.f32.mrb[0].mxu0
        %v1055 = vadd.f32 0.0, %v1054
        %v1056 = vpop.f32.mrb[0].mxu0
        %v1057 = vpop.f32.mrb[0].mxu0
        %v1058 = vadd.f32 0.0, %v1057
        %v1059 = vpop.f32.mrb[0].mxu0
        %1060 = vmatprep.mubr.bf16.mxu0 0
        %1061 = vmatmul.mubr.bf16.gmra.mrb[0].mxu0 %v939
        %v1062 = vpop.f32.mrb[0].mxu0
        %v1063 = vadd.f32 0.0, %v1062
        %v1064 = vpop.f32.mrb[0].mxu0
        %v1065 = vpop.f32.mrb[0].mxu0
        %v1066 = vadd.f32 0.0, %v1065
        %v1067 = vpop.f32.mrb[0].mxu0
        %1068 = vmatprep.mubr.bf16.mxu0 0
        %1069 = vmatmul.mubr.bf16.gmra.mrb[0].mxu0 %v942
        %v1070 = vpop.f32.mrb[0].mxu0
        %v1071 = vadd.f32 0.0, %v1070
        %v1072 = vpop.f32.mrb[0].mxu0
        %v1073 = vpop.f32.mrb[0].mxu0
        %v1074 = vadd.f32 0.0, %v1073
        %v1075 = vpop.f32.mrb[0].mxu0
        %1076 = vmatprep.mubr.bf16.mxu0 0
        %1077 = vmatmul.mubr.bf16.gmra.mrb[0].mxu0 %v945
        %v1078 = vpop.f32.mrb[0].mxu0
        %v1079 = vadd.f32 0.0, %v1078
        %v1080 = vpop.f32.mrb[0].mxu0
        %v1081 = vpop.f32.mrb[0].mxu0
        %v1082 = vadd.f32 0.0, %v1081
        %v1083 = vpop.f32.mrb[0].mxu0
        %1084 = vmatprep.mubr.bf16.mxu0 0
        %1085 = vmatmul.mubr.bf16.gmra.mrb[0].mxu0 %v948
        %v1086 = vpop.f32.mrb[0].mxu0
        %v1087 = vadd.f32 0.0, %v1086
        %v1088 = vpop.f32.mrb[0].mxu0
        %v1089 = vpop.f32.mrb[0].mxu0
        %v1090 = vadd.f32 0.0, %v1089
        %v1091 = vpop.f32.mrb[0].mxu0
        %1092 = vmatprep.mubr.bf16.mxu0 0
        %1093 = vmatmul.mubr.bf16.gmra.mrb[0].mxu0 %v951
        %v1094 = vpop.f32.mrb[0].mxu0
        %v1095 = vadd.f32 0.0, %v1094
        %v1096 = vpop.f32.mrb[0].mxu0
        %v1097 = vpop.f32.mrb[0].mxu0
        %v1098 = vadd.f32 0.0, %v1097
        %v1099 = vpop.f32.mrb[0].mxu0
        %1100 = vmatprep.mubr.bf16.mxu0 0
        %1101 = vmatmul.mubr.bf16.gmra.mrb[0].mxu0 %v954
        %v1102 = vpop.f32.mrb[0].mxu0
        %v1103 = vadd.f32 0.0, %v1102
        %v1104 = vpop.f32.mrb[0].mxu0
        %v1105 = vpop.f32.mrb[0].mxu0
        %v1106 = vadd.f32 0.0, %v1105
        %v1107 = vpop.f32.mrb[0].mxu0
        %1108 = vmatprep.mubr.bf16.mxu0 0
        %1109 = vmatmul.mubr.bf16.gmra.mrb[0].mxu0 %v957
        %v1110 = vpop.f32.mrb[0].mxu0
        %v1111 = vadd.f32 0.0, %v1110
        %v1112 = vpop.f32.mrb[0].mxu0
        %v1113 = vpop.f32.mrb[0].mxu0
        %v1114 = vadd.f32 0.0, %v1113
        %v1115 = vpop.f32.mrb[0].mxu0
        %1116 = vmatprep.mubr.bf16.mxu0 0
        %1117 = vmatmul.mubr.bf16.gmra.mrb[0].mxu0 %v960
        %v1118 = vpop.f32.mrb[0].mxu0
        %v1119 = vadd.f32 0.0, %v1118
        %v1120 = vpop.f32.mrb[0].mxu0
        %v1121 = vpop.f32.mrb[0].mxu0
        %v1122 = vadd.f32 0.0, %v1121
        %v1123 = vpop.f32.mrb[0].mxu0
        %1124 = vmatprep.mubr.bf16.mxu0 0
        %1125 = vmatmul.mubr.bf16.gmra.mrb[0].mxu0 %v963
        %v1126 = vpop.f32.mrb[0].mxu0
        %v1127 = vadd.f32 0.0, %v1126
        %v1128 = vpop.f32.mrb[0].mxu0
        %v1129 = vpop.f32.mrb[0].mxu0
        %v1130 = vadd.f32 0.0, %v1129
        %v1131 = vpop.f32.mrb[0].mxu0
        %1132 = vdwg.mxu0
        %v1133 = vunpack.c.l.b16 %v493
        %v1134 = vunpack.c.l.b16 %v502
        %v1135 = vunpack.c.l.b16 %v515
        %v1136 = vunpack.c.l.b16 %v524
        %v1137 = vunpack.c.l.b16 %v537
        %v1138 = vunpack.c.l.b16 %v546
        %v1139 = vunpack.c.l.b16 %v559
        %v1140 = vunpack.c.l.b16 %v568
        %v1141 = vunpack.c.l.b16 %v581
        %v1142 = vunpack.c.l.b16 %v590
        %v1143 = vunpack.c.l.b16 %v603
        %v1144 = vunpack.c.l.b16 %v612
        %v1145 = vunpack.c.l.b16 %v625
        %v1146 = vunpack.c.l.b16 %v634
        %v1147 = vunpack.c.l.b16 %v647
        %v1148 = vunpack.c.l.b16 %v656
        %v1149 = vunpack.c.l.b16 %v669
        %v1150 = vunpack.c.l.b16 %v678
        %v1151 = vunpack.c.l.b16 %v691
        %v1152 = vunpack.c.l.b16 %v700
        %v1153 = vunpack.c.l.b16 %v713
        %v1154 = vunpack.c.l.b16 %v722
        %v1155 = vunpack.c.l.b16 %v735
        %v1156 = vunpack.c.l.b16 %v744
        %v1157 = vunpack.c.l.b16 %v757
        %v1158 = vunpack.c.l.b16 %v766
        %v1159 = vunpack.c.l.b16 %v779
        %v1160 = vunpack.c.l.b16 %v788
        %v1161 = vunpack.c.l.b16 %v801
        %v1162 = vunpack.c.l.b16 %v810
        %v1163 = vunpack.c.l.b16 %v823
        %v1164 = vunpack.c.l.b16 %v832
        %v1165 = vpack.c.b16 %v1134, %v1133
        %v1166 = vpack.c.b16 %v1136, %v1135
        %v1167 = vpack.c.b16 %v1138, %v1137
        %v1168 = vpack.c.b16 %v1140, %v1139
        %v1169 = vpack.c.b16 %v1142, %v1141
        %v1170 = vpack.c.b16 %v1144, %v1143
        %v1171 = vpack.c.b16 %v1146, %v1145
        %v1172 = vpack.c.b16 %v1148, %v1147
        %v1173 = vpack.c.b16 %v1150, %v1149
        %v1174 = vpack.c.b16 %v1152, %v1151
        %v1175 = vpack.c.b16 %v1154, %v1153
        %v1176 = vpack.c.b16 %v1156, %v1155
        %v1177 = vpack.c.b16 %v1158, %v1157
        %v1178 = vpack.c.b16 %v1160, %v1159
        %v1179 = vpack.c.b16 %v1162, %v1161
        %v1180 = vpack.c.b16 %v1164, %v1163
        %v1182 = vsel %vm916, %v1165, 0
        %v1185 = vsel %vm916, %v1166, 0
        %v1188 = vsel %vm916, %v1167, 0
        %v1191 = vsel %vm916, %v1168, 0
        %v1194 = vsel %vm916, %v1169, 0
        %v1197 = vsel %vm916, %v1170, 0
        %v1200 = vsel %vm916, %v1171, 0
        %v1203 = vsel %vm916, %v1172, 0
        %v1206 = vsel %vm916, %v1173, 0
        %v1209 = vsel %vm916, %v1174, 0
        %v1212 = vsel %vm916, %v1175, 0
        %v1215 = vsel %vm916, %v1176, 0
        %v1218 = vsel %vm916, %v1177, 0
        %v1221 = vsel %vm916, %v1178, 0
        %v1224 = vsel %vm916, %v1179, 0
        %v1227 = vsel %vm916, %v1180, 0
        %v1230 = vand.u32 %v833, %v968
        %1232 = vmatprep.subr.bf16.mxu0 0
        %1233 = vmatpush1.bf16.msra.mxu0 %v1230
        %1234 = vmatprep.subr.bf16.mxu0 0
        %1235 = vmatpush1.bf16.msra.mxu0 0
        %1236 = vmatprep.subr.bf16.mxu0 0
        %1237 = vmatpush1.bf16.msra.mxu0 0
        %1238 = vmatprep.subr.bf16.mxu0 0
        %1239 = vmatpush1.bf16.msra.mxu0 0
        %1240 = vmatprep.subr.bf16.mxu0 0
        %1241 = vmatpush1.bf16.msra.mxu0 0
        %1242 = vmatprep.subr.bf16.mxu0 0
        %1243 = vmatpush1.bf16.msra.mxu0 0
        %1244 = vmatprep.subr.bf16.mxu0 0
        %1245 = vmatpush1.bf16.msra.mxu0 0
        %1246 = vmatprep.subr.bf16.mxu0 0
        %1247 = vmatpush1.bf16.msra.mxu0 0
        %1248 = vmatprep.subr.bf16.mxu0 0
        %1249 = vmatpush1.bf16.msra.mxu0 0
        %1250 = vmatprep.subr.bf16.mxu0 0
        %1251 = vmatpush1.bf16.msra.mxu0 0
        %1252 = vmatprep.subr.bf16.mxu0 0
        %1253 = vmatpush1.bf16.msra.mxu0 0
        %1254 = vmatprep.subr.bf16.mxu0 0
        %1255 = vmatpush1.bf16.msra.mxu0 0
        %1256 = vmatprep.subr.bf16.mxu0 0
        %1257 = vmatpush1.bf16.msra.mxu0 0
        %1258 = vmatprep.subr.bf16.mxu0 0
        %1259 = vmatpush1.bf16.msra.mxu0 0
        %1260 = vmatprep.subr.bf16.mxu0 0
        %1261 = vmatpush1.bf16.msra.mxu0 0
        %1262 = vmatprep.subr.bf16.mxu0 0
        %1263 = vmatpush1.bf16.msra.mxu0 0
        %1264 = vmatprep.mubr.bf16.mxu0 0
        %1265 = vmatmul.mubr.bf16.gmra.mrb[0].mxu0 %v1182
        %v1266 = vpop.f32.mrb[0].mxu0
        %v1267 = vadd.f32 %v1007, %v1266
        %v1268 = vpop.f32.mrb[0].mxu0
        %v1269 = vpop.f32.mrb[0].mxu0
        %v1270 = vadd.f32 %v1010, %v1269
        %v1271 = vpop.f32.mrb[0].mxu0
        %1272 = vmatprep.mubr.bf16.mxu0 0
        %1273 = vmatmul.mubr.bf16.gmra.mrb[0].mxu0 %v1185
        %v1274 = vpop.f32.mrb[0].mxu0
        %v1275 = vadd.f32 %v1015, %v1274
        %v1276 = vpop.f32.mrb[0].mxu0
        %v1277 = vpop.f32.mrb[0].mxu0
        %v1278 = vadd.f32 %v1018, %v1277
        %v1279 = vpop.f32.mrb[0].mxu0
        %1280 = vmatprep.mubr.bf16.mxu0 0
        %1281 = vmatmul.mubr.bf16.gmra.mrb[0].mxu0 %v1188
        %v1282 = vpop.f32.mrb[0].mxu0
        %v1283 = vadd.f32 %v1023, %v1282
        %v1284 = vpop.f32.mrb[0].mxu0
        %v1285 = vpop.f32.mrb[0].mxu0
        %v1286 = vadd.f32 %v1026, %v1285
        %v1287 = vpop.f32.mrb[0].mxu0
        %1288 = vmatprep.mubr.bf16.mxu0 0
        %1289 = vmatmul.mubr.bf16.gmra.mrb[0].mxu0 %v1191
        %v1290 = vpop.f32.mrb[0].mxu0
        %v1291 = vadd.f32 %v1031, %v1290
        %v1292 = vpop.f32.mrb[0].mxu0
        %v1293 = vpop.f32.mrb[0].mxu0
        %v1294 = vadd.f32 %v1034, %v1293
        %v1295 = vpop.f32.mrb[0].mxu0
        %1296 = vmatprep.mubr.bf16.mxu0 0
        %1297 = vmatmul.mubr.bf16.gmra.mrb[0].mxu0 %v1194
        %v1298 = vpop.f32.mrb[0].mxu0
        %v1299 = vadd.f32 %v1039, %v1298
        %v1300 = vpop.f32.mrb[0].mxu0
        %v1301 = vpop.f32.mrb[0].mxu0
        %v1302 = vadd.f32 %v1042, %v1301
        %v1303 = vpop.f32.mrb[0].mxu0
        %1304 = vmatprep.mubr.bf16.mxu0 0
        %1305 = vmatmul.mubr.bf16.gmra.mrb[0].mxu0 %v1197
        %v1306 = vpop.f32.mrb[0].mxu0
        %v1307 = vadd.f32 %v1047, %v1306
        %v1308 = vpop.f32.mrb[0].mxu0
        %v1309 = vpop.f32.mrb[0].mxu0
        %v1310 = vadd.f32 %v1050, %v1309
        %v1311 = vpop.f32.mrb[0].mxu0
        %1312 = vmatprep.mubr.bf16.mxu0 0
        %1313 = vmatmul.mubr.bf16.gmra.mrb[0].mxu0 %v1200
        %v1314 = vpop.f32.mrb[0].mxu0
        %v1315 = vadd.f32 %v1055, %v1314
        %v1316 = vpop.f32.mrb[0].mxu0
        %v1317 = vpop.f32.mrb[0].mxu0
        %v1318 = vadd.f32 %v1058, %v1317
        %v1319 = vpop.f32.mrb[0].mxu0
        %1320 = vmatprep.mubr.bf16.mxu0 0
        %1321 = vmatmul.mubr.bf16.gmra.mrb[0].mxu0 %v1203
        %v1322 = vpop.f32.mrb[0].mxu0
        %v1323 = vadd.f32 %v1063, %v1322
        %v1324 = vpop.f32.mrb[0].mxu0
        %v1325 = vpop.f32.mrb[0].mxu0
        %v1326 = vadd.f32 %v1066, %v1325
        %v1327 = vpop.f32.mrb[0].mxu0
        %1328 = vmatprep.mubr.bf16.mxu0 0
        %1329 = vmatmul.mubr.bf16.gmra.mrb[0].mxu0 %v1206
        %v1330 = vpop.f32.mrb[0].mxu0
        %v1331 = vadd.f32 %v1071, %v1330
        %v1332 = vpop.f32.mrb[0].mxu0
        %v1333 = vpop.f32.mrb[0].mxu0
        %v1334 = vadd.f32 %v1074, %v1333
        %v1335 = vpop.f32.mrb[0].mxu0
        %1336 = vmatprep.mubr.bf16.mxu0 0
        %1337 = vmatmul.mubr.bf16.gmra.mrb[0].mxu0 %v1209
        %v1338 = vpop.f32.mrb[0].mxu0
        %v1339 = vadd.f32 %v1079, %v1338
        %v1340 = vpop.f32.mrb[0].mxu0
        %v1341 = vpop.f32.mrb[0].mxu0
        %v1342 = vadd.f32 %v1082, %v1341
        %v1343 = vpop.f32.mrb[0].mxu0
        %1344 = vmatprep.mubr.bf16.mxu0 0
        %1345 = vmatmul.mubr.bf16.gmra.mrb[0].mxu0 %v1212
        %v1346 = vpop.f32.mrb[0].mxu0
        %v1347 = vadd.f32 %v1087, %v1346
        %v1348 = vpop.f32.mrb[0].mxu0
        %v1349 = vpop.f32.mrb[0].mxu0
        %v1350 = vadd.f32 %v1090, %v1349
        %v1351 = vpop.f32.mrb[0].mxu0
        %1352 = vmatprep.mubr.bf16.mxu0 0
        %1353 = vmatmul.mubr.bf16.gmra.mrb[0].mxu0 %v1215
        %v1354 = vpop.f32.mrb[0].mxu0
        %v1355 = vadd.f32 %v1095, %v1354
        %v1356 = vpop.f32.mrb[0].mxu0
        %v1357 = vpop.f32.mrb[0].mxu0
        %v1358 = vadd.f32 %v1098, %v1357
        %v1359 = vpop.f32.mrb[0].mxu0
        %1360 = vmatprep.mubr.bf16.mxu0 0
        %1361 = vmatmul.mubr.bf16.gmra.mrb[0].mxu0 %v1218
        %v1362 = vpop.f32.mrb[0].mxu0
        %v1363 = vadd.f32 %v1103, %v1362
        %v1364 = vpop.f32.mrb[0].mxu0
        %v1365 = vpop.f32.mrb[0].mxu0
        %v1366 = vadd.f32 %v1106, %v1365
        %v1367 = vpop.f32.mrb[0].mxu0
        %1368 = vmatprep.mubr.bf16.mxu0 0
        %1369 = vmatmul.mubr.bf16.gmra.mrb[0].mxu0 %v1221
        %v1370 = vpop.f32.mrb[0].mxu0
        %v1371 = vadd.f32 %v1111, %v1370
        %v1372 = vpop.f32.mrb[0].mxu0
        %v1373 = vpop.f32.mrb[0].mxu0
        %v1374 = vadd.f32 %v1114, %v1373
        %v1375 = vpop.f32.mrb[0].mxu0
        %1376 = vmatprep.mubr.bf16.mxu0 0
        %1377 = vmatmul.mubr.bf16.gmra.mrb[0].mxu0 %v1224
        %v1378 = vpop.f32.mrb[0].mxu0
        %v1379 = vadd.f32 %v1119, %v1378
        %v1380 = vpop.f32.mrb[0].mxu0
        %v1381 = vpop.f32.mrb[0].mxu0
        %v1382 = vadd.f32 %v1122, %v1381
        %v1383 = vpop.f32.mrb[0].mxu0
        %1384 = vmatprep.mubr.bf16.mxu0 0
        %1385 = vmatmul.mubr.bf16.gmra.mrb[0].mxu0 %v1227
        %v1386 = vpop.f32.mrb[0].mxu0
        %v1387 = vadd.f32 %v1127, %v1386
        %v1388 = vpop.f32.mrb[0].mxu0
        %v1389 = vpop.f32.mrb[0].mxu0
        %v1390 = vadd.f32 %v1130, %v1389
        %v1391 = vpop.f32.mrb[0].mxu0
        %1392 = vdwg.mxu0
        %v1393 = vld [vmem:[%s429 + $0x8] sm:$0xf]
        %v1394 = vld [vmem:[%s429 + $0xc] sm:$0xf]
        %v1395 = vld [vmem:[%s429 + $0x10] sm:$0x1]
        %v1396 = vld [vmem:[%s429 + $0x1c] sm:$0xf]
        %v1397 = vld [vmem:[%s429 + $0x20] sm:$0xf]
        %v1398 = vld [vmem:[%s429 + $0x24] sm:$0x1]
        %v1399 = vld [vmem:[%s429 + $0x30] sm:$0xf]
        %v1400 = vld [vmem:[%s429 + $0x34] sm:$0xf]
        %v1401 = vld [vmem:[%s429 + $0x38] sm:$0x1]
        %v1402 = vld [vmem:[%s429 + $0x44] sm:$0xf]
        %v1403 = vld [vmem:[%s429 + $0x48] sm:$0xf]
        %v1404 = vld [vmem:[%s429 + $0x4c] sm:$0x1]
        %v1405 = vld [vmem:[%s429 + $0x58] sm:$0xf]
        %v1406 = vld [vmem:[%s429 + $0x5c] sm:$0xf]
        %v1407 = vld [vmem:[%s429 + $0x60] sm:$0x1]
        %v1408 = vld [vmem:[%s429 + $0x6c] sm:$0xf]
        %v1409 = vld [vmem:[%s429 + $0x70] sm:$0xf]
        %v1410 = vld [vmem:[%s429 + $0x74] sm:$0x1]
        %v1411 = vld [vmem:[%s429 + $0x80] sm:$0xf]
        %v1412 = vld [vmem:[%s429 + $0x84] sm:$0xf]
        %v1413 = vld [vmem:[%s429 + $0x88] sm:$0x1]
        %v1414 = vld [vmem:[%s429 + $0x94] sm:$0xf]
        %v1415 = vld [vmem:[%s429 + $0x98] sm:$0xf]
        %v1416 = vld [vmem:[%s429 + $0x9c] sm:$0x1]
        %v1417 = vld [vmem:[%s429 + $0xa8] sm:$0xf]
        %v1418 = vld [vmem:[%s429 + $0xac] sm:$0xf]
        %v1419 = vld [vmem:[%s429 + $0xb0] sm:$0x1]
        %v1420 = vld [vmem:[%s429 + $0xbc] sm:$0xf]
        %v1421 = vld [vmem:[%s429 + $0xc0] sm:$0xf]
        %v1422 = vld [vmem:[%s429 + $0xc4] sm:$0x1]
        %v1423 = vld [vmem:[%s429 + $0xd0] sm:$0xf]
        %v1424 = vld [vmem:[%s429 + $0xd4] sm:$0xf]
        %v1425 = vld [vmem:[%s429 + $0xd8] sm:$0x1]
        %v1426 = vld [vmem:[%s429 + $0xe4] sm:$0xf]
        %v1427 = vld [vmem:[%s429 + $0xe8] sm:$0xf]
        %v1428 = vld [vmem:[%s429 + $0xec] sm:$0x1]
        %v1429 = vld [vmem:[%s429 + $0xf8] sm:$0xf]
        %v1430 = vld [vmem:[%s429 + $0xfc] sm:$0xf]
        %v1431 = vld [vmem:[%s429 + $0x100] sm:$0x1]
        %v1432 = vld [vmem:[%s429 + $0x10c] sm:$0xf]
        %v1433 = vld [vmem:[%s429 + $0x110] sm:$0xf]
        %v1434 = vld [vmem:[%s429 + $0x114] sm:$0x1]
        %v1435 = vld [vmem:[%s429 + $0x120] sm:$0xf]
        %v1436 = vld [vmem:[%s429 + $0x124] sm:$0xf]
        %v1437 = vld [vmem:[%s429 + $0x128] sm:$0x1]
        %v1438 = vld [vmem:[%s429 + $0x134] sm:$0xf]
        %v1439 = vld [vmem:[%s429 + $0x138] sm:$0xf]
        %v1440 = vld [vmem:[%s429 + $0x13c] sm:$0x1]
        %vm1441 = vsmask.f32 3328
        %vm1442 = vsmask.f32 7440
        %vm1443 = vmor %vm1441, %vm1442
        %v1445 = vshrl.u32 %v1393, 16
        %v1447 = vrot.slane %v1445, 4
        %v1448 = vshll.u32 %v1393, 16
        %v1450 = vrot.slane %v1448, 5
        %v1451 = vor.u32 %v1447, %v1450
        %v1452 = vrot.slane %v1451, 4
        %v1454 = vshll.u32 %v1394, 16
        %v1456 = vrot.slane %v1454, 5
        %v1457 = vsel %vm1443, %v1452, %v1456
        %v1458 = vshrl.u32 %v1394, 16
        %v1460 = vrot.slane %v1458, 4
        %v1461 = vor.u32 %v1460, %v1456
        %v1462 = vrot.slane %v1461, 4
        %v1464 = vshll.u32 %v1395, 16
        %v1466 = vrot.slane %v1464, 5
        %v1467 = vsel %vm1443, %v1462, %v1466
        %v1469 = vshrl.u32 %v1396, 16
        %v1471 = vrot.slane %v1469, 4
        %v1472 = vshll.u32 %v1396, 16
        %v1474 = vrot.slane %v1472, 5
        %v1475 = vor.u32 %v1471, %v1474
        %v1476 = vrot.slane %v1475, 4
        %v1478 = vshll.u32 %v1397, 16
        %v1480 = vrot.slane %v1478, 5
        %v1481 = vsel %vm1443, %v1476, %v1480
        %v1482 = vshrl.u32 %v1397, 16
        %v1484 = vrot.slane %v1482, 4
        %v1485 = vor.u32 %v1484, %v1480
        %v1486 = vrot.slane %v1485, 4
        %v1488 = vshll.u32 %v1398, 16
        %v1490 = vrot.slane %v1488, 5
        %v1491 = vsel %vm1443, %v1486, %v1490
        %v1493 = vshrl.u32 %v1399, 16
        %v1495 = vrot.slane %v1493, 4
        %v1496 = vshll.u32 %v1399, 16
        %v1498 = vrot.slane %v1496, 5
        %v1499 = vor.u32 %v1495, %v1498
        %v1500 = vrot.slane %v1499, 4
        %v1502 = vshll.u32 %v1400, 16
        %v1504 = vrot.slane %v1502, 5
        %v1505 = vsel %vm1443, %v1500, %v1504
        %v1506 = vshrl.u32 %v1400, 16
        %v1508 = vrot.slane %v1506, 4
        %v1509 = vor.u32 %v1508, %v1504
        %v1510 = vrot.slane %v1509, 4
        %v1512 = vshll.u32 %v1401, 16
        %v1514 = vrot.slane %v1512, 5
        %v1515 = vsel %vm1443, %v1510, %v1514
        %v1517 = vshrl.u32 %v1402, 16
        %v1519 = vrot.slane %v1517, 4
        %v1520 = vshll.u32 %v1402, 16
        %v1522 = vrot.slane %v1520, 5
        %v1523 = vor.u32 %v1519, %v1522
        %v1524 = vrot.slane %v1523, 4
        %v1526 = vshll.u32 %v1403, 16
        %v1528 = vrot.slane %v1526, 5
        %v1529 = vsel %vm1443, %v1524, %v1528
        %v1530 = vshrl.u32 %v1403, 16
        %v1532 = vrot.slane %v1530, 4
        %v1533 = vor.u32 %v1532, %v1528
        %v1534 = vrot.slane %v1533, 4
        %v1536 = vshll.u32 %v1404, 16
        %v1538 = vrot.slane %v1536, 5
        %v1539 = vsel %vm1443, %v1534, %v1538
        %v1541 = vshrl.u32 %v1405, 16
        %v1543 = vrot.slane %v1541, 4
        %v1544 = vshll.u32 %v1405, 16
        %v1546 = vrot.slane %v1544, 5
        %v1547 = vor.u32 %v1543, %v1546
        %v1548 = vrot.slane %v1547, 4
        %v1550 = vshll.u32 %v1406, 16
        %v1552 = vrot.slane %v1550, 5
        %v1553 = vsel %vm1443, %v1548, %v1552
        %v1554 = vshrl.u32 %v1406, 16
        %v1556 = vrot.slane %v1554, 4
        %v1557 = vor.u32 %v1556, %v1552
        %v1558 = vrot.slane %v1557, 4
        %v1560 = vshll.u32 %v1407, 16
        %v1562 = vrot.slane %v1560, 5
        %v1563 = vsel %vm1443, %v1558, %v1562
        %v1565 = vshrl.u32 %v1408, 16
        %v1567 = vrot.slane %v1565, 4
        %v1568 = vshll.u32 %v1408, 16
        %v1570 = vrot.slane %v1568, 5
        %v1571 = vor.u32 %v1567, %v1570
        %v1572 = vrot.slane %v1571, 4
        %v1574 = vshll.u32 %v1409, 16
        %v1576 = vrot.slane %v1574, 5
        %v1577 = vsel %vm1443, %v1572, %v1576
        %v1578 = vshrl.u32 %v1409, 16
        %v1580 = vrot.slane %v1578, 4
        %v1581 = vor.u32 %v1580, %v1576
        %v1582 = vrot.slane %v1581, 4
        %v1584 = vshll.u32 %v1410, 16
        %v1586 = vrot.slane %v1584, 5
        %v1587 = vsel %vm1443, %v1582, %v1586
        %v1589 = vshrl.u32 %v1411, 16
        %v1591 = vrot.slane %v1589, 4
        %v1592 = vshll.u32 %v1411, 16
        %v1594 = vrot.slane %v1592, 5
        %v1595 = vor.u32 %v1591, %v1594
        %v1596 = vrot.slane %v1595, 4
        %v1598 = vshll.u32 %v1412, 16
        %v1600 = vrot.slane %v1598, 5
        %v1601 = vsel %vm1443, %v1596, %v1600
        %v1602 = vshrl.u32 %v1412, 16
        %v1604 = vrot.slane %v1602, 4
        %v1605 = vor.u32 %v1604, %v1600
        %v1606 = vrot.slane %v1605, 4
        %v1608 = vshll.u32 %v1413, 16
        %v1610 = vrot.slane %v1608, 5
        %v1611 = vsel %vm1443, %v1606, %v1610
        %v1613 = vshrl.u32 %v1414, 16
        %v1615 = vrot.slane %v1613, 4
        %v1616 = vshll.u32 %v1414, 16
        %v1618 = vrot.slane %v1616, 5
        %v1619 = vor.u32 %v1615, %v1618
        %v1620 = vrot.slane %v1619, 4
        %v1622 = vshll.u32 %v1415, 16
        %v1624 = vrot.slane %v1622, 5
        %v1625 = vsel %vm1443, %v1620, %v1624
        %v1626 = vshrl.u32 %v1415, 16
        %v1628 = vrot.slane %v1626, 4
        %v1629 = vor.u32 %v1628, %v1624
        %v1630 = vrot.slane %v1629, 4
        %v1632 = vshll.u32 %v1416, 16
        %v1634 = vrot.slane %v1632, 5
        %v1635 = vsel %vm1443, %v1630, %v1634
        %v1637 = vshrl.u32 %v1417, 16
        %v1639 = vrot.slane %v1637, 4
        %v1640 = vshll.u32 %v1417, 16
        %v1642 = vrot.slane %v1640, 5
        %v1643 = vor.u32 %v1639, %v1642
        %v1644 = vrot.slane %v1643, 4
        %v1646 = vshll.u32 %v1418, 16
        %v1648 = vrot.slane %v1646, 5
        %v1649 = vsel %vm1443, %v1644, %v1648
        %v1650 = vshrl.u32 %v1418, 16
        %v1652 = vrot.slane %v1650, 4
        %v1653 = vor.u32 %v1652, %v1648
        %v1654 = vrot.slane %v1653, 4
        %v1656 = vshll.u32 %v1419, 16
        %v1658 = vrot.slane %v1656, 5
        %v1659 = vsel %vm1443, %v1654, %v1658
        %v1661 = vshrl.u32 %v1420, 16
        %v1663 = vrot.slane %v1661, 4
        %v1664 = vshll.u32 %v1420, 16
        %v1666 = vrot.slane %v1664, 5
        %v1667 = vor.u32 %v1663, %v1666
        %v1668 = vrot.slane %v1667, 4
        %v1670 = vshll.u32 %v1421, 16
        %v1672 = vrot.slane %v1670, 5
        %v1673 = vsel %vm1443, %v1668, %v1672
        %v1674 = vshrl.u32 %v1421, 16
        %v1676 = vrot.slane %v1674, 4
        %v1677 = vor.u32 %v1676, %v1672
        %v1678 = vrot.slane %v1677, 4
        %v1680 = vshll.u32 %v1422, 16
        %v1682 = vrot.slane %v1680, 5
        %v1683 = vsel %vm1443, %v1678, %v1682
        %v1685 = vshrl.u32 %v1423, 16
        %v1687 = vrot.slane %v1685, 4
        %v1688 = vshll.u32 %v1423, 16
        %v1690 = vrot.slane %v1688, 5
        %v1691 = vor.u32 %v1687, %v1690
        %v1692 = vrot.slane %v1691, 4
        %v1694 = vshll.u32 %v1424, 16
        %v1696 = vrot.slane %v1694, 5
        %v1697 = vsel %vm1443, %v1692, %v1696
        %v1698 = vshrl.u32 %v1424, 16
        %v1700 = vrot.slane %v1698, 4
        %v1701 = vor.u32 %v1700, %v1696
        %v1702 = vrot.slane %v1701, 4
        %v1704 = vshll.u32 %v1425, 16
        %v1706 = vrot.slane %v1704, 5
        %v1707 = vsel %vm1443, %v1702, %v1706
        %v1709 = vshrl.u32 %v1426, 16
        %v1711 = vrot.slane %v1709, 4
        %v1712 = vshll.u32 %v1426, 16
        %v1714 = vrot.slane %v1712, 5
        %v1715 = vor.u32 %v1711, %v1714
        %v1716 = vrot.slane %v1715, 4
        %v1718 = vshll.u32 %v1427, 16
        %v1720 = vrot.slane %v1718, 5
        %v1721 = vsel %vm1443, %v1716, %v1720
        %v1722 = vshrl.u32 %v1427, 16
        %v1724 = vrot.slane %v1722, 4
        %v1725 = vor.u32 %v1724, %v1720
        %v1726 = vrot.slane %v1725, 4
        %v1728 = vshll.u32 %v1428, 16
        %v1730 = vrot.slane %v1728, 5
        %v1731 = vsel %vm1443, %v1726, %v1730
        %v1733 = vshrl.u32 %v1429, 16
        %v1735 = vrot.slane %v1733, 4
        %v1736 = vshll.u32 %v1429, 16
        %v1738 = vrot.slane %v1736, 5
        %v1739 = vor.u32 %v1735, %v1738
        %v1740 = vrot.slane %v1739, 4
        %v1742 = vshll.u32 %v1430, 16
        %v1744 = vrot.slane %v1742, 5
        %v1745 = vsel %vm1443, %v1740, %v1744
        %v1746 = vshrl.u32 %v1430, 16
        %v1748 = vrot.slane %v1746, 4
        %v1749 = vor.u32 %v1748, %v1744
        %v1750 = vrot.slane %v1749, 4
        %v1752 = vshll.u32 %v1431, 16
        %v1754 = vrot.slane %v1752, 5
        %v1755 = vsel %vm1443, %v1750, %v1754
        %v1757 = vshrl.u32 %v1432, 16
        %v1759 = vrot.slane %v1757, 4
        %v1760 = vshll.u32 %v1432, 16
        %v1762 = vrot.slane %v1760, 5
        %v1763 = vor.u32 %v1759, %v1762
        %v1764 = vrot.slane %v1763, 4
        %v1766 = vshll.u32 %v1433, 16
        %v1768 = vrot.slane %v1766, 5
        %v1769 = vsel %vm1443, %v1764, %v1768
        %v1770 = vshrl.u32 %v1433, 16
        %v1772 = vrot.slane %v1770, 4
        %v1773 = vor.u32 %v1772, %v1768
        %v1774 = vrot.slane %v1773, 4
        %v1776 = vshll.u32 %v1434, 16
        %v1778 = vrot.slane %v1776, 5
        %v1779 = vsel %vm1443, %v1774, %v1778
        %v1781 = vshrl.u32 %v1435, 16
        %v1783 = vrot.slane %v1781, 4
        %v1784 = vshll.u32 %v1435, 16
        %v1786 = vrot.slane %v1784, 5
        %v1787 = vor.u32 %v1783, %v1786
        %v1788 = vrot.slane %v1787, 4
        %v1790 = vshll.u32 %v1436, 16
        %v1792 = vrot.slane %v1790, 5
        %v1793 = vsel %vm1443, %v1788, %v1792
        %v1794 = vshrl.u32 %v1436, 16
        %v1796 = vrot.slane %v1794, 4
        %v1797 = vor.u32 %v1796, %v1792
        %v1798 = vrot.slane %v1797, 4
        %v1800 = vshll.u32 %v1437, 16
        %v1802 = vrot.slane %v1800, 5
        %v1803 = vsel %vm1443, %v1798, %v1802
        %v1805 = vshrl.u32 %v1438, 16
        %v1807 = vrot.slane %v1805, 4
        %v1808 = vshll.u32 %v1438, 16
        %v1810 = vrot.slane %v1808, 5
        %v1811 = vor.u32 %v1807, %v1810
        %v1812 = vrot.slane %v1811, 4
        %v1814 = vshll.u32 %v1439, 16
        %v1816 = vrot.slane %v1814, 5
        %v1817 = vsel %vm1443, %v1812, %v1816
        %v1818 = vshrl.u32 %v1439, 16
        %v1820 = vrot.slane %v1818, 4
        %v1821 = vor.u32 %v1820, %v1816
        %v1822 = vrot.slane %v1821, 4
        %v1824 = vshll.u32 %v1440, 16
        %v1826 = vrot.slane %v1824, 5
        %v1827 = vsel %vm1443, %v1822, %v1826
        %s1828 = scalar_lea.vmem %s219, 4
        %v1829 = vld [vmem:[%s1828] sm:$0x3]
        %v1830 = vunpack.c.l.b16 %v1457
        %v1831 = vunpack.c.l.b16 %v1467
        %v1832 = vunpack.c.l.b16 %v1481
        %v1833 = vunpack.c.l.b16 %v1491
        %v1834 = vunpack.c.l.b16 %v1505
        %v1835 = vunpack.c.l.b16 %v1515
        %v1836 = vunpack.c.l.b16 %v1529
        %v1837 = vunpack.c.l.b16 %v1539
        %v1838 = vunpack.c.l.b16 %v1553
        %v1839 = vunpack.c.l.b16 %v1563
        %v1840 = vunpack.c.l.b16 %v1577
        %v1841 = vunpack.c.l.b16 %v1587
        %v1842 = vunpack.c.l.b16 %v1601
        %v1843 = vunpack.c.l.b16 %v1611
        %v1844 = vunpack.c.l.b16 %v1625
        %v1845 = vunpack.c.l.b16 %v1635
        %v1846 = vunpack.c.l.b16 %v1649
        %v1847 = vunpack.c.l.b16 %v1659
        %v1848 = vunpack.c.l.b16 %v1673
        %v1849 = vunpack.c.l.b16 %v1683
        %v1850 = vunpack.c.l.b16 %v1697
        %v1851 = vunpack.c.l.b16 %v1707
        %v1852 = vunpack.c.l.b16 %v1721
        %v1853 = vunpack.c.l.b16 %v1731
        %v1854 = vunpack.c.l.b16 %v1745
        %v1855 = vunpack.c.l.b16 %v1755
        %v1856 = vunpack.c.l.b16 %v1769
        %v1857 = vunpack.c.l.b16 %v1779
        %v1858 = vunpack.c.l.b16 %v1793
        %v1859 = vunpack.c.l.b16 %v1803
        %v1860 = vunpack.c.l.b16 %v1817
        %v1861 = vunpack.c.l.b16 %v1827
        %v1862 = vpack.c.b16 %v1831, %v1830
        %v1863 = vpack.c.b16 %v1833, %v1832
        %v1864 = vpack.c.b16 %v1835, %v1834
        %v1865 = vpack.c.b16 %v1837, %v1836
        %v1866 = vpack.c.b16 %v1839, %v1838
        %v1867 = vpack.c.b16 %v1841, %v1840
        %v1868 = vpack.c.b16 %v1843, %v1842
        %v1869 = vpack.c.b16 %v1845, %v1844
        %v1870 = vpack.c.b16 %v1847, %v1846
        %v1871 = vpack.c.b16 %v1849, %v1848
        %v1872 = vpack.c.b16 %v1851, %v1850
        %v1873 = vpack.c.b16 %v1853, %v1852
        %v1874 = vpack.c.b16 %v1855, %v1854
        %v1875 = vpack.c.b16 %v1857, %v1856
        %v1876 = vpack.c.b16 %v1859, %v1858
        %v1877 = vpack.c.b16 %v1861, %v1860
        %v1879 = vsel %vm916, %v1862, 0
        %v1882 = vsel %vm916, %v1863, 0
        %v1885 = vsel %vm916, %v1864, 0
        %v1888 = vsel %vm916, %v1865, 0
        %v1891 = vsel %vm916, %v1866, 0
        %v1894 = vsel %vm916, %v1867, 0
        %v1897 = vsel %vm916, %v1868, 0
        %v1900 = vsel %vm916, %v1869, 0
        %v1903 = vsel %vm916, %v1870, 0
        %v1906 = vsel %vm916, %v1871, 0
        %v1909 = vsel %vm916, %v1872, 0
        %v1912 = vsel %vm916, %v1873, 0
        %v1915 = vsel %vm916, %v1874, 0
        %v1918 = vsel %vm916, %v1875, 0
        %v1921 = vsel %vm916, %v1876, 0
        %v1924 = vsel %vm916, %v1877, 0
        %v1927 = vand.u32 %v1829, %v968
        %1929 = vmatprep.subr.bf16.mxu0 0
        %1930 = vmatpush1.bf16.msra.mxu0 %v1927
        %1931 = vmatprep.subr.bf16.mxu0 0
        %1932 = vmatpush1.bf16.msra.mxu0 0
        %1933 = vmatprep.subr.bf16.mxu0 0
        %1934 = vmatpush1.bf16.msra.mxu0 0
        %1935 = vmatprep.subr.bf16.mxu0 0
        %1936 = vmatpush1.bf16.msra.mxu0 0
        %1937 = vmatprep.subr.bf16.mxu0 0
        %1938 = vmatpush1.bf16.msra.mxu0 0
        %1939 = vmatprep.subr.bf16.mxu0 0
        %1940 = vmatpush1.bf16.msra.mxu0 0
        %1941 = vmatprep.subr.bf16.mxu0 0
        %1942 = vmatpush1.bf16.msra.mxu0 0
        %1943 = vmatprep.subr.bf16.mxu0 0
        %1944 = vmatpush1.bf16.msra.mxu0 0
        %1945 = vmatprep.subr.bf16.mxu0 0
        %1946 = vmatpush1.bf16.msra.mxu0 0
        %1947 = vmatprep.subr.bf16.mxu0 0
        %1948 = vmatpush1.bf16.msra.mxu0 0
        %1949 = vmatprep.subr.bf16.mxu0 0
        %1950 = vmatpush1.bf16.msra.mxu0 0
        %1951 = vmatprep.subr.bf16.mxu0 0
        %1952 = vmatpush1.bf16.msra.mxu0 0
        %1953 = vmatprep.subr.bf16.mxu0 0
        %1954 = vmatpush1.bf16.msra.mxu0 0
        %1955 = vmatprep.subr.bf16.mxu0 0
        %1956 = vmatpush1.bf16.msra.mxu0 0
        %1957 = vmatprep.subr.bf16.mxu0 0
        %1958 = vmatpush1.bf16.msra.mxu0 0
        %1959 = vmatprep.subr.bf16.mxu0 0
        %1960 = vmatpush1.bf16.msra.mxu0 0
        %1961 = vmatprep.mubr.bf16.mxu0 0
        %1962 = vmatmul.mubr.bf16.gmra.mrb[0].mxu0 %v1879
        %v1963 = vpop.f32.mrb[0].mxu0
        %v1964 = vadd.f32 0.0, %v1963
        %v1965 = vpop.f32.mrb[0].mxu0
        %v1966 = vpop.f32.mrb[0].mxu0
        %v1967 = vadd.f32 0.0, %v1966
        %v1968 = vpop.f32.mrb[0].mxu0
        %1969 = vmatprep.mubr.bf16.mxu0 0
        %1970 = vmatmul.mubr.bf16.gmra.mrb[0].mxu0 %v1882
        %v1971 = vpop.f32.mrb[0].mxu0
        %v1972 = vadd.f32 0.0, %v1971
        %v1973 = vpop.f32.mrb[0].mxu0
        %v1974 = vpop.f32.mrb[0].mxu0
        %v1975 = vadd.f32 0.0, %v1974
        %v1976 = vpop.f32.mrb[0].mxu0
        %1977 = vmatprep.mubr.bf16.mxu0 0
        %1978 = vmatmul.mubr.bf16.gmra.mrb[0].mxu0 %v1885
        %v1979 = vpop.f32.mrb[0].mxu0
        %v1980 = vadd.f32 0.0, %v1979
        %v1981 = vpop.f32.mrb[0].mxu0
        %v1982 = vpop.f32.mrb[0].mxu0
        %v1983 = vadd.f32 0.0, %v1982
        %v1984 = vpop.f32.mrb[0].mxu0
        %1985 = vmatprep.mubr.bf16.mxu0 0
        %1986 = vmatmul.mubr.bf16.gmra.mrb[0].mxu0 %v1888
        %v1987 = vpop.f32.mrb[0].mxu0
        %v1988 = vadd.f32 0.0, %v1987
        %v1989 = vpop.f32.mrb[0].mxu0
        %v1990 = vpop.f32.mrb[0].mxu0
        %v1991 = vadd.f32 0.0, %v1990
        %v1992 = vpop.f32.mrb[0].mxu0
        %1993 = vmatprep.mubr.bf16.mxu0 0
        %1994 = vmatmul.mubr.bf16.gmra.mrb[0].mxu0 %v1891
        %v1995 = vpop.f32.mrb[0].mxu0
        %v1996 = vadd.f32 0.0, %v1995
        %v1997 = vpop.f32.mrb[0].mxu0
        %v1998 = vpop.f32.mrb[0].mxu0
        %v1999 = vadd.f32 0.0, %v1998
        %v2000 = vpop.f32.mrb[0].mxu0
        %2001 = vmatprep.mubr.bf16.mxu0 0
        %2002 = vmatmul.mubr.bf16.gmra.mrb[0].mxu0 %v1894
        %v2003 = vpop.f32.mrb[0].mxu0
        %v2004 = vadd.f32 0.0, %v2003
        %v2005 = vpop.f32.mrb[0].mxu0
        %v2006 = vpop.f32.mrb[0].mxu0
        %v2007 = vadd.f32 0.0, %v2006
        %v2008 = vpop.f32.mrb[0].mxu0
        %2009 = vmatprep.mubr.bf16.mxu0 0
        %2010 = vmatmul.mubr.bf16.gmra.mrb[0].mxu0 %v1897
        %v2011 = vpop.f32.mrb[0].mxu0
        %v2012 = vadd.f32 0.0, %v2011
        %v2013 = vpop.f32.mrb[0].mxu0
        %v2014 = vpop.f32.mrb[0].mxu0
        %v2015 = vadd.f32 0.0, %v2014
        %v2016 = vpop.f32.mrb[0].mxu0
        %2017 = vmatprep.mubr.bf16.mxu0 0
        %2018 = vmatmul.mubr.bf16.gmra.mrb[0].mxu0 %v1900
        %v2019 = vpop.f32.mrb[0].mxu0
        %v2020 = vadd.f32 0.0, %v2019
        %v2021 = vpop.f32.mrb[0].mxu0
        %v2022 = vpop.f32.mrb[0].mxu0
        %v2023 = vadd.f32 0.0, %v2022
        %v2024 = vpop.f32.mrb[0].mxu0
        %2025 = vmatprep.mubr.bf16.mxu0 0
        %2026 = vmatmul.mubr.bf16.gmra.mrb[0].mxu0 %v1903
        %v2027 = vpop.f32.mrb[0].mxu0
        %v2028 = vadd.f32 0.0, %v2027
        %v2029 = vpop.f32.mrb[0].mxu0
        %v2030 = vpop.f32.mrb[0].mxu0
        %v2031 = vadd.f32 0.0, %v2030
        %v2032 = vpop.f32.mrb[0].mxu0
        %2033 = vmatprep.mubr.bf16.mxu0 0
        %2034 = vmatmul.mubr.bf16.gmra.mrb[0].mxu0 %v1906
        %v2035 = vpop.f32.mrb[0].mxu0
        %v2036 = vadd.f32 0.0, %v2035
        %v2037 = vpop.f32.mrb[0].mxu0
        %v2038 = vpop.f32.mrb[0].mxu0
        %v2039 = vadd.f32 0.0, %v2038
        %v2040 = vpop.f32.mrb[0].mxu0
        %2041 = vmatprep.mubr.bf16.mxu0 0
        %2042 = vmatmul.mubr.bf16.gmra.mrb[0].mxu0 %v1909
        %v2043 = vpop.f32.mrb[0].mxu0
        %v2044 = vadd.f32 0.0, %v2043
        %v2045 = vpop.f32.mrb[0].mxu0
        %v2046 = vpop.f32.mrb[0].mxu0
        %v2047 = vadd.f32 0.0, %v2046
        %v2048 = vpop.f32.mrb[0].mxu0
        %2049 = vmatprep.mubr.bf16.mxu0 0
        %2050 = vmatmul.mubr.bf16.gmra.mrb[0].mxu0 %v1912
        %v2051 = vpop.f32.mrb[0].mxu0
        %v2052 = vadd.f32 0.0, %v2051
        %v2053 = vpop.f32.mrb[0].mxu0
        %v2054 = vpop.f32.mrb[0].mxu0
        %v2055 = vadd.f32 0.0, %v2054
        %v2056 = vpop.f32.mrb[0].mxu0
        %2057 = vmatprep.mubr.bf16.mxu0 0
        %2058 = vmatmul.mubr.bf16.gmra.mrb[0].mxu0 %v1915
        %v2059 = vpop.f32.mrb[0].mxu0
        %v2060 = vadd.f32 0.0, %v2059
        %v2061 = vpop.f32.mrb[0].mxu0
        %v2062 = vpop.f32.mrb[0].mxu0
        %v2063 = vadd.f32 0.0, %v2062
        %v2064 = vpop.f32.mrb[0].mxu0
        %2065 = vmatprep.mubr.bf16.mxu0 0
        %2066 = vmatmul.mubr.bf16.gmra.mrb[0].mxu0 %v1918
        %v2067 = vpop.f32.mrb[0].mxu0
        %v2068 = vadd.f32 0.0, %v2067
        %v2069 = vpop.f32.mrb[0].mxu0
        %v2070 = vpop.f32.mrb[0].mxu0
        %v2071 = vadd.f32 0.0, %v2070
        %v2072 = vpop.f32.mrb[0].mxu0
        %2073 = vmatprep.mubr.bf16.mxu0 0
        %2074 = vmatmul.mubr.bf16.gmra.mrb[0].mxu0 %v1921
        %v2075 = vpop.f32.mrb[0].mxu0
        %v2076 = vadd.f32 0.0, %v2075
        %v2077 = vpop.f32.mrb[0].mxu0
        %v2078 = vpop.f32.mrb[0].mxu0
        %v2079 = vadd.f32 0.0, %v2078
        %v2080 = vpop.f32.mrb[0].mxu0
        %2081 = vmatprep.mubr.bf16.mxu0 0
        %2082 = vmatmul.mubr.bf16.gmra.mrb[0].mxu0 %v1924
        %v2083 = vpop.f32.mrb[0].mxu0
        %v2084 = vadd.f32 0.0, %v2083
        %v2085 = vpop.f32.mrb[0].mxu0
        %v2086 = vpop.f32.mrb[0].mxu0
        %v2087 = vadd.f32 0.0, %v2086
        %v2088 = vpop.f32.mrb[0].mxu0
        %2089 = vdwg.mxu0
        %v2090 = vadd.f32 %v1267, %v1964
        %v2091 = vadd.f32 %v1270, %v1967
        %v2092 = vadd.f32 %v1275, %v1972
        %v2093 = vadd.f32 %v1278, %v1975
        %v2094 = vadd.f32 %v1283, %v1980
        %v2095 = vadd.f32 %v1286, %v1983
        %v2096 = vadd.f32 %v1291, %v1988
        %v2097 = vadd.f32 %v1294, %v1991
        %v2098 = vadd.f32 %v1299, %v1996
        %v2099 = vadd.f32 %v1302, %v1999
        %v2100 = vadd.f32 %v1307, %v2004
        %v2101 = vadd.f32 %v1310, %v2007
        %v2102 = vadd.f32 %v1315, %v2012
        %v2103 = vadd.f32 %v1318, %v2015
        %v2104 = vadd.f32 %v1323, %v2020
        %v2105 = vadd.f32 %v1326, %v2023
        %v2106 = vadd.f32 %v1331, %v2028
        %v2107 = vadd.f32 %v1334, %v2031
        %v2108 = vadd.f32 %v1339, %v2036
        %v2109 = vadd.f32 %v1342, %v2039
        %v2110 = vadd.f32 %v1347, %v2044
        %v2111 = vadd.f32 %v1350, %v2047
        %v2112 = vadd.f32 %v1355, %v2052
        %v2113 = vadd.f32 %v1358, %v2055
        %v2114 = vadd.f32 %v1363, %v2060
        %v2115 = vadd.f32 %v1366, %v2063
        %v2116 = vadd.f32 %v1371, %v2068
        %v2117 = vadd.f32 %v1374, %v2071
        %v2118 = vadd.f32 %v1379, %v2076
        %v2119 = vadd.f32 %v1382, %v2079
        %v2120 = vadd.f32 %v1387, %v2084
        %v2121 = vadd.f32 %v1390, %v2087
        %s2122 = sadd.s32 %s225, 1
        %s2123 = smul.u32 %s2122, 5
        %s2124 = smul.addr %s2123, 4
        %s2125 = scalar_lea.vmem [#allocation2], %s2124
        %v2126 = vld [vmem:[%s2125 + $0x4] sm:$0x8]
        %v2127 = vld [vmem:[%s2125 + $0x8] sm:$0xf]
        %v2128 = vld [vmem:[%s2125 + $0xc] sm:$0xf]
        %v2129 = vld [vmem:[%s2125 + $0x18] sm:$0x8]
        %v2130 = vld [vmem:[%s2125 + $0x1c] sm:$0xf]
        %v2131 = vld [vmem:[%s2125 + $0x20] sm:$0xf]
        %v2132 = vld [vmem:[%s2125 + $0x2c] sm:$0x8]
        %v2133 = vld [vmem:[%s2125 + $0x30] sm:$0xf]
        %v2134 = vld [vmem:[%s2125 + $0x34] sm:$0xf]
        %v2135 = vld [vmem:[%s2125 + $0x40] sm:$0x8]
        %v2136 = vld [vmem:[%s2125 + $0x44] sm:$0xf]
        %v2137 = vld [vmem:[%s2125 + $0x48] sm:$0xf]
        %v2138 = vld [vmem:[%s2125 + $0x54] sm:$0x8]
        %v2139 = vld [vmem:[%s2125 + $0x58] sm:$0xf]
        %v2140 = vld [vmem:[%s2125 + $0x5c] sm:$0xf]
        %v2141 = vld [vmem:[%s2125 + $0x68] sm:$0x8]
        %v2142 = vld [vmem:[%s2125 + $0x6c] sm:$0xf]
        %v2143 = vld [vmem:[%s2125 + $0x70] sm:$0xf]
        %v2144 = vld [vmem:[%s2125 + $0x7c] sm:$0x8]
        %v2145 = vld [vmem:[%s2125 + $0x80] sm:$0xf]
        %v2146 = vld [vmem:[%s2125 + $0x84] sm:$0xf]
        %v2147 = vld [vmem:[%s2125 + $0x90] sm:$0x8]
        %v2148 = vld [vmem:[%s2125 + $0x94] sm:$0xf]
        %v2149 = vld [vmem:[%s2125 + $0x98] sm:$0xf]
        %v2150 = vld [vmem:[%s2125 + $0xa4] sm:$0x8]
        %v2151 = vld [vmem:[%s2125 + $0xa8] sm:$0xf]
        %v2152 = vld [vmem:[%s2125 + $0xac] sm:$0xf]
        %v2153 = vld [vmem:[%s2125 + $0xb8] sm:$0x8]
        %v2154 = vld [vmem:[%s2125 + $0xbc] sm:$0xf]
        %v2155 = vld [vmem:[%s2125 + $0xc0] sm:$0xf]
        %v2156 = vld [vmem:[%s2125 + $0xcc] sm:$0x8]
        %v2157 = vld [vmem:[%s2125 + $0xd0] sm:$0xf]
        %v2158 = vld [vmem:[%s2125 + $0xd4] sm:$0xf]
        %v2159 = vld [vmem:[%s2125 + $0xe0] sm:$0x8]
        %v2160 = vld [vmem:[%s2125 + $0xe4] sm:$0xf]
        %v2161 = vld [vmem:[%s2125 + $0xe8] sm:$0xf]
        %v2162 = vld [vmem:[%s2125 + $0xf4] sm:$0x8]
        %v2163 = vld [vmem:[%s2125 + $0xf8] sm:$0xf]
        %v2164 = vld [vmem:[%s2125 + $0xfc] sm:$0xf]
        %v2165 = vld [vmem:[%s2125 + $0x108] sm:$0x8]
        %v2166 = vld [vmem:[%s2125 + $0x10c] sm:$0xf]
        %v2167 = vld [vmem:[%s2125 + $0x110] sm:$0xf]
        %v2168 = vld [vmem:[%s2125 + $0x11c] sm:$0x8]
        %v2169 = vld [vmem:[%s2125 + $0x120] sm:$0xf]
        %v2170 = vld [vmem:[%s2125 + $0x124] sm:$0xf]
        %v2171 = vld [vmem:[%s2125 + $0x130] sm:$0x8]
        %v2172 = vld [vmem:[%s2125 + $0x134] sm:$0xf]
        %v2173 = vld [vmem:[%s2125 + $0x138] sm:$0xf]
        %v2175 = vshrl.u32 %v2126, 16
        %v2177 = vrot.slane %v2175, 7
        %v2178 = vrot.slane %v2177, 4
        %v2180 = vshrl.u32 %v2127, 16
        %v2182 = vrot.slane %v2180, 7
        %v2183 = vshll.u32 %v2127, 16
        %v2185 = vor.u32 %v2182, %v2183
        %v2186 = vsel %vm480, %v2178, %v2185
        %v2187 = vrot.slane %v2182, 4
        %v2189 = vshrl.u32 %v2128, 16
        %v2191 = vrot.slane %v2189, 7
        %v2192 = vshll.u32 %v2128, 16
        %v2194 = vor.u32 %v2191, %v2192
        %v2195 = vsel %vm480, %v2187, %v2194
        %v2197 = vshrl.u32 %v2129, 16
        %v2199 = vrot.slane %v2197, 7
        %v2200 = vrot.slane %v2199, 4
        %v2202 = vshrl.u32 %v2130, 16
        %v2204 = vrot.slane %v2202, 7
        %v2205 = vshll.u32 %v2130, 16
        %v2207 = vor.u32 %v2204, %v2205
        %v2208 = vsel %vm480, %v2200, %v2207
        %v2209 = vrot.slane %v2204, 4
        %v2211 = vshrl.u32 %v2131, 16
        %v2213 = vrot.slane %v2211, 7
        %v2214 = vshll.u32 %v2131, 16
        %v2216 = vor.u32 %v2213, %v2214
        %v2217 = vsel %vm480, %v2209, %v2216
        %v2219 = vshrl.u32 %v2132, 16
        %v2221 = vrot.slane %v2219, 7
        %v2222 = vrot.slane %v2221, 4
        %v2224 = vshrl.u32 %v2133, 16
        %v2226 = vrot.slane %v2224, 7
        %v2227 = vshll.u32 %v2133, 16
        %v2229 = vor.u32 %v2226, %v2227
        %v2230 = vsel %vm480, %v2222, %v2229
        %v2231 = vrot.slane %v2226, 4
        %v2233 = vshrl.u32 %v2134, 16
        %v2235 = vrot.slane %v2233, 7
        %v2236 = vshll.u32 %v2134, 16
        %v2238 = vor.u32 %v2235, %v2236
        %v2239 = vsel %vm480, %v2231, %v2238
        %v2241 = vshrl.u32 %v2135, 16
        %v2243 = vrot.slane %v2241, 7
        %v2244 = vrot.slane %v2243, 4
        %v2246 = vshrl.u32 %v2136, 16
        %v2248 = vrot.slane %v2246, 7
        %v2249 = vshll.u32 %v2136, 16
        %v2251 = vor.u32 %v2248, %v2249
        %v2252 = vsel %vm480, %v2244, %v2251
        %v2253 = vrot.slane %v2248, 4
        %v2255 = vshrl.u32 %v2137, 16
        %v2257 = vrot.slane %v2255, 7
        %v2258 = vshll.u32 %v2137, 16
        %v2260 = vor.u32 %v2257, %v2258
        %v2261 = vsel %vm480, %v2253, %v2260
        %v2263 = vshrl.u32 %v2138, 16
        %v2265 = vrot.slane %v2263, 7
        %v2266 = vrot.slane %v2265, 4
        %v2268 = vshrl.u32 %v2139, 16
        %v2270 = vrot.slane %v2268, 7
        %v2271 = vshll.u32 %v2139, 16
        %v2273 = vor.u32 %v2270, %v2271
        %v2274 = vsel %vm480, %v2266, %v2273
        %v2275 = vrot.slane %v2270, 4
        %v2277 = vshrl.u32 %v2140, 16
        %v2279 = vrot.slane %v2277, 7
        %v2280 = vshll.u32 %v2140, 16
        %v2282 = vor.u32 %v2279, %v2280
        %v2283 = vsel %vm480, %v2275, %v2282
        %v2285 = vshrl.u32 %v2141, 16
        %v2287 = vrot.slane %v2285, 7
        %v2288 = vrot.slane %v2287, 4
        %v2290 = vshrl.u32 %v2142, 16
        %v2292 = vrot.slane %v2290, 7
        %v2293 = vshll.u32 %v2142, 16
        %v2295 = vor.u32 %v2292, %v2293
        %v2296 = vsel %vm480, %v2288, %v2295
        %v2297 = vrot.slane %v2292, 4
        %v2299 = vshrl.u32 %v2143, 16
        %v2301 = vrot.slane %v2299, 7
        %v2302 = vshll.u32 %v2143, 16
        %v2304 = vor.u32 %v2301, %v2302
        %v2305 = vsel %vm480, %v2297, %v2304
        %v2307 = vshrl.u32 %v2144, 16
        %v2309 = vrot.slane %v2307, 7
        %v2310 = vrot.slane %v2309, 4
        %v2312 = vshrl.u32 %v2145, 16
        %v2314 = vrot.slane %v2312, 7
        %v2315 = vshll.u32 %v2145, 16
        %v2317 = vor.u32 %v2314, %v2315
        %v2318 = vsel %vm480, %v2310, %v2317
        %v2319 = vrot.slane %v2314, 4
        %v2321 = vshrl.u32 %v2146, 16
        %v2323 = vrot.slane %v2321, 7
        %v2324 = vshll.u32 %v2146, 16
        %v2326 = vor.u32 %v2323, %v2324
        %v2327 = vsel %vm480, %v2319, %v2326
        %v2329 = vshrl.u32 %v2147, 16
        %v2331 = vrot.slane %v2329, 7
        %v2332 = vrot.slane %v2331, 4
        %v2334 = vshrl.u32 %v2148, 16
        %v2336 = vrot.slane %v2334, 7
        %v2337 = vshll.u32 %v2148, 16
        %v2339 = vor.u32 %v2336, %v2337
        %v2340 = vsel %vm480, %v2332, %v2339
        %v2341 = vrot.slane %v2336, 4
        %v2343 = vshrl.u32 %v2149, 16
        %v2345 = vrot.slane %v2343, 7
        %v2346 = vshll.u32 %v2149, 16
        %v2348 = vor.u32 %v2345, %v2346
        %v2349 = vsel %vm480, %v2341, %v2348
        %v2351 = vshrl.u32 %v2150, 16
        %v2353 = vrot.slane %v2351, 7
        %v2354 = vrot.slane %v2353, 4
        %v2356 = vshrl.u32 %v2151, 16
        %v2358 = vrot.slane %v2356, 7
        %v2359 = vshll.u32 %v2151, 16
        %v2361 = vor.u32 %v2358, %v2359
        %v2362 = vsel %vm480, %v2354, %v2361
        %v2363 = vrot.slane %v2358, 4
        %v2365 = vshrl.u32 %v2152, 16
        %v2367 = vrot.slane %v2365, 7
        %v2368 = vshll.u32 %v2152, 16
        %v2370 = vor.u32 %v2367, %v2368
        %v2371 = vsel %vm480, %v2363, %v2370
        %v2373 = vshrl.u32 %v2153, 16
        %v2375 = vrot.slane %v2373, 7
        %v2376 = vrot.slane %v2375, 4
        %v2378 = vshrl.u32 %v2154, 16
        %v2380 = vrot.slane %v2378, 7
        %v2381 = vshll.u32 %v2154, 16
        %v2383 = vor.u32 %v2380, %v2381
        %v2384 = vsel %vm480, %v2376, %v2383
        %v2385 = vrot.slane %v2380, 4
        %v2387 = vshrl.u32 %v2155, 16
        %v2389 = vrot.slane %v2387, 7
        %v2390 = vshll.u32 %v2155, 16
        %v2392 = vor.u32 %v2389, %v2390
        %v2393 = vsel %vm480, %v2385, %v2392
        %v2395 = vshrl.u32 %v2156, 16
        %v2397 = vrot.slane %v2395, 7
        %v2398 = vrot.slane %v2397, 4
        %v2400 = vshrl.u32 %v2157, 16
        %v2402 = vrot.slane %v2400, 7
        %v2403 = vshll.u32 %v2157, 16
        %v2405 = vor.u32 %v2402, %v2403
        %v2406 = vsel %vm480, %v2398, %v2405
        %v2407 = vrot.slane %v2402, 4
        %v2409 = vshrl.u32 %v2158, 16
        %v2411 = vrot.slane %v2409, 7
        %v2412 = vshll.u32 %v2158, 16
        %v2414 = vor.u32 %v2411, %v2412
        %v2415 = vsel %vm480, %v2407, %v2414
        %v2417 = vshrl.u32 %v2159, 16
        %v2419 = vrot.slane %v2417, 7
        %v2420 = vrot.slane %v2419, 4
        %v2422 = vshrl.u32 %v2160, 16
        %v2424 = vrot.slane %v2422, 7
        %v2425 = vshll.u32 %v2160, 16
        %v2427 = vor.u32 %v2424, %v2425
        %v2428 = vsel %vm480, %v2420, %v2427
        %v2429 = vrot.slane %v2424, 4
        %v2431 = vshrl.u32 %v2161, 16
        %v2433 = vrot.slane %v2431, 7
        %v2434 = vshll.u32 %v2161, 16
        %v2436 = vor.u32 %v2433, %v2434
        %v2437 = vsel %vm480, %v2429, %v2436
        %v2439 = vshrl.u32 %v2162, 16
        %v2441 = vrot.slane %v2439, 7
        %v2442 = vrot.slane %v2441, 4
        %v2444 = vshrl.u32 %v2163, 16
        %v2446 = vrot.slane %v2444, 7
        %v2447 = vshll.u32 %v2163, 16
        %v2449 = vor.u32 %v2446, %v2447
        %v2450 = vsel %vm480, %v2442, %v2449
        %v2451 = vrot.slane %v2446, 4
        %v2453 = vshrl.u32 %v2164, 16
        %v2455 = vrot.slane %v2453, 7
        %v2456 = vshll.u32 %v2164, 16
        %v2458 = vor.u32 %v2455, %v2456
        %v2459 = vsel %vm480, %v2451, %v2458
        %v2461 = vshrl.u32 %v2165, 16
        %v2463 = vrot.slane %v2461, 7
        %v2464 = vrot.slane %v2463, 4
        %v2466 = vshrl.u32 %v2166, 16
        %v2468 = vrot.slane %v2466, 7
        %v2469 = vshll.u32 %v2166, 16
        %v2471 = vor.u32 %v2468, %v2469
        %v2472 = vsel %vm480, %v2464, %v2471
        %v2473 = vrot.slane %v2468, 4
        %v2475 = vshrl.u32 %v2167, 16
        %v2477 = vrot.slane %v2475, 7
        %v2478 = vshll.u32 %v2167, 16
        %v2480 = vor.u32 %v2477, %v2478
        %v2481 = vsel %vm480, %v2473, %v2480
        %v2483 = vshrl.u32 %v2168, 16
        %v2485 = vrot.slane %v2483, 7
        %v2486 = vrot.slane %v2485, 4
        %v2488 = vshrl.u32 %v2169, 16
        %v2490 = vrot.slane %v2488, 7
        %v2491 = vshll.u32 %v2169, 16
        %v2493 = vor.u32 %v2490, %v2491
        %v2494 = vsel %vm480, %v2486, %v2493
        %v2495 = vrot.slane %v2490, 4
        %v2497 = vshrl.u32 %v2170, 16
        %v2499 = vrot.slane %v2497, 7
        %v2500 = vshll.u32 %v2170, 16
        %v2502 = vor.u32 %v2499, %v2500
        %v2503 = vsel %vm480, %v2495, %v2502
        %v2505 = vshrl.u32 %v2171, 16
        %v2507 = vrot.slane %v2505, 7
        %v2508 = vrot.slane %v2507, 4
        %v2510 = vshrl.u32 %v2172, 16
        %v2512 = vrot.slane %v2510, 7
        %v2513 = vshll.u32 %v2172, 16
        %v2515 = vor.u32 %v2512, %v2513
        %v2516 = vsel %vm480, %v2508, %v2515
        %v2517 = vrot.slane %v2512, 4
        %v2519 = vshrl.u32 %v2173, 16
        %v2521 = vrot.slane %v2519, 7
        %v2522 = vshll.u32 %v2173, 16
        %v2524 = vor.u32 %v2521, %v2522
        %v2525 = vsel %vm480, %v2517, %v2524
        %s2526 = scalar_lea.vmem %s219, 6
        %v2527 = vld [vmem:[%s2526] sm:$0x3]
        %v2528 = vunpack.c.l.b16 %v2186
        %v2529 = vunpack.c.l.b16 %v2195
        %v2530 = vunpack.c.l.b16 %v2208
        %v2531 = vunpack.c.l.b16 %v2217
        %v2532 = vunpack.c.l.b16 %v2230
        %v2533 = vunpack.c.l.b16 %v2239
        %v2534 = vunpack.c.l.b16 %v2252
        %v2535 = vunpack.c.l.b16 %v2261
        %v2536 = vunpack.c.l.b16 %v2274
        %v2537 = vunpack.c.l.b16 %v2283
        %v2538 = vunpack.c.l.b16 %v2296
        %v2539 = vunpack.c.l.b16 %v2305
        %v2540 = vunpack.c.l.b16 %v2318
        %v2541 = vunpack.c.l.b16 %v2327
        %v2542 = vunpack.c.l.b16 %v2340
        %v2543 = vunpack.c.l.b16 %v2349
        %v2544 = vunpack.c.l.b16 %v2362
        %v2545 = vunpack.c.l.b16 %v2371
        %v2546 = vunpack.c.l.b16 %v2384
        %v2547 = vunpack.c.l.b16 %v2393
        %v2548 = vunpack.c.l.b16 %v2406
        %v2549 = vunpack.c.l.b16 %v2415
        %v2550 = vunpack.c.l.b16 %v2428
        %v2551 = vunpack.c.l.b16 %v2437
        %v2552 = vunpack.c.l.b16 %v2450
        %v2553 = vunpack.c.l.b16 %v2459
        %v2554 = vunpack.c.l.b16 %v2472
        %v2555 = vunpack.c.l.b16 %v2481
        %v2556 = vunpack.c.l.b16 %v2494
        %v2557 = vunpack.c.l.b16 %v2503
        %v2558 = vunpack.c.l.b16 %v2516
        %v2559 = vunpack.c.l.b16 %v2525
        %v2560 = vpack.c.b16 %v2529, %v2528
        %v2561 = vpack.c.b16 %v2531, %v2530
        %v2562 = vpack.c.b16 %v2533, %v2532
        %v2563 = vpack.c.b16 %v2535, %v2534
        %v2564 = vpack.c.b16 %v2537, %v2536
        %v2565 = vpack.c.b16 %v2539, %v2538
        %v2566 = vpack.c.b16 %v2541, %v2540
        %v2567 = vpack.c.b16 %v2543, %v2542
        %v2568 = vpack.c.b16 %v2545, %v2544
        %v2569 = vpack.c.b16 %v2547, %v2546
        %v2570 = vpack.c.b16 %v2549, %v2548
        %v2571 = vpack.c.b16 %v2551, %v2550
        %v2572 = vpack.c.b16 %v2553, %v2552
        %v2573 = vpack.c.b16 %v2555, %v2554
        %v2574 = vpack.c.b16 %v2557, %v2556
        %v2575 = vpack.c.b16 %v2559, %v2558
        %v2577 = vsel %vm916, %v2560, 0
        %v2580 = vsel %vm916, %v2561, 0
        %v2583 = vsel %vm916, %v2562, 0
        %v2586 = vsel %vm916, %v2563, 0
        %v2589 = vsel %vm916, %v2564, 0
        %v2592 = vsel %vm916, %v2565, 0
        %v2595 = vsel %vm916, %v2566, 0
        %v2598 = vsel %vm916, %v2567, 0
        %v2601 = vsel %vm916, %v2568, 0
        %v2604 = vsel %vm916, %v2569, 0
        %v2607 = vsel %vm916, %v2570, 0
        %v2610 = vsel %vm916, %v2571, 0
        %v2613 = vsel %vm916, %v2572, 0
        %v2616 = vsel %vm916, %v2573, 0
        %v2619 = vsel %vm916, %v2574, 0
        %v2622 = vsel %vm916, %v2575, 0
        %v2625 = vand.u32 %v2527, %v968
        %2627 = vmatprep.subr.bf16.mxu0 0
        %2628 = vmatpush1.bf16.msra.mxu0 %v2625
        %2629 = vmatprep.subr.bf16.mxu0 0
        %2630 = vmatpush1.bf16.msra.mxu0 0
        %2631 = vmatprep.subr.bf16.mxu0 0
        %2632 = vmatpush1.bf16.msra.mxu0 0
        %2633 = vmatprep.subr.bf16.mxu0 0
        %2634 = vmatpush1.bf16.msra.mxu0 0
        %2635 = vmatprep.subr.bf16.mxu0 0
        %2636 = vmatpush1.bf16.msra.mxu0 0
        %2637 = vmatprep.subr.bf16.mxu0 0
        %2638 = vmatpush1.bf16.msra.mxu0 0
        %2639 = vmatprep.subr.bf16.mxu0 0
        %2640 = vmatpush1.bf16.msra.mxu0 0
        %2641 = vmatprep.subr.bf16.mxu0 0
        %2642 = vmatpush1.bf16.msra.mxu0 0
        %2643 = vmatprep.subr.bf16.mxu0 0
        %2644 = vmatpush1.bf16.msra.mxu0 0
        %2645 = vmatprep.subr.bf16.mxu0 0
        %2646 = vmatpush1.bf16.msra.mxu0 0
        %2647 = vmatprep.subr.bf16.mxu0 0
        %2648 = vmatpush1.bf16.msra.mxu0 0
        %2649 = vmatprep.subr.bf16.mxu0 0
        %2650 = vmatpush1.bf16.msra.mxu0 0
        %2651 = vmatprep.subr.bf16.mxu0 0
        %2652 = vmatpush1.bf16.msra.mxu0 0
        %2653 = vmatprep.subr.bf16.mxu0 0
        %2654 = vmatpush1.bf16.msra.mxu0 0
        %2655 = vmatprep.subr.bf16.mxu0 0
        %2656 = vmatpush1.bf16.msra.mxu0 0
        %2657 = vmatprep.subr.bf16.mxu0 0
        %2658 = vmatpush1.bf16.msra.mxu0 0
        %2659 = vmatprep.mubr.bf16.mxu0 0
        %2660 = vmatmul.mubr.bf16.gmra.mrb[0].mxu0 %v2577
        %v2661 = vpop.f32.mrb[0].mxu0
        %v2662 = vadd.f32 0.0, %v2661
        %v2663 = vpop.f32.mrb[0].mxu0
        %v2664 = vpop.f32.mrb[0].mxu0
        %v2665 = vadd.f32 0.0, %v2664
        %v2666 = vpop.f32.mrb[0].mxu0
        %2667 = vmatprep.mubr.bf16.mxu0 0
        %2668 = vmatmul.mubr.bf16.gmra.mrb[0].mxu0 %v2580
        %v2669 = vpop.f32.mrb[0].mxu0
        %v2670 = vadd.f32 0.0, %v2669
        %v2671 = vpop.f32.mrb[0].mxu0
        %v2672 = vpop.f32.mrb[0].mxu0
        %v2673 = vadd.f32 0.0, %v2672
        %v2674 = vpop.f32.mrb[0].mxu0
        %2675 = vmatprep.mubr.bf16.mxu0 0
        %2676 = vmatmul.mubr.bf16.gmra.mrb[0].mxu0 %v2583
        %v2677 = vpop.f32.mrb[0].mxu0
        %v2678 = vadd.f32 0.0, %v2677
        %v2679 = vpop.f32.mrb[0].mxu0
        %v2680 = vpop.f32.mrb[0].mxu0
        %v2681 = vadd.f32 0.0, %v2680
        %v2682 = vpop.f32.mrb[0].mxu0
        %2683 = vmatprep.mubr.bf16.mxu0 0
        %2684 = vmatmul.mubr.bf16.gmra.mrb[0].mxu0 %v2586
        %v2685 = vpop.f32.mrb[0].mxu0
        %v2686 = vadd.f32 0.0, %v2685
        %v2687 = vpop.f32.mrb[0].mxu0
        %v2688 = vpop.f32.mrb[0].mxu0
        %v2689 = vadd.f32 0.0, %v2688
        %v2690 = vpop.f32.mrb[0].mxu0
        %2691 = vmatprep.mubr.bf16.mxu0 0
        %2692 = vmatmul.mubr.bf16.gmra.mrb[0].mxu0 %v2589
        %v2693 = vpop.f32.mrb[0].mxu0
        %v2694 = vadd.f32 0.0, %v2693
        %v2695 = vpop.f32.mrb[0].mxu0
        %v2696 = vpop.f32.mrb[0].mxu0
        %v2697 = vadd.f32 0.0, %v2696
        %v2698 = vpop.f32.mrb[0].mxu0
        %2699 = vmatprep.mubr.bf16.mxu0 0
        %2700 = vmatmul.mubr.bf16.gmra.mrb[0].mxu0 %v2592
        %v2701 = vpop.f32.mrb[0].mxu0
        %v2702 = vadd.f32 0.0, %v2701
        %v2703 = vpop.f32.mrb[0].mxu0
        %v2704 = vpop.f32.mrb[0].mxu0
        %v2705 = vadd.f32 0.0, %v2704
        %v2706 = vpop.f32.mrb[0].mxu0
        %2707 = vmatprep.mubr.bf16.mxu0 0
        %2708 = vmatmul.mubr.bf16.gmra.mrb[0].mxu0 %v2595
        %v2709 = vpop.f32.mrb[0].mxu0
        %v2710 = vadd.f32 0.0, %v2709
        %v2711 = vpop.f32.mrb[0].mxu0
        %v2712 = vpop.f32.mrb[0].mxu0
        %v2713 = vadd.f32 0.0, %v2712
        %v2714 = vpop.f32.mrb[0].mxu0
        %2715 = vmatprep.mubr.bf16.mxu0 0
        %2716 = vmatmul.mubr.bf16.gmra.mrb[0].mxu0 %v2598
        %v2717 = vpop.f32.mrb[0].mxu0
        %v2718 = vadd.f32 0.0, %v2717
        %v2719 = vpop.f32.mrb[0].mxu0
        %v2720 = vpop.f32.mrb[0].mxu0
        %v2721 = vadd.f32 0.0, %v2720
        %v2722 = vpop.f32.mrb[0].mxu0
        %2723 = vmatprep.mubr.bf16.mxu0 0
        %2724 = vmatmul.mubr.bf16.gmra.mrb[0].mxu0 %v2601
        %v2725 = vpop.f32.mrb[0].mxu0
        %v2726 = vadd.f32 0.0, %v2725
        %v2727 = vpop.f32.mrb[0].mxu0
        %v2728 = vpop.f32.mrb[0].mxu0
        %v2729 = vadd.f32 0.0, %v2728
        %v2730 = vpop.f32.mrb[0].mxu0
        %2731 = vmatprep.mubr.bf16.mxu0 0
        %2732 = vmatmul.mubr.bf16.gmra.mrb[0].mxu0 %v2604
        %v2733 = vpop.f32.mrb[0].mxu0
        %v2734 = vadd.f32 0.0, %v2733
        %v2735 = vpop.f32.mrb[0].mxu0
        %v2736 = vpop.f32.mrb[0].mxu0
        %v2737 = vadd.f32 0.0, %v2736
        %v2738 = vpop.f32.mrb[0].mxu0
        %2739 = vmatprep.mubr.bf16.mxu0 0
        %2740 = vmatmul.mubr.bf16.gmra.mrb[0].mxu0 %v2607
        %v2741 = vpop.f32.mrb[0].mxu0
        %v2742 = vadd.f32 0.0, %v2741
        %v2743 = vpop.f32.mrb[0].mxu0
        %v2744 = vpop.f32.mrb[0].mxu0
        %v2745 = vadd.f32 0.0, %v2744
        %v2746 = vpop.f32.mrb[0].mxu0
        %2747 = vmatprep.mubr.bf16.mxu0 0
        %2748 = vmatmul.mubr.bf16.gmra.mrb[0].mxu0 %v2610
        %v2749 = vpop.f32.mrb[0].mxu0
        %v2750 = vadd.f32 0.0, %v2749
        %v2751 = vpop.f32.mrb[0].mxu0
        %v2752 = vpop.f32.mrb[0].mxu0
        %v2753 = vadd.f32 0.0, %v2752
        %v2754 = vpop.f32.mrb[0].mxu0
        %2755 = vmatprep.mubr.bf16.mxu0 0
        %2756 = vmatmul.mubr.bf16.gmra.mrb[0].mxu0 %v2613
        %v2757 = vpop.f32.mrb[0].mxu0
        %v2758 = vadd.f32 0.0, %v2757
        %v2759 = vpop.f32.mrb[0].mxu0
        %v2760 = vpop.f32.mrb[0].mxu0
        %v2761 = vadd.f32 0.0, %v2760
        %v2762 = vpop.f32.mrb[0].mxu0
        %2763 = vmatprep.mubr.bf16.mxu0 0
        %2764 = vmatmul.mubr.bf16.gmra.mrb[0].mxu0 %v2616
        %v2765 = vpop.f32.mrb[0].mxu0
        %v2766 = vadd.f32 0.0, %v2765
        %v2767 = vpop.f32.mrb[0].mxu0
        %v2768 = vpop.f32.mrb[0].mxu0
        %v2769 = vadd.f32 0.0, %v2768
        %v2770 = vpop.f32.mrb[0].mxu0
        %2771 = vmatprep.mubr.bf16.mxu0 0
        %2772 = vmatmul.mubr.bf16.gmra.mrb[0].mxu0 %v2619
        %v2773 = vpop.f32.mrb[0].mxu0
        %v2774 = vadd.f32 0.0, %v2773
        %v2775 = vpop.f32.mrb[0].mxu0
        %v2776 = vpop.f32.mrb[0].mxu0
        %v2777 = vadd.f32 0.0, %v2776
        %v2778 = vpop.f32.mrb[0].mxu0
        %2779 = vmatprep.mubr.bf16.mxu0 0
        %2780 = vmatmul.mubr.bf16.gmra.mrb[0].mxu0 %v2622
        %v2781 = vpop.f32.mrb[0].mxu0
        %v2782 = vadd.f32 0.0, %v2781
        %v2783 = vpop.f32.mrb[0].mxu0
        %v2784 = vpop.f32.mrb[0].mxu0
        %v2785 = vadd.f32 0.0, %v2784
        %v2786 = vpop.f32.mrb[0].mxu0
        %2787 = vdwg.mxu0
        %v2788 = vadd.f32 %v2090, %v2662
        %v2789 = vadd.f32 %v2091, %v2665
        %v2790 = vadd.f32 %v2092, %v2670
        %v2791 = vadd.f32 %v2093, %v2673
        %v2792 = vadd.f32 %v2094, %v2678
        %v2793 = vadd.f32 %v2095, %v2681
        %v2794 = vadd.f32 %v2096, %v2686
        %v2795 = vadd.f32 %v2097, %v2689
        %v2796 = vadd.f32 %v2098, %v2694
        %v2797 = vadd.f32 %v2099, %v2697
        %v2798 = vadd.f32 %v2100, %v2702
        %v2799 = vadd.f32 %v2101, %v2705
        %v2800 = vadd.f32 %v2102, %v2710
        %v2801 = vadd.f32 %v2103, %v2713
        %v2802 = vadd.f32 %v2104, %v2718
        %v2803 = vadd.f32 %v2105, %v2721
        %v2804 = vadd.f32 %v2106, %v2726
        %v2805 = vadd.f32 %v2107, %v2729
        %v2806 = vadd.f32 %v2108, %v2734
        %v2807 = vadd.f32 %v2109, %v2737
        %v2808 = vadd.f32 %v2110, %v2742
        %v2809 = vadd.f32 %v2111, %v2745
        %v2810 = vadd.f32 %v2112, %v2750
        %v2811 = vadd.f32 %v2113, %v2753
        %v2812 = vadd.f32 %v2114, %v2758
        %v2813 = vadd.f32 %v2115, %v2761
        %v2814 = vadd.f32 %v2116, %v2766
        %v2815 = vadd.f32 %v2117, %v2769
        %v2816 = vadd.f32 %v2118, %v2774
        %v2817 = vadd.f32 %v2119, %v2777
        %v2818 = vadd.f32 %v2120, %v2782
        %v2819 = vadd.f32 %v2121, %v2785
        %s2820 = scalar_lea.vmem %s219, 8
        %v2821 = vld [vmem:[%s2820] sm:$0x3]
        %v2854 = vunpack.c.l.b16 %v2127
        %v2855 = vunpack.c.l.b16 %v2128
        %v2856 = vunpack.c.l.b16 %v2130
        %v2857 = vunpack.c.l.b16 %v2131
        %v2858 = vunpack.c.l.b16 %v2133
        %v2859 = vunpack.c.l.b16 %v2134
        %v2860 = vunpack.c.l.b16 %v2136
        %v2861 = vunpack.c.l.b16 %v2137
        %v2862 = vunpack.c.l.b16 %v2139
        %v2863 = vunpack.c.l.b16 %v2140
        %v2864 = vunpack.c.l.b16 %v2142
        %v2865 = vunpack.c.l.b16 %v2143
        %v2866 = vunpack.c.l.b16 %v2145
        %v2867 = vunpack.c.l.b16 %v2146
        %v2868 = vunpack.c.l.b16 %v2148
        %v2869 = vunpack.c.l.b16 %v2149
        %v2870 = vunpack.c.l.b16 %v2151
        %v2871 = vunpack.c.l.b16 %v2152
        %v2872 = vunpack.c.l.b16 %v2154
        %v2873 = vunpack.c.l.b16 %v2155
        %v2874 = vunpack.c.l.b16 %v2157
        %v2875 = vunpack.c.l.b16 %v2158
        %v2876 = vunpack.c.l.b16 %v2160
        %v2877 = vunpack.c.l.b16 %v2161
        %v2878 = vunpack.c.l.b16 %v2163
        %v2879 = vunpack.c.l.b16 %v2164
        %v2880 = vunpack.c.l.b16 %v2166
        %v2881 = vunpack.c.l.b16 %v2167
        %v2882 = vunpack.c.l.b16 %v2169
        %v2883 = vunpack.c.l.b16 %v2170
        %v2884 = vunpack.c.l.b16 %v2172
        %v2885 = vunpack.c.l.b16 %v2173
        %v2886 = vpack.c.b16 %v2855, %v2854
        %v2887 = vpack.c.b16 %v2857, %v2856
        %v2888 = vpack.c.b16 %v2859, %v2858
        %v2889 = vpack.c.b16 %v2861, %v2860
        %v2890 = vpack.c.b16 %v2863, %v2862
        %v2891 = vpack.c.b16 %v2865, %v2864
        %v2892 = vpack.c.b16 %v2867, %v2866
        %v2893 = vpack.c.b16 %v2869, %v2868
        %v2894 = vpack.c.b16 %v2871, %v2870
        %v2895 = vpack.c.b16 %v2873, %v2872
        %v2896 = vpack.c.b16 %v2875, %v2874
        %v2897 = vpack.c.b16 %v2877, %v2876
        %v2898 = vpack.c.b16 %v2879, %v2878
        %v2899 = vpack.c.b16 %v2881, %v2880
        %v2900 = vpack.c.b16 %v2883, %v2882
        %v2901 = vpack.c.b16 %v2885, %v2884
        %v2903 = vsel %vm916, %v2886, 0
        %v2906 = vsel %vm916, %v2887, 0
        %v2909 = vsel %vm916, %v2888, 0
        %v2912 = vsel %vm916, %v2889, 0
        %v2915 = vsel %vm916, %v2890, 0
        %v2918 = vsel %vm916, %v2891, 0
        %v2921 = vsel %vm916, %v2892, 0
        %v2924 = vsel %vm916, %v2893, 0
        %v2927 = vsel %vm916, %v2894, 0
        %v2930 = vsel %vm916, %v2895, 0
        %v2933 = vsel %vm916, %v2896, 0
        %v2936 = vsel %vm916, %v2897, 0
        %v2939 = vsel %vm916, %v2898, 0
        %v2942 = vsel %vm916, %v2899, 0
        %v2945 = vsel %vm916, %v2900, 0
        %v2948 = vsel %vm916, %v2901, 0
        %v2951 = vand.u32 %v2821, %v968
        %2953 = vmatprep.subr.bf16.mxu0 0
        %2954 = vmatpush1.bf16.msra.mxu0 %v2951
        %2955 = vmatprep.subr.bf16.mxu0 0
        %2956 = vmatpush1.bf16.msra.mxu0 0
        %2957 = vmatprep.subr.bf16.mxu0 0
        %2958 = vmatpush1.bf16.msra.mxu0 0
        %2959 = vmatprep.subr.bf16.mxu0 0
        %2960 = vmatpush1.bf16.msra.mxu0 0
        %2961 = vmatprep.subr.bf16.mxu0 0
        %2962 = vmatpush1.bf16.msra.mxu0 0
        %2963 = vmatprep.subr.bf16.mxu0 0
        %2964 = vmatpush1.bf16.msra.mxu0 0
        %2965 = vmatprep.subr.bf16.mxu0 0
        %2966 = vmatpush1.bf16.msra.mxu0 0
        %2967 = vmatprep.subr.bf16.mxu0 0
        %2968 = vmatpush1.bf16.msra.mxu0 0
        %2969 = vmatprep.subr.bf16.mxu0 0
        %2970 = vmatpush1.bf16.msra.mxu0 0
        %2971 = vmatprep.subr.bf16.mxu0 0
        %2972 = vmatpush1.bf16.msra.mxu0 0
        %2973 = vmatprep.subr.bf16.mxu0 0
        %2974 = vmatpush1.bf16.msra.mxu0 0
        %2975 = vmatprep.subr.bf16.mxu0 0
        %2976 = vmatpush1.bf16.msra.mxu0 0
        %2977 = vmatprep.subr.bf16.mxu0 0
        %2978 = vmatpush1.bf16.msra.mxu0 0
        %2979 = vmatprep.subr.bf16.mxu0 0
        %2980 = vmatpush1.bf16.msra.mxu0 0
        %2981 = vmatprep.subr.bf16.mxu0 0
        %2982 = vmatpush1.bf16.msra.mxu0 0
        %2983 = vmatprep.subr.bf16.mxu0 0
        %2984 = vmatpush1.bf16.msra.mxu0 0
        %2985 = vmatprep.mubr.bf16.mxu0 0
        %2986 = vmatmul.mubr.bf16.gmra.mrb[0].mxu0 %v2903
        %v2987 = vpop.f32.mrb[0].mxu0
        %v2988 = vadd.f32 0.0, %v2987
        %v2989 = vpop.f32.mrb[0].mxu0
        %v2990 = vpop.f32.mrb[0].mxu0
        %v2991 = vadd.f32 0.0, %v2990
        %v2992 = vpop.f32.mrb[0].mxu0
        %2993 = vmatprep.mubr.bf16.mxu0 0
        %2994 = vmatmul.mubr.bf16.gmra.mrb[0].mxu0 %v2906
        %v2995 = vpop.f32.mrb[0].mxu0
        %v2996 = vadd.f32 0.0, %v2995
        %v2997 = vpop.f32.mrb[0].mxu0
        %v2998 = vpop.f32.mrb[0].mxu0
        %v2999 = vadd.f32 0.0, %v2998
        %v3000 = vpop.f32.mrb[0].mxu0
        %3001 = vmatprep.mubr.bf16.mxu0 0
        %3002 = vmatmul.mubr.bf16.gmra.mrb[0].mxu0 %v2909
        %v3003 = vpop.f32.mrb[0].mxu0
        %v3004 = vadd.f32 0.0, %v3003
        %v3005 = vpop.f32.mrb[0].mxu0
        %v3006 = vpop.f32.mrb[0].mxu0
        %v3007 = vadd.f32 0.0, %v3006
        %v3008 = vpop.f32.mrb[0].mxu0
        %3009 = vmatprep.mubr.bf16.mxu0 0
        %3010 = vmatmul.mubr.bf16.gmra.mrb[0].mxu0 %v2912
        %v3011 = vpop.f32.mrb[0].mxu0
        %v3012 = vadd.f32 0.0, %v3011
        %v3013 = vpop.f32.mrb[0].mxu0
        %v3014 = vpop.f32.mrb[0].mxu0
        %v3015 = vadd.f32 0.0, %v3014
        %v3016 = vpop.f32.mrb[0].mxu0
        %3017 = vmatprep.mubr.bf16.mxu0 0
        %3018 = vmatmul.mubr.bf16.gmra.mrb[0].mxu0 %v2915
        %v3019 = vpop.f32.mrb[0].mxu0
        %v3020 = vadd.f32 0.0, %v3019
        %v3021 = vpop.f32.mrb[0].mxu0
        %v3022 = vpop.f32.mrb[0].mxu0
        %v3023 = vadd.f32 0.0, %v3022
        %v3024 = vpop.f32.mrb[0].mxu0
        %3025 = vmatprep.mubr.bf16.mxu0 0
        %3026 = vmatmul.mubr.bf16.gmra.mrb[0].mxu0 %v2918
        %v3027 = vpop.f32.mrb[0].mxu0
        %v3028 = vadd.f32 0.0, %v3027
        %v3029 = vpop.f32.mrb[0].mxu0
        %v3030 = vpop.f32.mrb[0].mxu0
        %v3031 = vadd.f32 0.0, %v3030
        %v3032 = vpop.f32.mrb[0].mxu0
        %3033 = vmatprep.mubr.bf16.mxu0 0
        %3034 = vmatmul.mubr.bf16.gmra.mrb[0].mxu0 %v2921
        %v3035 = vpop.f32.mrb[0].mxu0
        %v3036 = vadd.f32 0.0, %v3035
        %v3037 = vpop.f32.mrb[0].mxu0
        %v3038 = vpop.f32.mrb[0].mxu0
        %v3039 = vadd.f32 0.0, %v3038
        %v3040 = vpop.f32.mrb[0].mxu0
        %3041 = vmatprep.mubr.bf16.mxu0 0
        %3042 = vmatmul.mubr.bf16.gmra.mrb[0].mxu0 %v2924
        %v3043 = vpop.f32.mrb[0].mxu0
        %v3044 = vadd.f32 0.0, %v3043
        %v3045 = vpop.f32.mrb[0].mxu0
        %v3046 = vpop.f32.mrb[0].mxu0
        %v3047 = vadd.f32 0.0, %v3046
        %v3048 = vpop.f32.mrb[0].mxu0
        %3049 = vmatprep.mubr.bf16.mxu0 0
        %3050 = vmatmul.mubr.bf16.gmra.mrb[0].mxu0 %v2927
        %v3051 = vpop.f32.mrb[0].mxu0
        %v3052 = vadd.f32 0.0, %v3051
        %v3053 = vpop.f32.mrb[0].mxu0
        %v3054 = vpop.f32.mrb[0].mxu0
        %v3055 = vadd.f32 0.0, %v3054
        %v3056 = vpop.f32.mrb[0].mxu0
        %3057 = vmatprep.mubr.bf16.mxu0 0
        %3058 = vmatmul.mubr.bf16.gmra.mrb[0].mxu0 %v2930
        %v3059 = vpop.f32.mrb[0].mxu0
        %v3060 = vadd.f32 0.0, %v3059
        %v3061 = vpop.f32.mrb[0].mxu0
        %v3062 = vpop.f32.mrb[0].mxu0
        %v3063 = vadd.f32 0.0, %v3062
        %v3064 = vpop.f32.mrb[0].mxu0
        %3065 = vmatprep.mubr.bf16.mxu0 0
        %3066 = vmatmul.mubr.bf16.gmra.mrb[0].mxu0 %v2933
        %v3067 = vpop.f32.mrb[0].mxu0
        %v3068 = vadd.f32 0.0, %v3067
        %v3069 = vpop.f32.mrb[0].mxu0
        %v3070 = vpop.f32.mrb[0].mxu0
        %v3071 = vadd.f32 0.0, %v3070
        %v3072 = vpop.f32.mrb[0].mxu0
        %3073 = vmatprep.mubr.bf16.mxu0 0
        %3074 = vmatmul.mubr.bf16.gmra.mrb[0].mxu0 %v2936
        %v3075 = vpop.f32.mrb[0].mxu0
        %v3076 = vadd.f32 0.0, %v3075
        %v3077 = vpop.f32.mrb[0].mxu0
        %v3078 = vpop.f32.mrb[0].mxu0
        %v3079 = vadd.f32 0.0, %v3078
        %v3080 = vpop.f32.mrb[0].mxu0
        %3081 = vmatprep.mubr.bf16.mxu0 0
        %3082 = vmatmul.mubr.bf16.gmra.mrb[0].mxu0 %v2939
        %v3083 = vpop.f32.mrb[0].mxu0
        %v3084 = vadd.f32 0.0, %v3083
        %v3085 = vpop.f32.mrb[0].mxu0
        %v3086 = vpop.f32.mrb[0].mxu0
        %v3087 = vadd.f32 0.0, %v3086
        %v3088 = vpop.f32.mrb[0].mxu0
        %3089 = vmatprep.mubr.bf16.mxu0 0
        %3090 = vmatmul.mubr.bf16.gmra.mrb[0].mxu0 %v2942
        %v3091 = vpop.f32.mrb[0].mxu0
        %v3092 = vadd.f32 0.0, %v3091
        %v3093 = vpop.f32.mrb[0].mxu0
        %v3094 = vpop.f32.mrb[0].mxu0
        %v3095 = vadd.f32 0.0, %v3094
        %v3096 = vpop.f32.mrb[0].mxu0
        %3097 = vmatprep.mubr.bf16.mxu0 0
        %3098 = vmatmul.mubr.bf16.gmra.mrb[0].mxu0 %v2945
        %v3099 = vpop.f32.mrb[0].mxu0
        %v3100 = vadd.f32 0.0, %v3099
        %v3101 = vpop.f32.mrb[0].mxu0
        %v3102 = vpop.f32.mrb[0].mxu0
        %v3103 = vadd.f32 0.0, %v3102
        %v3104 = vpop.f32.mrb[0].mxu0
        %3105 = vmatprep.mubr.bf16.mxu0 0
        %3106 = vmatmul.mubr.bf16.gmra.mrb[0].mxu0 %v2948
        %v3107 = vpop.f32.mrb[0].mxu0
        %v3108 = vadd.f32 0.0, %v3107
        %v3109 = vpop.f32.mrb[0].mxu0
        %v3110 = vpop.f32.mrb[0].mxu0
        %v3111 = vadd.f32 0.0, %v3110
        %v3112 = vpop.f32.mrb[0].mxu0
        %3113 = vdwg.mxu0
        %v3114 = vadd.f32 %v2788, %v2988
        %v3115 = vadd.f32 %v2789, %v2991
        %v3116 = vadd.f32 %v2790, %v2996
        %v3117 = vadd.f32 %v2791, %v2999
        %v3118 = vadd.f32 %v2792, %v3004
        %v3119 = vadd.f32 %v2793, %v3007
        %v3120 = vadd.f32 %v2794, %v3012
        %v3121 = vadd.f32 %v2795, %v3015
        %v3122 = vadd.f32 %v2796, %v3020
        %v3123 = vadd.f32 %v2797, %v3023
        %v3124 = vadd.f32 %v2798, %v3028
        %v3125 = vadd.f32 %v2799, %v3031
        %v3126 = vadd.f32 %v2800, %v3036
        %v3127 = vadd.f32 %v2801, %v3039
        %v3128 = vadd.f32 %v2802, %v3044
        %v3129 = vadd.f32 %v2803, %v3047
        %v3130 = vadd.f32 %v2804, %v3052
        %v3131 = vadd.f32 %v2805, %v3055
        %v3132 = vadd.f32 %v2806, %v3060
        %v3133 = vadd.f32 %v2807, %v3063
        %v3134 = vadd.f32 %v2808, %v3068
        %v3135 = vadd.f32 %v2809, %v3071
        %v3136 = vadd.f32 %v2810, %v3076
        %v3137 = vadd.f32 %v2811, %v3079
        %v3138 = vadd.f32 %v2812, %v3084
        %v3139 = vadd.f32 %v2813, %v3087
        %v3140 = vadd.f32 %v2814, %v3092
        %v3141 = vadd.f32 %v2815, %v3095
        %v3142 = vadd.f32 %v2816, %v3100
        %v3143 = vadd.f32 %v2817, %v3103
        %v3144 = vadd.f32 %v2818, %v3108
        %v3145 = vadd.f32 %v2819, %v3111
        %v3146 = vld [vmem:[%s2125 + $0x8] sm:$0xf]
        %v3147 = vld [vmem:[%s2125 + $0xc] sm:$0xf]
        %v3148 = vld [vmem:[%s2125 + $0x10] sm:$0x1]
        %v3149 = vld [vmem:[%s2125 + $0x1c] sm:$0xf]
        %v3150 = vld [vmem:[%s2125 + $0x20] sm:$0xf]
        %v3151 = vld [vmem:[%s2125 + $0x24] sm:$0x1]
        %v3152 = vld [vmem:[%s2125 + $0x30] sm:$0xf]
        %v3153 = vld [vmem:[%s2125 + $0x34] sm:$0xf]
        %v3154 = vld [vmem:[%s2125 + $0x38] sm:$0x1]
        %v3155 = vld [vmem:[%s2125 + $0x44] sm:$0xf]
        %v3156 = vld [vmem:[%s2125 + $0x48] sm:$0xf]
        %v3157 = vld [vmem:[%s2125 + $0x4c] sm:$0x1]
        %v3158 = vld [vmem:[%s2125 + $0x58] sm:$0xf]
        %v3159 = vld [vmem:[%s2125 + $0x5c] sm:$0xf]
        %v3160 = vld [vmem:[%s2125 + $0x60] sm:$0x1]
        %v3161 = vld [vmem:[%s2125 + $0x6c] sm:$0xf]
        %v3162 = vld [vmem:[%s2125 + $0x70] sm:$0xf]
        %v3163 = vld [vmem:[%s2125 + $0x74] sm:$0x1]
        %v3164 = vld [vmem:[%s2125 + $0x80] sm:$0xf]
        %v3165 = vld [vmem:[%s2125 + $0x84] sm:$0xf]
        %v3166 = vld [vmem:[%s2125 + $0x88] sm:$0x1]
        %v3167 = vld [vmem:[%s2125 + $0x94] sm:$0xf]
        %v3168 = vld [vmem:[%s2125 + $0x98] sm:$0xf]
        %v3169 = vld [vmem:[%s2125 + $0x9c] sm:$0x1]
        %v3170 = vld [vmem:[%s2125 + $0xa8] sm:$0xf]
        %v3171 = vld [vmem:[%s2125 + $0xac] sm:$0xf]
        %v3172 = vld [vmem:[%s2125 + $0xb0] sm:$0x1]
        %v3173 = vld [vmem:[%s2125 + $0xbc] sm:$0xf]
        %v3174 = vld [vmem:[%s2125 + $0xc0] sm:$0xf]
        %v3175 = vld [vmem:[%s2125 + $0xc4] sm:$0x1]
        %v3176 = vld [vmem:[%s2125 + $0xd0] sm:$0xf]
        %v3177 = vld [vmem:[%s2125 + $0xd4] sm:$0xf]
        %v3178 = vld [vmem:[%s2125 + $0xd8] sm:$0x1]
        %v3179 = vld [vmem:[%s2125 + $0xe4] sm:$0xf]
        %v3180 = vld [vmem:[%s2125 + $0xe8] sm:$0xf]
        %v3181 = vld [vmem:[%s2125 + $0xec] sm:$0x1]
        %v3182 = vld [vmem:[%s2125 + $0xf8] sm:$0xf]
        %v3183 = vld [vmem:[%s2125 + $0xfc] sm:$0xf]
        %v3184 = vld [vmem:[%s2125 + $0x100] sm:$0x1]
        %v3185 = vld [vmem:[%s2125 + $0x10c] sm:$0xf]
        %v3186 = vld [vmem:[%s2125 + $0x110] sm:$0xf]
        %v3187 = vld [vmem:[%s2125 + $0x114] sm:$0x1]
        %v3188 = vld [vmem:[%s2125 + $0x120] sm:$0xf]
        %v3189 = vld [vmem:[%s2125 + $0x124] sm:$0xf]
        %v3190 = vld [vmem:[%s2125 + $0x128] sm:$0x1]
        %v3191 = vld [vmem:[%s2125 + $0x134] sm:$0xf]
        %v3192 = vld [vmem:[%s2125 + $0x138] sm:$0xf]
        %v3193 = vld [vmem:[%s2125 + $0x13c] sm:$0x1]
        %v3195 = vshrl.u32 %v3146, 16
        %v3197 = vrot.slane %v3195, 4
        %v3198 = vshll.u32 %v3146, 16
        %v3200 = vrot.slane %v3198, 5
        %v3201 = vor.u32 %v3197, %v3200
        %v3202 = vrot.slane %v3201, 4
        %v3204 = vshll.u32 %v3147, 16
        %v3206 = vrot.slane %v3204, 5
        %v3207 = vsel %vm1443, %v3202, %v3206
        %v3208 = vshrl.u32 %v3147, 16
        %v3210 = vrot.slane %v3208, 4
        %v3211 = vor.u32 %v3210, %v3206
        %v3212 = vrot.slane %v3211, 4
        %v3214 = vshll.u32 %v3148, 16
        %v3216 = vrot.slane %v3214, 5
        %v3217 = vsel %vm1443, %v3212, %v3216
        %v3219 = vshrl.u32 %v3149, 16
        %v3221 = vrot.slane %v3219, 4
        %v3222 = vshll.u32 %v3149, 16
        %v3224 = vrot.slane %v3222, 5
        %v3225 = vor.u32 %v3221, %v3224
        %v3226 = vrot.slane %v3225, 4
        %v3228 = vshll.u32 %v3150, 16
        %v3230 = vrot.slane %v3228, 5
        %v3231 = vsel %vm1443, %v3226, %v3230
        %v3232 = vshrl.u32 %v3150, 16
        %v3234 = vrot.slane %v3232, 4
        %v3235 = vor.u32 %v3234, %v3230
        %v3236 = vrot.slane %v3235, 4
        %v3238 = vshll.u32 %v3151, 16
        %v3240 = vrot.slane %v3238, 5
        %v3241 = vsel %vm1443, %v3236, %v3240
        %v3243 = vshrl.u32 %v3152, 16
        %v3245 = vrot.slane %v3243, 4
        %v3246 = vshll.u32 %v3152, 16
        %v3248 = vrot.slane %v3246, 5
        %v3249 = vor.u32 %v3245, %v3248
        %v3250 = vrot.slane %v3249, 4
        %v3252 = vshll.u32 %v3153, 16
        %v3254 = vrot.slane %v3252, 5
        %v3255 = vsel %vm1443, %v3250, %v3254
        %v3256 = vshrl.u32 %v3153, 16
        %v3258 = vrot.slane %v3256, 4
        %v3259 = vor.u32 %v3258, %v3254
        %v3260 = vrot.slane %v3259, 4
        %v3262 = vshll.u32 %v3154, 16
        %v3264 = vrot.slane %v3262, 5
        %v3265 = vsel %vm1443, %v3260, %v3264
        %v3267 = vshrl.u32 %v3155, 16
        %v3269 = vrot.slane %v3267, 4
        %v3270 = vshll.u32 %v3155, 16
        %v3272 = vrot.slane %v3270, 5
        %v3273 = vor.u32 %v3269, %v3272
        %v3274 = vrot.slane %v3273, 4
        %v3276 = vshll.u32 %v3156, 16
        %v3278 = vrot.slane %v3276, 5
        %v3279 = vsel %vm1443, %v3274, %v3278
        %v3280 = vshrl.u32 %v3156, 16
        %v3282 = vrot.slane %v3280, 4
        %v3283 = vor.u32 %v3282, %v3278
        %v3284 = vrot.slane %v3283, 4
        %v3286 = vshll.u32 %v3157, 16
        %v3288 = vrot.slane %v3286, 5
        %v3289 = vsel %vm1443, %v3284, %v3288
        %v3291 = vshrl.u32 %v3158, 16
        %v3293 = vrot.slane %v3291, 4
        %v3294 = vshll.u32 %v3158, 16
        %v3296 = vrot.slane %v3294, 5
        %v3297 = vor.u32 %v3293, %v3296
        %v3298 = vrot.slane %v3297, 4
        %v3300 = vshll.u32 %v3159, 16
        %v3302 = vrot.slane %v3300, 5
        %v3303 = vsel %vm1443, %v3298, %v3302
        %v3304 = vshrl.u32 %v3159, 16
        %v3306 = vrot.slane %v3304, 4
        %v3307 = vor.u32 %v3306, %v3302
        %v3308 = vrot.slane %v3307, 4
        %v3310 = vshll.u32 %v3160, 16
        %v3312 = vrot.slane %v3310, 5
        %v3313 = vsel %vm1443, %v3308, %v3312
        %v3315 = vshrl.u32 %v3161, 16
        %v3317 = vrot.slane %v3315, 4
        %v3318 = vshll.u32 %v3161, 16
        %v3320 = vrot.slane %v3318, 5
        %v3321 = vor.u32 %v3317, %v3320
        %v3322 = vrot.slane %v3321, 4
        %v3324 = vshll.u32 %v3162, 16
        %v3326 = vrot.slane %v3324, 5
        %v3327 = vsel %vm1443, %v3322, %v3326
        %v3328 = vshrl.u32 %v3162, 16
        %v3330 = vrot.slane %v3328, 4
        %v3331 = vor.u32 %v3330, %v3326
        %v3332 = vrot.slane %v3331, 4
        %v3334 = vshll.u32 %v3163, 16
        %v3336 = vrot.slane %v3334, 5
        %v3337 = vsel %vm1443, %v3332, %v3336
        %v3339 = vshrl.u32 %v3164, 16
        %v3341 = vrot.slane %v3339, 4
        %v3342 = vshll.u32 %v3164, 16
        %v3344 = vrot.slane %v3342, 5
        %v3345 = vor.u32 %v3341, %v3344
        %v3346 = vrot.slane %v3345, 4
        %v3348 = vshll.u32 %v3165, 16
        %v3350 = vrot.slane %v3348, 5
        %v3351 = vsel %vm1443, %v3346, %v3350
        %v3352 = vshrl.u32 %v3165, 16
        %v3354 = vrot.slane %v3352, 4
        %v3355 = vor.u32 %v3354, %v3350
        %v3356 = vrot.slane %v3355, 4
        %v3358 = vshll.u32 %v3166, 16
        %v3360 = vrot.slane %v3358, 5
        %v3361 = vsel %vm1443, %v3356, %v3360
        %v3363 = vshrl.u32 %v3167, 16
        %v3365 = vrot.slane %v3363, 4
        %v3366 = vshll.u32 %v3167, 16
        %v3368 = vrot.slane %v3366, 5
        %v3369 = vor.u32 %v3365, %v3368
        %v3370 = vrot.slane %v3369, 4
        %v3372 = vshll.u32 %v3168, 16
        %v3374 = vrot.slane %v3372, 5
        %v3375 = vsel %vm1443, %v3370, %v3374
        %v3376 = vshrl.u32 %v3168, 16
        %v3378 = vrot.slane %v3376, 4
        %v3379 = vor.u32 %v3378, %v3374
        %v3380 = vrot.slane %v3379, 4
        %v3382 = vshll.u32 %v3169, 16
        %v3384 = vrot.slane %v3382, 5
        %v3385 = vsel %vm1443, %v3380, %v3384
        %v3387 = vshrl.u32 %v3170, 16
        %v3389 = vrot.slane %v3387, 4
        %v3390 = vshll.u32 %v3170, 16
        %v3392 = vrot.slane %v3390, 5
        %v3393 = vor.u32 %v3389, %v3392
        %v3394 = vrot.slane %v3393, 4
        %v3396 = vshll.u32 %v3171, 16
        %v3398 = vrot.slane %v3396, 5
        %v3399 = vsel %vm1443, %v3394, %v3398
        %v3400 = vshrl.u32 %v3171, 16
        %v3402 = vrot.slane %v3400, 4
        %v3403 = vor.u32 %v3402, %v3398
        %v3404 = vrot.slane %v3403, 4
        %v3406 = vshll.u32 %v3172, 16
        %v3408 = vrot.slane %v3406, 5
        %v3409 = vsel %vm1443, %v3404, %v3408
        %v3411 = vshrl.u32 %v3173, 16
        %v3413 = vrot.slane %v3411, 4
        %v3414 = vshll.u32 %v3173, 16
        %v3416 = vrot.slane %v3414, 5
        %v3417 = vor.u32 %v3413, %v3416
        %v3418 = vrot.slane %v3417, 4
        %v3420 = vshll.u32 %v3174, 16
        %v3422 = vrot.slane %v3420, 5
        %v3423 = vsel %vm1443, %v3418, %v3422
        %v3424 = vshrl.u32 %v3174, 16
        %v3426 = vrot.slane %v3424, 4
        %v3427 = vor.u32 %v3426, %v3422
        %v3428 = vrot.slane %v3427, 4
        %v3430 = vshll.u32 %v3175, 16
        %v3432 = vrot.slane %v3430, 5
        %v3433 = vsel %vm1443, %v3428, %v3432
        %v3435 = vshrl.u32 %v3176, 16
        %v3437 = vrot.slane %v3435, 4
        %v3438 = vshll.u32 %v3176, 16
        %v3440 = vrot.slane %v3438, 5
        %v3441 = vor.u32 %v3437, %v3440
        %v3442 = vrot.slane %v3441, 4
        %v3444 = vshll.u32 %v3177, 16
        %v3446 = vrot.slane %v3444, 5
        %v3447 = vsel %vm1443, %v3442, %v3446
        %v3448 = vshrl.u32 %v3177, 16
        %v3450 = vrot.slane %v3448, 4
        %v3451 = vor.u32 %v3450, %v3446
        %v3452 = vrot.slane %v3451, 4
        %v3454 = vshll.u32 %v3178, 16
        %v3456 = vrot.slane %v3454, 5
        %v3457 = vsel %vm1443, %v3452, %v3456
        %v3459 = vshrl.u32 %v3179, 16
        %v3461 = vrot.slane %v3459, 4
        %v3462 = vshll.u32 %v3179, 16
        %v3464 = vrot.slane %v3462, 5
        %v3465 = vor.u32 %v3461, %v3464
        %v3466 = vrot.slane %v3465, 4
        %v3468 = vshll.u32 %v3180, 16
        %v3470 = vrot.slane %v3468, 5
        %v3471 = vsel %vm1443, %v3466, %v3470
        %v3472 = vshrl.u32 %v3180, 16
        %v3474 = vrot.slane %v3472, 4
        %v3475 = vor.u32 %v3474, %v3470
        %v3476 = vrot.slane %v3475, 4
        %v3478 = vshll.u32 %v3181, 16
        %v3480 = vrot.slane %v3478, 5
        %v3481 = vsel %vm1443, %v3476, %v3480
        %v3483 = vshrl.u32 %v3182, 16
        %v3485 = vrot.slane %v3483, 4
        %v3486 = vshll.u32 %v3182, 16
        %v3488 = vrot.slane %v3486, 5
        %v3489 = vor.u32 %v3485, %v3488
        %v3490 = vrot.slane %v3489, 4
        %v3492 = vshll.u32 %v3183, 16
        %v3494 = vrot.slane %v3492, 5
        %v3495 = vsel %vm1443, %v3490, %v3494
        %v3496 = vshrl.u32 %v3183, 16
        %v3498 = vrot.slane %v3496, 4
        %v3499 = vor.u32 %v3498, %v3494
        %v3500 = vrot.slane %v3499, 4
        %v3502 = vshll.u32 %v3184, 16
        %v3504 = vrot.slane %v3502, 5
        %v3505 = vsel %vm1443, %v3500, %v3504
        %v3507 = vshrl.u32 %v3185, 16
        %v3509 = vrot.slane %v3507, 4
        %v3510 = vshll.u32 %v3185, 16
        %v3512 = vrot.slane %v3510, 5
        %v3513 = vor.u32 %v3509, %v3512
        %v3514 = vrot.slane %v3513, 4
        %v3516 = vshll.u32 %v3186, 16
        %v3518 = vrot.slane %v3516, 5
        %v3519 = vsel %vm1443, %v3514, %v3518
        %v3520 = vshrl.u32 %v3186, 16
        %v3522 = vrot.slane %v3520, 4
        %v3523 = vor.u32 %v3522, %v3518
        %v3524 = vrot.slane %v3523, 4
        %v3526 = vshll.u32 %v3187, 16
        %v3528 = vrot.slane %v3526, 5
        %v3529 = vsel %vm1443, %v3524, %v3528
        %v3531 = vshrl.u32 %v3188, 16
        %v3533 = vrot.slane %v3531, 4
        %v3534 = vshll.u32 %v3188, 16
        %v3536 = vrot.slane %v3534, 5
        %v3537 = vor.u32 %v3533, %v3536
        %v3538 = vrot.slane %v3537, 4
        %v3540 = vshll.u32 %v3189, 16
        %v3542 = vrot.slane %v3540, 5
        %v3543 = vsel %vm1443, %v3538, %v3542
        %v3544 = vshrl.u32 %v3189, 16
        %v3546 = vrot.slane %v3544, 4
        %v3547 = vor.u32 %v3546, %v3542
        %v3548 = vrot.slane %v3547, 4
        %v3550 = vshll.u32 %v3190, 16
        %v3552 = vrot.slane %v3550, 5
        %v3553 = vsel %vm1443, %v3548, %v3552
        %v3555 = vshrl.u32 %v3191, 16
        %v3557 = vrot.slane %v3555, 4
        %v3558 = vshll.u32 %v3191, 16
        %v3560 = vrot.slane %v3558, 5
        %v3561 = vor.u32 %v3557, %v3560
        %v3562 = vrot.slane %v3561, 4
        %v3564 = vshll.u32 %v3192, 16
        %v3566 = vrot.slane %v3564, 5
        %v3567 = vsel %vm1443, %v3562, %v3566
        %v3568 = vshrl.u32 %v3192, 16
        %v3570 = vrot.slane %v3568, 4
        %v3571 = vor.u32 %v3570, %v3566
        %v3572 = vrot.slane %v3571, 4
        %v3574 = vshll.u32 %v3193, 16
        %v3576 = vrot.slane %v3574, 5
        %v3577 = vsel %vm1443, %v3572, %v3576
        %s3578 = scalar_lea.vmem %s219, 10
        %v3579 = vld [vmem:[%s3578] sm:$0x3]
        %v3580 = vunpack.c.l.b16 %v3207
        %v3581 = vunpack.c.l.b16 %v3217
        %v3582 = vunpack.c.l.b16 %v3231
        %v3583 = vunpack.c.l.b16 %v3241
        %v3584 = vunpack.c.l.b16 %v3255
        %v3585 = vunpack.c.l.b16 %v3265
        %v3586 = vunpack.c.l.b16 %v3279
        %v3587 = vunpack.c.l.b16 %v3289
        %v3588 = vunpack.c.l.b16 %v3303
        %v3589 = vunpack.c.l.b16 %v3313
        %v3590 = vunpack.c.l.b16 %v3327
        %v3591 = vunpack.c.l.b16 %v3337
        %v3592 = vunpack.c.l.b16 %v3351
        %v3593 = vunpack.c.l.b16 %v3361
        %v3594 = vunpack.c.l.b16 %v3375
        %v3595 = vunpack.c.l.b16 %v3385
        %v3596 = vunpack.c.l.b16 %v3399
        %v3597 = vunpack.c.l.b16 %v3409
        %v3598 = vunpack.c.l.b16 %v3423
        %v3599 = vunpack.c.l.b16 %v3433
        %v3600 = vunpack.c.l.b16 %v3447
        %v3601 = vunpack.c.l.b16 %v3457
        %v3602 = vunpack.c.l.b16 %v3471
        %v3603 = vunpack.c.l.b16 %v3481
        %v3604 = vunpack.c.l.b16 %v3495
        %v3605 = vunpack.c.l.b16 %v3505
        %v3606 = vunpack.c.l.b16 %v3519
        %v3607 = vunpack.c.l.b16 %v3529
        %v3608 = vunpack.c.l.b16 %v3543
        %v3609 = vunpack.c.l.b16 %v3553
        %v3610 = vunpack.c.l.b16 %v3567
        %v3611 = vunpack.c.l.b16 %v3577
        %v3612 = vpack.c.b16 %v3581, %v3580
        %v3613 = vpack.c.b16 %v3583, %v3582
        %v3614 = vpack.c.b16 %v3585, %v3584
        %v3615 = vpack.c.b16 %v3587, %v3586
        %v3616 = vpack.c.b16 %v3589, %v3588
        %v3617 = vpack.c.b16 %v3591, %v3590
        %v3618 = vpack.c.b16 %v3593, %v3592
        %v3619 = vpack.c.b16 %v3595, %v3594
        %v3620 = vpack.c.b16 %v3597, %v3596
        %v3621 = vpack.c.b16 %v3599, %v3598
        %v3622 = vpack.c.b16 %v3601, %v3600
        %v3623 = vpack.c.b16 %v3603, %v3602
        %v3624 = vpack.c.b16 %v3605, %v3604
        %v3625 = vpack.c.b16 %v3607, %v3606
        %v3626 = vpack.c.b16 %v3609, %v3608
        %v3627 = vpack.c.b16 %v3611, %v3610
        %v3629 = vsel %vm916, %v3612, 0
        %v3632 = vsel %vm916, %v3613, 0
        %v3635 = vsel %vm916, %v3614, 0
        %v3638 = vsel %vm916, %v3615, 0
        %v3641 = vsel %vm916, %v3616, 0
        %v3644 = vsel %vm916, %v3617, 0
        %v3647 = vsel %vm916, %v3618, 0
        %v3650 = vsel %vm916, %v3619, 0
        %v3653 = vsel %vm916, %v3620, 0
        %v3656 = vsel %vm916, %v3621, 0
        %v3659 = vsel %vm916, %v3622, 0
        %v3662 = vsel %vm916, %v3623, 0
        %v3665 = vsel %vm916, %v3624, 0
        %v3668 = vsel %vm916, %v3625, 0
        %v3671 = vsel %vm916, %v3626, 0
        %v3674 = vsel %vm916, %v3627, 0
        %v3677 = vand.u32 %v3579, %v968
        %3679 = vmatprep.subr.bf16.mxu0 0
        %3680 = vmatpush1.bf16.msra.mxu0 %v3677
        %3681 = vmatprep.subr.bf16.mxu0 0
        %3682 = vmatpush1.bf16.msra.mxu0 0
        %3683 = vmatprep.subr.bf16.mxu0 0
        %3684 = vmatpush1.bf16.msra.mxu0 0
        %3685 = vmatprep.subr.bf16.mxu0 0
        %3686 = vmatpush1.bf16.msra.mxu0 0
        %3687 = vmatprep.subr.bf16.mxu0 0
        %3688 = vmatpush1.bf16.msra.mxu0 0
        %3689 = vmatprep.subr.bf16.mxu0 0
        %3690 = vmatpush1.bf16.msra.mxu0 0
        %3691 = vmatprep.subr.bf16.mxu0 0
        %3692 = vmatpush1.bf16.msra.mxu0 0
        %3693 = vmatprep.subr.bf16.mxu0 0
        %3694 = vmatpush1.bf16.msra.mxu0 0
        %3695 = vmatprep.subr.bf16.mxu0 0
        %3696 = vmatpush1.bf16.msra.mxu0 0
        %3697 = vmatprep.subr.bf16.mxu0 0
        %3698 = vmatpush1.bf16.msra.mxu0 0
        %3699 = vmatprep.subr.bf16.mxu0 0
        %3700 = vmatpush1.bf16.msra.mxu0 0
        %3701 = vmatprep.subr.bf16.mxu0 0
        %3702 = vmatpush1.bf16.msra.mxu0 0
        %3703 = vmatprep.subr.bf16.mxu0 0
        %3704 = vmatpush1.bf16.msra.mxu0 0
        %3705 = vmatprep.subr.bf16.mxu0 0
        %3706 = vmatpush1.bf16.msra.mxu0 0
        %3707 = vmatprep.subr.bf16.mxu0 0
        %3708 = vmatpush1.bf16.msra.mxu0 0
        %3709 = vmatprep.subr.bf16.mxu0 0
        %3710 = vmatpush1.bf16.msra.mxu0 0
        %3711 = vmatprep.mubr.bf16.mxu0 0
        %3712 = vmatmul.mubr.bf16.gmra.mrb[0].mxu0 %v3629
        %v3713 = vpop.f32.mrb[0].mxu0
        %v3714 = vadd.f32 0.0, %v3713
        %v3715 = vpop.f32.mrb[0].mxu0
        %v3716 = vpop.f32.mrb[0].mxu0
        %v3717 = vadd.f32 0.0, %v3716
        %v3718 = vpop.f32.mrb[0].mxu0
        %3719 = vmatprep.mubr.bf16.mxu0 0
        %3720 = vmatmul.mubr.bf16.gmra.mrb[0].mxu0 %v3632
        %v3721 = vpop.f32.mrb[0].mxu0
        %v3722 = vadd.f32 0.0, %v3721
        %v3723 = vpop.f32.mrb[0].mxu0
        %v3724 = vpop.f32.mrb[0].mxu0
        %v3725 = vadd.f32 0.0, %v3724
        %v3726 = vpop.f32.mrb[0].mxu0
        %3727 = vmatprep.mubr.bf16.mxu0 0
        %3728 = vmatmul.mubr.bf16.gmra.mrb[0].mxu0 %v3635
        %v3729 = vpop.f32.mrb[0].mxu0
        %v3730 = vadd.f32 0.0, %v3729
        %v3731 = vpop.f32.mrb[0].mxu0
        %v3732 = vpop.f32.mrb[0].mxu0
        %v3733 = vadd.f32 0.0, %v3732
        %v3734 = vpop.f32.mrb[0].mxu0
        %3735 = vmatprep.mubr.bf16.mxu0 0
        %3736 = vmatmul.mubr.bf16.gmra.mrb[0].mxu0 %v3638
        %v3737 = vpop.f32.mrb[0].mxu0
        %v3738 = vadd.f32 0.0, %v3737
        %v3739 = vpop.f32.mrb[0].mxu0
        %v3740 = vpop.f32.mrb[0].mxu0
        %v3741 = vadd.f32 0.0, %v3740
        %v3742 = vpop.f32.mrb[0].mxu0
        %3743 = vmatprep.mubr.bf16.mxu0 0
        %3744 = vmatmul.mubr.bf16.gmra.mrb[0].mxu0 %v3641
        %v3745 = vpop.f32.mrb[0].mxu0
        %v3746 = vadd.f32 0.0, %v3745
        %v3747 = vpop.f32.mrb[0].mxu0
        %v3748 = vpop.f32.mrb[0].mxu0
        %v3749 = vadd.f32 0.0, %v3748
        %v3750 = vpop.f32.mrb[0].mxu0
        %3751 = vmatprep.mubr.bf16.mxu0 0
        %3752 = vmatmul.mubr.bf16.gmra.mrb[0].mxu0 %v3644
        %v3753 = vpop.f32.mrb[0].mxu0
        %v3754 = vadd.f32 0.0, %v3753
        %v3755 = vpop.f32.mrb[0].mxu0
        %v3756 = vpop.f32.mrb[0].mxu0
        %v3757 = vadd.f32 0.0, %v3756
        %v3758 = vpop.f32.mrb[0].mxu0
        %3759 = vmatprep.mubr.bf16.mxu0 0
        %3760 = vmatmul.mubr.bf16.gmra.mrb[0].mxu0 %v3647
        %v3761 = vpop.f32.mrb[0].mxu0
        %v3762 = vadd.f32 0.0, %v3761
        %v3763 = vpop.f32.mrb[0].mxu0
        %v3764 = vpop.f32.mrb[0].mxu0
        %v3765 = vadd.f32 0.0, %v3764
        %v3766 = vpop.f32.mrb[0].mxu0
        %3767 = vmatprep.mubr.bf16.mxu0 0
        %3768 = vmatmul.mubr.bf16.gmra.mrb[0].mxu0 %v3650
        %v3769 = vpop.f32.mrb[0].mxu0
        %v3770 = vadd.f32 0.0, %v3769
        %v3771 = vpop.f32.mrb[0].mxu0
        %v3772 = vpop.f32.mrb[0].mxu0
        %v3773 = vadd.f32 0.0, %v3772
        %v3774 = vpop.f32.mrb[0].mxu0
        %3775 = vmatprep.mubr.bf16.mxu0 0
        %3776 = vmatmul.mubr.bf16.gmra.mrb[0].mxu0 %v3653
        %v3777 = vpop.f32.mrb[0].mxu0
        %v3778 = vadd.f32 0.0, %v3777
        %v3779 = vpop.f32.mrb[0].mxu0
        %v3780 = vpop.f32.mrb[0].mxu0
        %v3781 = vadd.f32 0.0, %v3780
        %v3782 = vpop.f32.mrb[0].mxu0
        %3783 = vmatprep.mubr.bf16.mxu0 0
        %3784 = vmatmul.mubr.bf16.gmra.mrb[0].mxu0 %v3656
        %v3785 = vpop.f32.mrb[0].mxu0
        %v3786 = vadd.f32 0.0, %v3785
        %v3787 = vpop.f32.mrb[0].mxu0
        %v3788 = vpop.f32.mrb[0].mxu0
        %v3789 = vadd.f32 0.0, %v3788
        %v3790 = vpop.f32.mrb[0].mxu0
        %3791 = vmatprep.mubr.bf16.mxu0 0
        %3792 = vmatmul.mubr.bf16.gmra.mrb[0].mxu0 %v3659
        %v3793 = vpop.f32.mrb[0].mxu0
        %v3794 = vadd.f32 0.0, %v3793
        %v3795 = vpop.f32.mrb[0].mxu0
        %v3796 = vpop.f32.mrb[0].mxu0
        %v3797 = vadd.f32 0.0, %v3796
        %v3798 = vpop.f32.mrb[0].mxu0
        %3799 = vmatprep.mubr.bf16.mxu0 0
        %3800 = vmatmul.mubr.bf16.gmra.mrb[0].mxu0 %v3662
        %v3801 = vpop.f32.mrb[0].mxu0
        %v3802 = vadd.f32 0.0, %v3801
        %v3803 = vpop.f32.mrb[0].mxu0
        %v3804 = vpop.f32.mrb[0].mxu0
        %v3805 = vadd.f32 0.0, %v3804
        %v3806 = vpop.f32.mrb[0].mxu0
        %3807 = vmatprep.mubr.bf16.mxu0 0
        %3808 = vmatmul.mubr.bf16.gmra.mrb[0].mxu0 %v3665
        %v3809 = vpop.f32.mrb[0].mxu0
        %v3810 = vadd.f32 0.0, %v3809
        %v3811 = vpop.f32.mrb[0].mxu0
        %v3812 = vpop.f32.mrb[0].mxu0
        %v3813 = vadd.f32 0.0, %v3812
        %v3814 = vpop.f32.mrb[0].mxu0
        %3815 = vmatprep.mubr.bf16.mxu0 0
        %3816 = vmatmul.mubr.bf16.gmra.mrb[0].mxu0 %v3668
        %v3817 = vpop.f32.mrb[0].mxu0
        %v3818 = vadd.f32 0.0, %v3817
        %v3819 = vpop.f32.mrb[0].mxu0
        %v3820 = vpop.f32.mrb[0].mxu0
        %v3821 = vadd.f32 0.0, %v3820
        %v3822 = vpop.f32.mrb[0].mxu0
        %3823 = vmatprep.mubr.bf16.mxu0 0
        %3824 = vmatmul.mubr.bf16.gmra.mrb[0].mxu0 %v3671
        %v3825 = vpop.f32.mrb[0].mxu0
        %v3826 = vadd.f32 0.0, %v3825
        %v3827 = vpop.f32.mrb[0].mxu0
        %v3828 = vpop.f32.mrb[0].mxu0
        %v3829 = vadd.f32 0.0, %v3828
        %v3830 = vpop.f32.mrb[0].mxu0
        %3831 = vmatprep.mubr.bf16.mxu0 0
        %3832 = vmatmul.mubr.bf16.gmra.mrb[0].mxu0 %v3674
        %v3833 = vpop.f32.mrb[0].mxu0
        %v3834 = vadd.f32 0.0, %v3833
        %v3835 = vpop.f32.mrb[0].mxu0
        %v3836 = vpop.f32.mrb[0].mxu0
        %v3837 = vadd.f32 0.0, %v3836
        %v3838 = vpop.f32.mrb[0].mxu0
        %3839 = vdwg.mxu0
        %v3840 = vadd.f32 %v3114, %v3714
        %v3841 = vadd.f32 %v3115, %v3717
        %v3842 = vadd.f32 %v3116, %v3722
        %v3843 = vadd.f32 %v3117, %v3725
        %v3844 = vadd.f32 %v3118, %v3730
        %v3845 = vadd.f32 %v3119, %v3733
        %v3846 = vadd.f32 %v3120, %v3738
        %v3847 = vadd.f32 %v3121, %v3741
        %v3848 = vadd.f32 %v3122, %v3746
        %v3849 = vadd.f32 %v3123, %v3749
        %v3850 = vadd.f32 %v3124, %v3754
        %v3851 = vadd.f32 %v3125, %v3757
        %v3852 = vadd.f32 %v3126, %v3762
        %v3853 = vadd.f32 %v3127, %v3765
        %v3854 = vadd.f32 %v3128, %v3770
        %v3855 = vadd.f32 %v3129, %v3773
        %v3856 = vadd.f32 %v3130, %v3778
        %v3857 = vadd.f32 %v3131, %v3781
        %v3858 = vadd.f32 %v3132, %v3786
        %v3859 = vadd.f32 %v3133, %v3789
        %v3860 = vadd.f32 %v3134, %v3794
        %v3861 = vadd.f32 %v3135, %v3797
        %v3862 = vadd.f32 %v3136, %v3802
        %v3863 = vadd.f32 %v3137, %v3805
        %v3864 = vadd.f32 %v3138, %v3810
        %v3865 = vadd.f32 %v3139, %v3813
        %v3866 = vadd.f32 %v3140, %v3818
        %v3867 = vadd.f32 %v3141, %v3821
        %v3868 = vadd.f32 %v3142, %v3826
        %v3869 = vadd.f32 %v3143, %v3829
        %v3870 = vadd.f32 %v3144, %v3834
        %v3871 = vadd.f32 %v3145, %v3837
        %s3872 = sadd.s32 %s225, 2
        %s3873 = smul.u32 %s3872, 5
        %s3874 = smul.addr %s3873, 4
        %s3875 = scalar_lea.vmem [#allocation2], %s3874
        %v3876 = vld [vmem:[%s3875 + $0x4] sm:$0x8]
        %v3877 = vld [vmem:[%s3875 + $0x8] sm:$0xf]
        %v3878 = vld [vmem:[%s3875 + $0xc] sm:$0xf]
        %v3879 = vld [vmem:[%s3875 + $0x18] sm:$0x8]
        %v3880 = vld [vmem:[%s3875 + $0x1c] sm:$0xf]
        %v3881 = vld [vmem:[%s3875 + $0x20] sm:$0xf]
        %v3882 = vld [vmem:[%s3875 + $0x2c] sm:$0x8]
        %v3883 = vld [vmem:[%s3875 + $0x30] sm:$0xf]
        %v3884 = vld [vmem:[%s3875 + $0x34] sm:$0xf]
        %v3885 = vld [vmem:[%s3875 + $0x40] sm:$0x8]
        %v3886 = vld [vmem:[%s3875 + $0x44] sm:$0xf]
        %v3887 = vld [vmem:[%s3875 + $0x48] sm:$0xf]
        %v3888 = vld [vmem:[%s3875 + $0x54] sm:$0x8]
        %v3889 = vld [vmem:[%s3875 + $0x58] sm:$0xf]
        %v3890 = vld [vmem:[%s3875 + $0x5c] sm:$0xf]
        %v3891 = vld [vmem:[%s3875 + $0x68] sm:$0x8]
        %v3892 = vld [vmem:[%s3875 + $0x6c] sm:$0xf]
        %v3893 = vld [vmem:[%s3875 + $0x70] sm:$0xf]
        %v3894 = vld [vmem:[%s3875 + $0x7c] sm:$0x8]
        %v3895 = vld [vmem:[%s3875 + $0x80] sm:$0xf]
        %v3896 = vld [vmem:[%s3875 + $0x84] sm:$0xf]
        %v3897 = vld [vmem:[%s3875 + $0x90] sm:$0x8]
        %v3898 = vld [vmem:[%s3875 + $0x94] sm:$0xf]
        %v3899 = vld [vmem:[%s3875 + $0x98] sm:$0xf]
        %v3900 = vld [vmem:[%s3875 + $0xa4] sm:$0x8]
        %v3901 = vld [vmem:[%s3875 + $0xa8] sm:$0xf]
        %v3902 = vld [vmem:[%s3875 + $0xac] sm:$0xf]
        %v3903 = vld [vmem:[%s3875 + $0xb8] sm:$0x8]
        %v3904 = vld [vmem:[%s3875 + $0xbc] sm:$0xf]
        %v3905 = vld [vmem:[%s3875 + $0xc0] sm:$0xf]
        %v3906 = vld [vmem:[%s3875 + $0xcc] sm:$0x8]
        %v3907 = vld [vmem:[%s3875 + $0xd0] sm:$0xf]
        %v3908 = vld [vmem:[%s3875 + $0xd4] sm:$0xf]
        %v3909 = vld [vmem:[%s3875 + $0xe0] sm:$0x8]
        %v3910 = vld [vmem:[%s3875 + $0xe4] sm:$0xf]
        %v3911 = vld [vmem:[%s3875 + $0xe8] sm:$0xf]
        %v3912 = vld [vmem:[%s3875 + $0xf4] sm:$0x8]
        %v3913 = vld [vmem:[%s3875 + $0xf8] sm:$0xf]
        %v3914 = vld [vmem:[%s3875 + $0xfc] sm:$0xf]
        %v3915 = vld [vmem:[%s3875 + $0x108] sm:$0x8]
        %v3916 = vld [vmem:[%s3875 + $0x10c] sm:$0xf]
        %v3917 = vld [vmem:[%s3875 + $0x110] sm:$0xf]
        %v3918 = vld [vmem:[%s3875 + $0x11c] sm:$0x8]
        %v3919 = vld [vmem:[%s3875 + $0x120] sm:$0xf]
        %v3920 = vld [vmem:[%s3875 + $0x124] sm:$0xf]
        %v3921 = vld [vmem:[%s3875 + $0x130] sm:$0x8]
        %v3922 = vld [vmem:[%s3875 + $0x134] sm:$0xf]
        %v3923 = vld [vmem:[%s3875 + $0x138] sm:$0xf]
        %v3925 = vshrl.u32 %v3876, 16
        %v3927 = vrot.slane %v3925, 7
        %v3928 = vrot.slane %v3927, 4
        %v3930 = vshrl.u32 %v3877, 16
        %v3932 = vrot.slane %v3930, 7
        %v3933 = vshll.u32 %v3877, 16
        %v3935 = vor.u32 %v3932, %v3933
        %v3936 = vsel %vm480, %v3928, %v3935
        %v3937 = vrot.slane %v3932, 4
        %v3939 = vshrl.u32 %v3878, 16
        %v3941 = vrot.slane %v3939, 7
        %v3942 = vshll.u32 %v3878, 16
        %v3944 = vor.u32 %v3941, %v3942
        %v3945 = vsel %vm480, %v3937, %v3944
        %v3947 = vshrl.u32 %v3879, 16
        %v3949 = vrot.slane %v3947, 7
        %v3950 = vrot.slane %v3949, 4
        %v3952 = vshrl.u32 %v3880, 16
        %v3954 = vrot.slane %v3952, 7
        %v3955 = vshll.u32 %v3880, 16
        %v3957 = vor.u32 %v3954, %v3955
        %v3958 = vsel %vm480, %v3950, %v3957
        %v3959 = vrot.slane %v3954, 4
        %v3961 = vshrl.u32 %v3881, 16
        %v3963 = vrot.slane %v3961, 7
        %v3964 = vshll.u32 %v3881, 16
        %v3966 = vor.u32 %v3963, %v3964
        %v3967 = vsel %vm480, %v3959, %v3966
        %v3969 = vshrl.u32 %v3882, 16
        %v3971 = vrot.slane %v3969, 7
        %v3972 = vrot.slane %v3971, 4
        %v3974 = vshrl.u32 %v3883, 16
        %v3976 = vrot.slane %v3974, 7
        %v3977 = vshll.u32 %v3883, 16
        %v3979 = vor.u32 %v3976, %v3977
        %v3980 = vsel %vm480, %v3972, %v3979
        %v3981 = vrot.slane %v3976, 4
        %v3983 = vshrl.u32 %v3884, 16
        %v3985 = vrot.slane %v3983, 7
        %v3986 = vshll.u32 %v3884, 16
        %v3988 = vor.u32 %v3985, %v3986
        %v3989 = vsel %vm480, %v3981, %v3988
        %v3991 = vshrl.u32 %v3885, 16
        %v3993 = vrot.slane %v3991, 7
        %v3994 = vrot.slane %v3993, 4
        %v3996 = vshrl.u32 %v3886, 16
        %v3998 = vrot.slane %v3996, 7
        %v3999 = vshll.u32 %v3886, 16
        %v4001 = vor.u32 %v3998, %v3999
        %v4002 = vsel %vm480, %v3994, %v4001
        %v4003 = vrot.slane %v3998, 4
        %v4005 = vshrl.u32 %v3887, 16
        %v4007 = vrot.slane %v4005, 7
        %v4008 = vshll.u32 %v3887, 16
        %v4010 = vor.u32 %v4007, %v4008
        %v4011 = vsel %vm480, %v4003, %v4010
        %v4013 = vshrl.u32 %v3888, 16
        %v4015 = vrot.slane %v4013, 7
        %v4016 = vrot.slane %v4015, 4
        %v4018 = vshrl.u32 %v3889, 16
        %v4020 = vrot.slane %v4018, 7
        %v4021 = vshll.u32 %v3889, 16
        %v4023 = vor.u32 %v4020, %v4021
        %v4024 = vsel %vm480, %v4016, %v4023
        %v4025 = vrot.slane %v4020, 4
        %v4027 = vshrl.u32 %v3890, 16
        %v4029 = vrot.slane %v4027, 7
        %v4030 = vshll.u32 %v3890, 16
        %v4032 = vor.u32 %v4029, %v4030
        %v4033 = vsel %vm480, %v4025, %v4032
        %v4035 = vshrl.u32 %v3891, 16
        %v4037 = vrot.slane %v4035, 7
        %v4038 = vrot.slane %v4037, 4
        %v4040 = vshrl.u32 %v3892, 16
        %v4042 = vrot.slane %v4040, 7
        %v4043 = vshll.u32 %v3892, 16
        %v4045 = vor.u32 %v4042, %v4043
        %v4046 = vsel %vm480, %v4038, %v4045
        %v4047 = vrot.slane %v4042, 4
        %v4049 = vshrl.u32 %v3893, 16
        %v4051 = vrot.slane %v4049, 7
        %v4052 = vshll.u32 %v3893, 16
        %v4054 = vor.u32 %v4051, %v4052
        %v4055 = vsel %vm480, %v4047, %v4054
        %v4057 = vshrl.u32 %v3894, 16
        %v4059 = vrot.slane %v4057, 7
        %v4060 = vrot.slane %v4059, 4
        %v4062 = vshrl.u32 %v3895, 16
        %v4064 = vrot.slane %v4062, 7
        %v4065 = vshll.u32 %v3895, 16
        %v4067 = vor.u32 %v4064, %v4065
        %v4068 = vsel %vm480, %v4060, %v4067
        %v4069 = vrot.slane %v4064, 4
        %v4071 = vshrl.u32 %v3896, 16
        %v4073 = vrot.slane %v4071, 7
        %v4074 = vshll.u32 %v3896, 16
        %v4076 = vor.u32 %v4073, %v4074
        %v4077 = vsel %vm480, %v4069, %v4076
        %v4079 = vshrl.u32 %v3897, 16
        %v4081 = vrot.slane %v4079, 7
        %v4082 = vrot.slane %v4081, 4
        %v4084 = vshrl.u32 %v3898, 16
        %v4086 = vrot.slane %v4084, 7
        %v4087 = vshll.u32 %v3898, 16
        %v4089 = vor.u32 %v4086, %v4087
        %v4090 = vsel %vm480, %v4082, %v4089
        %v4091 = vrot.slane %v4086, 4
        %v4093 = vshrl.u32 %v3899, 16
        %v4095 = vrot.slane %v4093, 7
        %v4096 = vshll.u32 %v3899, 16
        %v4098 = vor.u32 %v4095, %v4096
        %v4099 = vsel %vm480, %v4091, %v4098
        %v4101 = vshrl.u32 %v3900, 16
        %v4103 = vrot.slane %v4101, 7
        %v4104 = vrot.slane %v4103, 4
        %v4106 = vshrl.u32 %v3901, 16
        %v4108 = vrot.slane %v4106, 7
        %v4109 = vshll.u32 %v3901, 16
        %v4111 = vor.u32 %v4108, %v4109
        %v4112 = vsel %vm480, %v4104, %v4111
        %v4113 = vrot.slane %v4108, 4
        %v4115 = vshrl.u32 %v3902, 16
        %v4117 = vrot.slane %v4115, 7
        %v4118 = vshll.u32 %v3902, 16
        %v4120 = vor.u32 %v4117, %v4118
        %v4121 = vsel %vm480, %v4113, %v4120
        %v4123 = vshrl.u32 %v3903, 16
        %v4125 = vrot.slane %v4123, 7
        %v4126 = vrot.slane %v4125, 4
        %v4128 = vshrl.u32 %v3904, 16
        %v4130 = vrot.slane %v4128, 7
        %v4131 = vshll.u32 %v3904, 16
        %v4133 = vor.u32 %v4130, %v4131
        %v4134 = vsel %vm480, %v4126, %v4133
        %v4135 = vrot.slane %v4130, 4
        %v4137 = vshrl.u32 %v3905, 16
        %v4139 = vrot.slane %v4137, 7
        %v4140 = vshll.u32 %v3905, 16
        %v4142 = vor.u32 %v4139, %v4140
        %v4143 = vsel %vm480, %v4135, %v4142
        %v4145 = vshrl.u32 %v3906, 16
        %v4147 = vrot.slane %v4145, 7
        %v4148 = vrot.slane %v4147, 4
        %v4150 = vshrl.u32 %v3907, 16
        %v4152 = vrot.slane %v4150, 7
        %v4153 = vshll.u32 %v3907, 16
        %v4155 = vor.u32 %v4152, %v4153
        %v4156 = vsel %vm480, %v4148, %v4155
        %v4157 = vrot.slane %v4152, 4
        %v4159 = vshrl.u32 %v3908, 16
        %v4161 = vrot.slane %v4159, 7
        %v4162 = vshll.u32 %v3908, 16
        %v4164 = vor.u32 %v4161, %v4162
        %v4165 = vsel %vm480, %v4157, %v4164
        %v4167 = vshrl.u32 %v3909, 16
        %v4169 = vrot.slane %v4167, 7
        %v4170 = vrot.slane %v4169, 4
        %v4172 = vshrl.u32 %v3910, 16
        %v4174 = vrot.slane %v4172, 7
        %v4175 = vshll.u32 %v3910, 16
        %v4177 = vor.u32 %v4174, %v4175
        %v4178 = vsel %vm480, %v4170, %v4177
        %v4179 = vrot.slane %v4174, 4
        %v4181 = vshrl.u32 %v3911, 16
        %v4183 = vrot.slane %v4181, 7
        %v4184 = vshll.u32 %v3911, 16
        %v4186 = vor.u32 %v4183, %v4184
        %v4187 = vsel %vm480, %v4179, %v4186
        %v4189 = vshrl.u32 %v3912, 16
        %v4191 = vrot.slane %v4189, 7
        %v4192 = vrot.slane %v4191, 4
        %v4194 = vshrl.u32 %v3913, 16
        %v4196 = vrot.slane %v4194, 7
        %v4197 = vshll.u32 %v3913, 16
        %v4199 = vor.u32 %v4196, %v4197
        %v4200 = vsel %vm480, %v4192, %v4199
        %v4201 = vrot.slane %v4196, 4
        %v4203 = vshrl.u32 %v3914, 16
        %v4205 = vrot.slane %v4203, 7
        %v4206 = vshll.u32 %v3914, 16
        %v4208 = vor.u32 %v4205, %v4206
        %v4209 = vsel %vm480, %v4201, %v4208
        %v4211 = vshrl.u32 %v3915, 16
        %v4213 = vrot.slane %v4211, 7
        %v4214 = vrot.slane %v4213, 4
        %v4216 = vshrl.u32 %v3916, 16
        %v4218 = vrot.slane %v4216, 7
        %v4219 = vshll.u32 %v3916, 16
        %v4221 = vor.u32 %v4218, %v4219
        %v4222 = vsel %vm480, %v4214, %v4221
        %v4223 = vrot.slane %v4218, 4
        %v4225 = vshrl.u32 %v3917, 16
        %v4227 = vrot.slane %v4225, 7
        %v4228 = vshll.u32 %v3917, 16
        %v4230 = vor.u32 %v4227, %v4228
        %v4231 = vsel %vm480, %v4223, %v4230
        %v4233 = vshrl.u32 %v3918, 16
        %v4235 = vrot.slane %v4233, 7
        %v4236 = vrot.slane %v4235, 4
        %v4238 = vshrl.u32 %v3919, 16
        %v4240 = vrot.slane %v4238, 7
        %v4241 = vshll.u32 %v3919, 16
        %v4243 = vor.u32 %v4240, %v4241
        %v4244 = vsel %vm480, %v4236, %v4243
        %v4245 = vrot.slane %v4240, 4
        %v4247 = vshrl.u32 %v3920, 16
        %v4249 = vrot.slane %v4247, 7
        %v4250 = vshll.u32 %v3920, 16
        %v4252 = vor.u32 %v4249, %v4250
        %v4253 = vsel %vm480, %v4245, %v4252
        %v4255 = vshrl.u32 %v3921, 16
        %v4257 = vrot.slane %v4255, 7
        %v4258 = vrot.slane %v4257, 4
        %v4260 = vshrl.u32 %v3922, 16
        %v4262 = vrot.slane %v4260, 7
        %v4263 = vshll.u32 %v3922, 16
        %v4265 = vor.u32 %v4262, %v4263
        %v4266 = vsel %vm480, %v4258, %v4265
        %v4267 = vrot.slane %v4262, 4
        %v4269 = vshrl.u32 %v3923, 16
        %v4271 = vrot.slane %v4269, 7
        %v4272 = vshll.u32 %v3923, 16
        %v4274 = vor.u32 %v4271, %v4272
        %v4275 = vsel %vm480, %v4267, %v4274
        %s4276 = scalar_lea.vmem %s219, 12
        %v4277 = vld [vmem:[%s4276] sm:$0x3]
        %v4278 = vunpack.c.l.b16 %v3936
        %v4279 = vunpack.c.l.b16 %v3945
        %v4280 = vunpack.c.l.b16 %v3958
        %v4281 = vunpack.c.l.b16 %v3967
        %v4282 = vunpack.c.l.b16 %v3980
        %v4283 = vunpack.c.l.b16 %v3989
        %v4284 = vunpack.c.l.b16 %v4002
        %v4285 = vunpack.c.l.b16 %v4011
        %v4286 = vunpack.c.l.b16 %v4024
        %v4287 = vunpack.c.l.b16 %v4033
        %v4288 = vunpack.c.l.b16 %v4046
        %v4289 = vunpack.c.l.b16 %v4055
        %v4290 = vunpack.c.l.b16 %v4068
        %v4291 = vunpack.c.l.b16 %v4077
        %v4292 = vunpack.c.l.b16 %v4090
        %v4293 = vunpack.c.l.b16 %v4099
        %v4294 = vunpack.c.l.b16 %v4112
        %v4295 = vunpack.c.l.b16 %v4121
        %v4296 = vunpack.c.l.b16 %v4134
        %v4297 = vunpack.c.l.b16 %v4143
        %v4298 = vunpack.c.l.b16 %v4156
        %v4299 = vunpack.c.l.b16 %v4165
        %v4300 = vunpack.c.l.b16 %v4178
        %v4301 = vunpack.c.l.b16 %v4187
        %v4302 = vunpack.c.l.b16 %v4200
        %v4303 = vunpack.c.l.b16 %v4209
        %v4304 = vunpack.c.l.b16 %v4222
        %v4305 = vunpack.c.l.b16 %v4231
        %v4306 = vunpack.c.l.b16 %v4244
        %v4307 = vunpack.c.l.b16 %v4253
        %v4308 = vunpack.c.l.b16 %v4266
        %v4309 = vunpack.c.l.b16 %v4275
        %v4310 = vpack.c.b16 %v4279, %v4278
        %v4311 = vpack.c.b16 %v4281, %v4280
        %v4312 = vpack.c.b16 %v4283, %v4282
        %v4313 = vpack.c.b16 %v4285, %v4284
        %v4314 = vpack.c.b16 %v4287, %v4286
        %v4315 = vpack.c.b16 %v4289, %v4288
        %v4316 = vpack.c.b16 %v4291, %v4290
        %v4317 = vpack.c.b16 %v4293, %v4292
        %v4318 = vpack.c.b16 %v4295, %v4294
        %v4319 = vpack.c.b16 %v4297, %v4296
        %v4320 = vpack.c.b16 %v4299, %v4298
        %v4321 = vpack.c.b16 %v4301, %v4300
        %v4322 = vpack.c.b16 %v4303, %v4302
        %v4323 = vpack.c.b16 %v4305, %v4304
        %v4324 = vpack.c.b16 %v4307, %v4306
        %v4325 = vpack.c.b16 %v4309, %v4308
        %v4327 = vsel %vm916, %v4310, 0
        %v4330 = vsel %vm916, %v4311, 0
        %v4333 = vsel %vm916, %v4312, 0
        %v4336 = vsel %vm916, %v4313, 0
        %v4339 = vsel %vm916, %v4314, 0
        %v4342 = vsel %vm916, %v4315, 0
        %v4345 = vsel %vm916, %v4316, 0
        %v4348 = vsel %vm916, %v4317, 0
        %v4351 = vsel %vm916, %v4318, 0
        %v4354 = vsel %vm916, %v4319, 0
        %v4357 = vsel %vm916, %v4320, 0
        %v4360 = vsel %vm916, %v4321, 0
        %v4363 = vsel %vm916, %v4322, 0
        %v4366 = vsel %vm916, %v4323, 0
        %v4369 = vsel %vm916, %v4324, 0
        %v4372 = vsel %vm916, %v4325, 0
        %v4375 = vand.u32 %v4277, %v968
        %4377 = vmatprep.subr.bf16.mxu0 0
        %4378 = vmatpush1.bf16.msra.mxu0 %v4375
        %4379 = vmatprep.subr.bf16.mxu0 0
        %4380 = vmatpush1.bf16.msra.mxu0 0
        %4381 = vmatprep.subr.bf16.mxu0 0
        %4382 = vmatpush1.bf16.msra.mxu0 0
        %4383 = vmatprep.subr.bf16.mxu0 0
        %4384 = vmatpush1.bf16.msra.mxu0 0
        %4385 = vmatprep.subr.bf16.mxu0 0
        %4386 = vmatpush1.bf16.msra.mxu0 0
        %4387 = vmatprep.subr.bf16.mxu0 0
        %4388 = vmatpush1.bf16.msra.mxu0 0
        %4389 = vmatprep.subr.bf16.mxu0 0
        %4390 = vmatpush1.bf16.msra.mxu0 0
        %4391 = vmatprep.subr.bf16.mxu0 0
        %4392 = vmatpush1.bf16.msra.mxu0 0
        %4393 = vmatprep.subr.bf16.mxu0 0
        %4394 = vmatpush1.bf16.msra.mxu0 0
        %4395 = vmatprep.subr.bf16.mxu0 0
        %4396 = vmatpush1.bf16.msra.mxu0 0
        %4397 = vmatprep.subr.bf16.mxu0 0
        %4398 = vmatpush1.bf16.msra.mxu0 0
        %4399 = vmatprep.subr.bf16.mxu0 0
        %4400 = vmatpush1.bf16.msra.mxu0 0
        %4401 = vmatprep.subr.bf16.mxu0 0
        %4402 = vmatpush1.bf16.msra.mxu0 0
        %4403 = vmatprep.subr.bf16.mxu0 0
        %4404 = vmatpush1.bf16.msra.mxu0 0
        %4405 = vmatprep.subr.bf16.mxu0 0
        %4406 = vmatpush1.bf16.msra.mxu0 0
        %4407 = vmatprep.subr.bf16.mxu0 0
        %4408 = vmatpush1.bf16.msra.mxu0 0
        %4409 = vmatprep.mubr.bf16.mxu0 0
        %4410 = vmatmul.mubr.bf16.gmra.mrb[0].mxu0 %v4327
        %v4411 = vpop.f32.mrb[0].mxu0
        %v4412 = vadd.f32 0.0, %v4411
        %v4413 = vpop.f32.mrb[0].mxu0
        %v4414 = vpop.f32.mrb[0].mxu0
        %v4415 = vadd.f32 0.0, %v4414
        %v4416 = vpop.f32.mrb[0].mxu0
        %4417 = vmatprep.mubr.bf16.mxu0 0
        %4418 = vmatmul.mubr.bf16.gmra.mrb[0].mxu0 %v4330
        %v4419 = vpop.f32.mrb[0].mxu0
        %v4420 = vadd.f32 0.0, %v4419
        %v4421 = vpop.f32.mrb[0].mxu0
        %v4422 = vpop.f32.mrb[0].mxu0
        %v4423 = vadd.f32 0.0, %v4422
        %v4424 = vpop.f32.mrb[0].mxu0
        %4425 = vmatprep.mubr.bf16.mxu0 0
        %4426 = vmatmul.mubr.bf16.gmra.mrb[0].mxu0 %v4333
        %v4427 = vpop.f32.mrb[0].mxu0
        %v4428 = vadd.f32 0.0, %v4427
        %v4429 = vpop.f32.mrb[0].mxu0
        %v4430 = vpop.f32.mrb[0].mxu0
        %v4431 = vadd.f32 0.0, %v4430
        %v4432 = vpop.f32.mrb[0].mxu0
        %4433 = vmatprep.mubr.bf16.mxu0 0
        %4434 = vmatmul.mubr.bf16.gmra.mrb[0].mxu0 %v4336
        %v4435 = vpop.f32.mrb[0].mxu0
        %v4436 = vadd.f32 0.0, %v4435
        %v4437 = vpop.f32.mrb[0].mxu0
        %v4438 = vpop.f32.mrb[0].mxu0
        %v4439 = vadd.f32 0.0, %v4438
        %v4440 = vpop.f32.mrb[0].mxu0
        %4441 = vmatprep.mubr.bf16.mxu0 0
        %4442 = vmatmul.mubr.bf16.gmra.mrb[0].mxu0 %v4339
        %v4443 = vpop.f32.mrb[0].mxu0
        %v4444 = vadd.f32 0.0, %v4443
        %v4445 = vpop.f32.mrb[0].mxu0
        %v4446 = vpop.f32.mrb[0].mxu0
        %v4447 = vadd.f32 0.0, %v4446
        %v4448 = vpop.f32.mrb[0].mxu0
        %4449 = vmatprep.mubr.bf16.mxu0 0
        %4450 = vmatmul.mubr.bf16.gmra.mrb[0].mxu0 %v4342
        %v4451 = vpop.f32.mrb[0].mxu0
        %v4452 = vadd.f32 0.0, %v4451
        %v4453 = vpop.f32.mrb[0].mxu0
        %v4454 = vpop.f32.mrb[0].mxu0
        %v4455 = vadd.f32 0.0, %v4454
        %v4456 = vpop.f32.mrb[0].mxu0
        %4457 = vmatprep.mubr.bf16.mxu0 0
        %4458 = vmatmul.mubr.bf16.gmra.mrb[0].mxu0 %v4345
        %v4459 = vpop.f32.mrb[0].mxu0
        %v4460 = vadd.f32 0.0, %v4459
        %v4461 = vpop.f32.mrb[0].mxu0
        %v4462 = vpop.f32.mrb[0].mxu0
        %v4463 = vadd.f32 0.0, %v4462
        %v4464 = vpop.f32.mrb[0].mxu0
        %4465 = vmatprep.mubr.bf16.mxu0 0
        %4466 = vmatmul.mubr.bf16.gmra.mrb[0].mxu0 %v4348
        %v4467 = vpop.f32.mrb[0].mxu0
        %v4468 = vadd.f32 0.0, %v4467
        %v4469 = vpop.f32.mrb[0].mxu0
        %v4470 = vpop.f32.mrb[0].mxu0
        %v4471 = vadd.f32 0.0, %v4470
        %v4472 = vpop.f32.mrb[0].mxu0
        %4473 = vmatprep.mubr.bf16.mxu0 0
        %4474 = vmatmul.mubr.bf16.gmra.mrb[0].mxu0 %v4351
        %v4475 = vpop.f32.mrb[0].mxu0
        %v4476 = vadd.f32 0.0, %v4475
        %v4477 = vpop.f32.mrb[0].mxu0
        %v4478 = vpop.f32.mrb[0].mxu0
        %v4479 = vadd.f32 0.0, %v4478
        %v4480 = vpop.f32.mrb[0].mxu0
        %4481 = vmatprep.mubr.bf16.mxu0 0
        %4482 = vmatmul.mubr.bf16.gmra.mrb[0].mxu0 %v4354
        %v4483 = vpop.f32.mrb[0].mxu0
        %v4484 = vadd.f32 0.0, %v4483
        %v4485 = vpop.f32.mrb[0].mxu0
        %v4486 = vpop.f32.mrb[0].mxu0
        %v4487 = vadd.f32 0.0, %v4486
        %v4488 = vpop.f32.mrb[0].mxu0
        %4489 = vmatprep.mubr.bf16.mxu0 0
        %4490 = vmatmul.mubr.bf16.gmra.mrb[0].mxu0 %v4357
        %v4491 = vpop.f32.mrb[0].mxu0
        %v4492 = vadd.f32 0.0, %v4491
        %v4493 = vpop.f32.mrb[0].mxu0
        %v4494 = vpop.f32.mrb[0].mxu0
        %v4495 = vadd.f32 0.0, %v4494
        %v4496 = vpop.f32.mrb[0].mxu0
        %4497 = vmatprep.mubr.bf16.mxu0 0
        %4498 = vmatmul.mubr.bf16.gmra.mrb[0].mxu0 %v4360
        %v4499 = vpop.f32.mrb[0].mxu0
        %v4500 = vadd.f32 0.0, %v4499
        %v4501 = vpop.f32.mrb[0].mxu0
        %v4502 = vpop.f32.mrb[0].mxu0
        %v4503 = vadd.f32 0.0, %v4502
        %v4504 = vpop.f32.mrb[0].mxu0
        %4505 = vmatprep.mubr.bf16.mxu0 0
        %4506 = vmatmul.mubr.bf16.gmra.mrb[0].mxu0 %v4363
        %v4507 = vpop.f32.mrb[0].mxu0
        %v4508 = vadd.f32 0.0, %v4507
        %v4509 = vpop.f32.mrb[0].mxu0
        %v4510 = vpop.f32.mrb[0].mxu0
        %v4511 = vadd.f32 0.0, %v4510
        %v4512 = vpop.f32.mrb[0].mxu0
        %4513 = vmatprep.mubr.bf16.mxu0 0
        %4514 = vmatmul.mubr.bf16.gmra.mrb[0].mxu0 %v4366
        %v4515 = vpop.f32.mrb[0].mxu0
        %v4516 = vadd.f32 0.0, %v4515
        %v4517 = vpop.f32.mrb[0].mxu0
        %v4518 = vpop.f32.mrb[0].mxu0
        %v4519 = vadd.f32 0.0, %v4518
        %v4520 = vpop.f32.mrb[0].mxu0
        %4521 = vmatprep.mubr.bf16.mxu0 0
        %4522 = vmatmul.mubr.bf16.gmra.mrb[0].mxu0 %v4369
        %v4523 = vpop.f32.mrb[0].mxu0
        %v4524 = vadd.f32 0.0, %v4523
        %v4525 = vpop.f32.mrb[0].mxu0
        %v4526 = vpop.f32.mrb[0].mxu0
        %v4527 = vadd.f32 0.0, %v4526
        %v4528 = vpop.f32.mrb[0].mxu0
        %4529 = vmatprep.mubr.bf16.mxu0 0
        %4530 = vmatmul.mubr.bf16.gmra.mrb[0].mxu0 %v4372
        %v4531 = vpop.f32.mrb[0].mxu0
        %v4532 = vadd.f32 0.0, %v4531
        %v4533 = vpop.f32.mrb[0].mxu0
        %v4534 = vpop.f32.mrb[0].mxu0
        %v4535 = vadd.f32 0.0, %v4534
        %v4536 = vpop.f32.mrb[0].mxu0
        %4537 = vdwg.mxu0
        %v4538 = vadd.f32 %v3840, %v4412
        %v4539 = vadd.f32 %v3841, %v4415
        %v4540 = vadd.f32 %v3842, %v4420
        %v4541 = vadd.f32 %v3843, %v4423
        %v4542 = vadd.f32 %v3844, %v4428
        %v4543 = vadd.f32 %v3845, %v4431
        %v4544 = vadd.f32 %v3846, %v4436
        %v4545 = vadd.f32 %v3847, %v4439
        %v4546 = vadd.f32 %v3848, %v4444
        %v4547 = vadd.f32 %v3849, %v4447
        %v4548 = vadd.f32 %v3850, %v4452
        %v4549 = vadd.f32 %v3851, %v4455
        %v4550 = vadd.f32 %v3852, %v4460
        %v4551 = vadd.f32 %v3853, %v4463
        %v4552 = vadd.f32 %v3854, %v4468
        %v4553 = vadd.f32 %v3855, %v4471
        %v4554 = vadd.f32 %v3856, %v4476
        %v4555 = vadd.f32 %v3857, %v4479
        %v4556 = vadd.f32 %v3858, %v4484
        %v4557 = vadd.f32 %v3859, %v4487
        %v4558 = vadd.f32 %v3860, %v4492
        %v4559 = vadd.f32 %v3861, %v4495
        %v4560 = vadd.f32 %v3862, %v4500
        %v4561 = vadd.f32 %v3863, %v4503
        %v4562 = vadd.f32 %v3864, %v4508
        %v4563 = vadd.f32 %v3865, %v4511
        %v4564 = vadd.f32 %v3866, %v4516
        %v4565 = vadd.f32 %v3867, %v4519
        %v4566 = vadd.f32 %v3868, %v4524
        %v4567 = vadd.f32 %v3869, %v4527
        %v4568 = vadd.f32 %v3870, %v4532
        %v4569 = vadd.f32 %v3871, %v4535
        %s4570 = scalar_lea.vmem %s219, 14
        %v4571 = vld [vmem:[%s4570] sm:$0x3]
        %v4604 = vunpack.c.l.b16 %v3877
        %v4605 = vunpack.c.l.b16 %v3878
        %v4606 = vunpack.c.l.b16 %v3880
        %v4607 = vunpack.c.l.b16 %v3881
        %v4608 = vunpack.c.l.b16 %v3883
        %v4609 = vunpack.c.l.b16 %v3884
        %v4610 = vunpack.c.l.b16 %v3886
        %v4611 = vunpack.c.l.b16 %v3887
        %v4612 = vunpack.c.l.b16 %v3889
        %v4613 = vunpack.c.l.b16 %v3890
        %v4614 = vunpack.c.l.b16 %v3892
        %v4615 = vunpack.c.l.b16 %v3893
        %v4616 = vunpack.c.l.b16 %v3895
        %v4617 = vunpack.c.l.b16 %v3896
        %v4618 = vunpack.c.l.b16 %v3898
        %v4619 = vunpack.c.l.b16 %v3899
        %v4620 = vunpack.c.l.b16 %v3901
        %v4621 = vunpack.c.l.b16 %v3902
        %v4622 = vunpack.c.l.b16 %v3904
        %v4623 = vunpack.c.l.b16 %v3905
        %v4624 = vunpack.c.l.b16 %v3907
        %v4625 = vunpack.c.l.b16 %v3908
        %v4626 = vunpack.c.l.b16 %v3910
        %v4627 = vunpack.c.l.b16 %v3911
        %v4628 = vunpack.c.l.b16 %v3913
        %v4629 = vunpack.c.l.b16 %v3914
        %v4630 = vunpack.c.l.b16 %v3916
        %v4631 = vunpack.c.l.b16 %v3917
        %v4632 = vunpack.c.l.b16 %v3919
        %v4633 = vunpack.c.l.b16 %v3920
        %v4634 = vunpack.c.l.b16 %v3922
        %v4635 = vunpack.c.l.b16 %v3923
        %v4636 = vpack.c.b16 %v4605, %v4604
        %v4637 = vpack.c.b16 %v4607, %v4606
        %v4638 = vpack.c.b16 %v4609, %v4608
        %v4639 = vpack.c.b16 %v4611, %v4610
        %v4640 = vpack.c.b16 %v4613, %v4612
        %v4641 = vpack.c.b16 %v4615, %v4614
        %v4642 = vpack.c.b16 %v4617, %v4616
        %v4643 = vpack.c.b16 %v4619, %v4618
        %v4644 = vpack.c.b16 %v4621, %v4620
        %v4645 = vpack.c.b16 %v4623, %v4622
        %v4646 = vpack.c.b16 %v4625, %v4624
        %v4647 = vpack.c.b16 %v4627, %v4626
        %v4648 = vpack.c.b16 %v4629, %v4628
        %v4649 = vpack.c.b16 %v4631, %v4630
        %v4650 = vpack.c.b16 %v4633, %v4632
        %v4651 = vpack.c.b16 %v4635, %v4634
        %v4653 = vsel %vm916, %v4636, 0
        %v4656 = vsel %vm916, %v4637, 0
        %v4659 = vsel %vm916, %v4638, 0
        %v4662 = vsel %vm916, %v4639, 0
        %v4665 = vsel %vm916, %v4640, 0
        %v4668 = vsel %vm916, %v4641, 0
        %v4671 = vsel %vm916, %v4642, 0
        %v4674 = vsel %vm916, %v4643, 0
        %v4677 = vsel %vm916, %v4644, 0
        %v4680 = vsel %vm916, %v4645, 0
        %v4683 = vsel %vm916, %v4646, 0
        %v4686 = vsel %vm916, %v4647, 0
        %v4689 = vsel %vm916, %v4648, 0
        %v4692 = vsel %vm916, %v4649, 0
        %v4695 = vsel %vm916, %v4650, 0
        %v4698 = vsel %vm916, %v4651, 0
        %v4701 = vand.u32 %v4571, %v968
        %4703 = vmatprep.subr.bf16.mxu0 0
        %4704 = vmatpush1.bf16.msra.mxu0 %v4701
        %4705 = vmatprep.subr.bf16.mxu0 0
        %4706 = vmatpush1.bf16.msra.mxu0 0
        %4707 = vmatprep.subr.bf16.mxu0 0
        %4708 = vmatpush1.bf16.msra.mxu0 0
        %4709 = vmatprep.subr.bf16.mxu0 0
        %4710 = vmatpush1.bf16.msra.mxu0 0
        %4711 = vmatprep.subr.bf16.mxu0 0
        %4712 = vmatpush1.bf16.msra.mxu0 0
        %4713 = vmatprep.subr.bf16.mxu0 0
        %4714 = vmatpush1.bf16.msra.mxu0 0
        %4715 = vmatprep.subr.bf16.mxu0 0
        %4716 = vmatpush1.bf16.msra.mxu0 0
        %4717 = vmatprep.subr.bf16.mxu0 0
        %4718 = vmatpush1.bf16.msra.mxu0 0
        %4719 = vmatprep.subr.bf16.mxu0 0
        %4720 = vmatpush1.bf16.msra.mxu0 0
        %4721 = vmatprep.subr.bf16.mxu0 0
        %4722 = vmatpush1.bf16.msra.mxu0 0
        %4723 = vmatprep.subr.bf16.mxu0 0
        %4724 = vmatpush1.bf16.msra.mxu0 0
        %4725 = vmatprep.subr.bf16.mxu0 0
        %4726 = vmatpush1.bf16.msra.mxu0 0
        %4727 = vmatprep.subr.bf16.mxu0 0
        %4728 = vmatpush1.bf16.msra.mxu0 0
        %4729 = vmatprep.subr.bf16.mxu0 0
        %4730 = vmatpush1.bf16.msra.mxu0 0
        %4731 = vmatprep.subr.bf16.mxu0 0
        %4732 = vmatpush1.bf16.msra.mxu0 0
        %4733 = vmatprep.subr.bf16.mxu0 0
        %4734 = vmatpush1.bf16.msra.mxu0 0
        %4735 = vmatprep.mubr.bf16.mxu0 0
        %4736 = vmatmul.mubr.bf16.gmra.mrb[0].mxu0 %v4653
        %v4737 = vpop.f32.mrb[0].mxu0
        %v4738 = vadd.f32 0.0, %v4737
        %v4739 = vpop.f32.mrb[0].mxu0
        %v4740 = vpop.f32.mrb[0].mxu0
        %v4741 = vadd.f32 0.0, %v4740
        %v4742 = vpop.f32.mrb[0].mxu0
        %4743 = vmatprep.mubr.bf16.mxu0 0
        %4744 = vmatmul.mubr.bf16.gmra.mrb[0].mxu0 %v4656
        %v4745 = vpop.f32.mrb[0].mxu0
        %v4746 = vadd.f32 0.0, %v4745
        %v4747 = vpop.f32.mrb[0].mxu0
        %v4748 = vpop.f32.mrb[0].mxu0
        %v4749 = vadd.f32 0.0, %v4748
        %v4750 = vpop.f32.mrb[0].mxu0
        %4751 = vmatprep.mubr.bf16.mxu0 0
        %4752 = vmatmul.mubr.bf16.gmra.mrb[0].mxu0 %v4659
        %v4753 = vpop.f32.mrb[0].mxu0
        %v4754 = vadd.f32 0.0, %v4753
        %v4755 = vpop.f32.mrb[0].mxu0
        %v4756 = vpop.f32.mrb[0].mxu0
        %v4757 = vadd.f32 0.0, %v4756
        %v4758 = vpop.f32.mrb[0].mxu0
        %4759 = vmatprep.mubr.bf16.mxu0 0
        %4760 = vmatmul.mubr.bf16.gmra.mrb[0].mxu0 %v4662
        %v4761 = vpop.f32.mrb[0].mxu0
        %v4762 = vadd.f32 0.0, %v4761
        %v4763 = vpop.f32.mrb[0].mxu0
        %v4764 = vpop.f32.mrb[0].mxu0
        %v4765 = vadd.f32 0.0, %v4764
        %v4766 = vpop.f32.mrb[0].mxu0
        %4767 = vmatprep.mubr.bf16.mxu0 0
        %4768 = vmatmul.mubr.bf16.gmra.mrb[0].mxu0 %v4665
        %v4769 = vpop.f32.mrb[0].mxu0
        %v4770 = vadd.f32 0.0, %v4769
        %v4771 = vpop.f32.mrb[0].mxu0
        %v4772 = vpop.f32.mrb[0].mxu0
        %v4773 = vadd.f32 0.0, %v4772
        %v4774 = vpop.f32.mrb[0].mxu0
        %4775 = vmatprep.mubr.bf16.mxu0 0
        %4776 = vmatmul.mubr.bf16.gmra.mrb[0].mxu0 %v4668
        %v4777 = vpop.f32.mrb[0].mxu0
        %v4778 = vadd.f32 0.0, %v4777
        %v4779 = vpop.f32.mrb[0].mxu0
        %v4780 = vpop.f32.mrb[0].mxu0
        %v4781 = vadd.f32 0.0, %v4780
        %v4782 = vpop.f32.mrb[0].mxu0
        %4783 = vmatprep.mubr.bf16.mxu0 0
        %4784 = vmatmul.mubr.bf16.gmra.mrb[0].mxu0 %v4671
        %v4785 = vpop.f32.mrb[0].mxu0
        %v4786 = vadd.f32 0.0, %v4785
        %v4787 = vpop.f32.mrb[0].mxu0
        %v4788 = vpop.f32.mrb[0].mxu0
        %v4789 = vadd.f32 0.0, %v4788
        %v4790 = vpop.f32.mrb[0].mxu0
        %4791 = vmatprep.mubr.bf16.mxu0 0
        %4792 = vmatmul.mubr.bf16.gmra.mrb[0].mxu0 %v4674
        %v4793 = vpop.f32.mrb[0].mxu0
        %v4794 = vadd.f32 0.0, %v4793
        %v4795 = vpop.f32.mrb[0].mxu0
        %v4796 = vpop.f32.mrb[0].mxu0
        %v4797 = vadd.f32 0.0, %v4796
        %v4798 = vpop.f32.mrb[0].mxu0
        %4799 = vmatprep.mubr.bf16.mxu0 0
        %4800 = vmatmul.mubr.bf16.gmra.mrb[0].mxu0 %v4677
        %v4801 = vpop.f32.mrb[0].mxu0
        %v4802 = vadd.f32 0.0, %v4801
        %v4803 = vpop.f32.mrb[0].mxu0
        %v4804 = vpop.f32.mrb[0].mxu0
        %v4805 = vadd.f32 0.0, %v4804
        %v4806 = vpop.f32.mrb[0].mxu0
        %4807 = vmatprep.mubr.bf16.mxu0 0
        %4808 = vmatmul.mubr.bf16.gmra.mrb[0].mxu0 %v4680
        %v4809 = vpop.f32.mrb[0].mxu0
        %v4810 = vadd.f32 0.0, %v4809
        %v4811 = vpop.f32.mrb[0].mxu0
        %v4812 = vpop.f32.mrb[0].mxu0
        %v4813 = vadd.f32 0.0, %v4812
        %v4814 = vpop.f32.mrb[0].mxu0
        %4815 = vmatprep.mubr.bf16.mxu0 0
        %4816 = vmatmul.mubr.bf16.gmra.mrb[0].mxu0 %v4683
        %v4817 = vpop.f32.mrb[0].mxu0
        %v4818 = vadd.f32 0.0, %v4817
        %v4819 = vpop.f32.mrb[0].mxu0
        %v4820 = vpop.f32.mrb[0].mxu0
        %v4821 = vadd.f32 0.0, %v4820
        %v4822 = vpop.f32.mrb[0].mxu0
        %4823 = vmatprep.mubr.bf16.mxu0 0
        %4824 = vmatmul.mubr.bf16.gmra.mrb[0].mxu0 %v4686
        %v4825 = vpop.f32.mrb[0].mxu0
        %v4826 = vadd.f32 0.0, %v4825
        %v4827 = vpop.f32.mrb[0].mxu0
        %v4828 = vpop.f32.mrb[0].mxu0
        %v4829 = vadd.f32 0.0, %v4828
        %v4830 = vpop.f32.mrb[0].mxu0
        %4831 = vmatprep.mubr.bf16.mxu0 0
        %4832 = vmatmul.mubr.bf16.gmra.mrb[0].mxu0 %v4689
        %v4833 = vpop.f32.mrb[0].mxu0
        %v4834 = vadd.f32 0.0, %v4833
        %v4835 = vpop.f32.mrb[0].mxu0
        %v4836 = vpop.f32.mrb[0].mxu0
        %v4837 = vadd.f32 0.0, %v4836
        %v4838 = vpop.f32.mrb[0].mxu0
        %4839 = vmatprep.mubr.bf16.mxu0 0
        %4840 = vmatmul.mubr.bf16.gmra.mrb[0].mxu0 %v4692
        %v4841 = vpop.f32.mrb[0].mxu0
        %v4842 = vadd.f32 0.0, %v4841
        %v4843 = vpop.f32.mrb[0].mxu0
        %v4844 = vpop.f32.mrb[0].mxu0
        %v4845 = vadd.f32 0.0, %v4844
        %v4846 = vpop.f32.mrb[0].mxu0
        %4847 = vmatprep.mubr.bf16.mxu0 0
        %4848 = vmatmul.mubr.bf16.gmra.mrb[0].mxu0 %v4695
        %v4849 = vpop.f32.mrb[0].mxu0
        %v4850 = vadd.f32 0.0, %v4849
        %v4851 = vpop.f32.mrb[0].mxu0
        %v4852 = vpop.f32.mrb[0].mxu0
        %v4853 = vadd.f32 0.0, %v4852
        %v4854 = vpop.f32.mrb[0].mxu0
        %4855 = vmatprep.mubr.bf16.mxu0 0
        %4856 = vmatmul.mubr.bf16.gmra.mrb[0].mxu0 %v4698
        %v4857 = vpop.f32.mrb[0].mxu0
        %v4858 = vadd.f32 0.0, %v4857
        %v4859 = vpop.f32.mrb[0].mxu0
        %v4860 = vpop.f32.mrb[0].mxu0
        %v4861 = vadd.f32 0.0, %v4860
        %v4862 = vpop.f32.mrb[0].mxu0
        %4863 = vdwg.mxu0
        %v4864 = vadd.f32 %v4538, %v4738
        %v4865 = vadd.f32 %v4539, %v4741
        %v4866 = vadd.f32 %v4540, %v4746
        %v4867 = vadd.f32 %v4541, %v4749
        %v4868 = vadd.f32 %v4542, %v4754
        %v4869 = vadd.f32 %v4543, %v4757
        %v4870 = vadd.f32 %v4544, %v4762
        %v4871 = vadd.f32 %v4545, %v4765
        %v4872 = vadd.f32 %v4546, %v4770
        %v4873 = vadd.f32 %v4547, %v4773
        %v4874 = vadd.f32 %v4548, %v4778
        %v4875 = vadd.f32 %v4549, %v4781
        %v4876 = vadd.f32 %v4550, %v4786
        %v4877 = vadd.f32 %v4551, %v4789
        %v4878 = vadd.f32 %v4552, %v4794
        %v4879 = vadd.f32 %v4553, %v4797
        %v4880 = vadd.f32 %v4554, %v4802
        %v4881 = vadd.f32 %v4555, %v4805
        %v4882 = vadd.f32 %v4556, %v4810
        %v4883 = vadd.f32 %v4557, %v4813
        %v4884 = vadd.f32 %v4558, %v4818
        %v4885 = vadd.f32 %v4559, %v4821
        %v4886 = vadd.f32 %v4560, %v4826
        %v4887 = vadd.f32 %v4561, %v4829
        %v4888 = vadd.f32 %v4562, %v4834
        %v4889 = vadd.f32 %v4563, %v4837
        %v4890 = vadd.f32 %v4564, %v4842
        %v4891 = vadd.f32 %v4565, %v4845
        %v4892 = vadd.f32 %v4566, %v4850
        %v4893 = vadd.f32 %v4567, %v4853
        %v4894 = vadd.f32 %v4568, %v4858
        %v4895 = vadd.f32 %v4569, %v4861
        %v4896 = vld [vmem:[%s3875 + $0x8] sm:$0xf]
        %v4897 = vld [vmem:[%s3875 + $0xc] sm:$0xf]
        %v4898 = vld [vmem:[%s3875 + $0x10] sm:$0x1]
        %v4899 = vld [vmem:[%s3875 + $0x1c] sm:$0xf]
        %v4900 = vld [vmem:[%s3875 + $0x20] sm:$0xf]
        %v4901 = vld [vmem:[%s3875 + $0x24] sm:$0x1]
        %v4902 = vld [vmem:[%s3875 + $0x30] sm:$0xf]
        %v4903 = vld [vmem:[%s3875 + $0x34] sm:$0xf]
        %v4904 = vld [vmem:[%s3875 + $0x38] sm:$0x1]
        %v4905 = vld [vmem:[%s3875 + $0x44] sm:$0xf]
        %v4906 = vld [vmem:[%s3875 + $0x48] sm:$0xf]
        %v4907 = vld [vmem:[%s3875 + $0x4c] sm:$0x1]
        %v4908 = vld [vmem:[%s3875 + $0x58] sm:$0xf]
        %v4909 = vld [vmem:[%s3875 + $0x5c] sm:$0xf]
        %v4910 = vld [vmem:[%s3875 + $0x60] sm:$0x1]
        %v4911 = vld [vmem:[%s3875 + $0x6c] sm:$0xf]
        %v4912 = vld [vmem:[%s3875 + $0x70] sm:$0xf]
        %v4913 = vld [vmem:[%s3875 + $0x74] sm:$0x1]
        %v4914 = vld [vmem:[%s3875 + $0x80] sm:$0xf]
        %v4915 = vld [vmem:[%s3875 + $0x84] sm:$0xf]
        %v4916 = vld [vmem:[%s3875 + $0x88] sm:$0x1]
        %v4917 = vld [vmem:[%s3875 + $0x94] sm:$0xf]
        %v4918 = vld [vmem:[%s3875 + $0x98] sm:$0xf]
        %v4919 = vld [vmem:[%s3875 + $0x9c] sm:$0x1]
        %v4920 = vld [vmem:[%s3875 + $0xa8] sm:$0xf]
        %v4921 = vld [vmem:[%s3875 + $0xac] sm:$0xf]
        %v4922 = vld [vmem:[%s3875 + $0xb0] sm:$0x1]
        %v4923 = vld [vmem:[%s3875 + $0xbc] sm:$0xf]
        %v4924 = vld [vmem:[%s3875 + $0xc0] sm:$0xf]
        %v4925 = vld [vmem:[%s3875 + $0xc4] sm:$0x1]
        %v4926 = vld [vmem:[%s3875 + $0xd0] sm:$0xf]
        %v4927 = vld [vmem:[%s3875 + $0xd4] sm:$0xf]
        %v4928 = vld [vmem:[%s3875 + $0xd8] sm:$0x1]
        %v4929 = vld [vmem:[%s3875 + $0xe4] sm:$0xf]
        %v4930 = vld [vmem:[%s3875 + $0xe8] sm:$0xf]
        %v4931 = vld [vmem:[%s3875 + $0xec] sm:$0x1]
        %v4932 = vld [vmem:[%s3875 + $0xf8] sm:$0xf]
        %v4933 = vld [vmem:[%s3875 + $0xfc] sm:$0xf]
        %v4934 = vld [vmem:[%s3875 + $0x100] sm:$0x1]
        %v4935 = vld [vmem:[%s3875 + $0x10c] sm:$0xf]
        %v4936 = vld [vmem:[%s3875 + $0x110] sm:$0xf]
        %v4937 = vld [vmem:[%s3875 + $0x114] sm:$0x1]
        %v4938 = vld [vmem:[%s3875 + $0x120] sm:$0xf]
        %v4939 = vld [vmem:[%s3875 + $0x124] sm:$0xf]
        %v4940 = vld [vmem:[%s3875 + $0x128] sm:$0x1]
        %v4941 = vld [vmem:[%s3875 + $0x134] sm:$0xf]
        %v4942 = vld [vmem:[%s3875 + $0x138] sm:$0xf]
        %v4943 = vld [vmem:[%s3875 + $0x13c] sm:$0x1]
        %v4945 = vshrl.u32 %v4896, 16
        %v4947 = vrot.slane %v4945, 4
        %v4948 = vshll.u32 %v4896, 16
        %v4950 = vrot.slane %v4948, 5
        %v4951 = vor.u32 %v4947, %v4950
        %v4952 = vrot.slane %v4951, 4
        %v4954 = vshll.u32 %v4897, 16
        %v4956 = vrot.slane %v4954, 5
        %v4957 = vsel %vm1443, %v4952, %v4956
        %v4958 = vshrl.u32 %v4897, 16
        %v4960 = vrot.slane %v4958, 4
        %v4961 = vor.u32 %v4960, %v4956
        %v4962 = vrot.slane %v4961, 4
        %v4964 = vshll.u32 %v4898, 16
        %v4966 = vrot.slane %v4964, 5
        %v4967 = vsel %vm1443, %v4962, %v4966
        %v4969 = vshrl.u32 %v4899, 16
        %v4971 = vrot.slane %v4969, 4
        %v4972 = vshll.u32 %v4899, 16
        %v4974 = vrot.slane %v4972, 5
        %v4975 = vor.u32 %v4971, %v4974
        %v4976 = vrot.slane %v4975, 4
        %v4978 = vshll.u32 %v4900, 16
        %v4980 = vrot.slane %v4978, 5
        %v4981 = vsel %vm1443, %v4976, %v4980
        %v4982 = vshrl.u32 %v4900, 16
        %v4984 = vrot.slane %v4982, 4
        %v4985 = vor.u32 %v4984, %v4980
        %v4986 = vrot.slane %v4985, 4
        %v4988 = vshll.u32 %v4901, 16
        %v4990 = vrot.slane %v4988, 5
        %v4991 = vsel %vm1443, %v4986, %v4990
        %v4993 = vshrl.u32 %v4902, 16
        %v4995 = vrot.slane %v4993, 4
        %v4996 = vshll.u32 %v4902, 16
        %v4998 = vrot.slane %v4996, 5
        %v4999 = vor.u32 %v4995, %v4998
        %v5000 = vrot.slane %v4999, 4
        %v5002 = vshll.u32 %v4903, 16
        %v5004 = vrot.slane %v5002, 5
        %v5005 = vsel %vm1443, %v5000, %v5004
        %v5006 = vshrl.u32 %v4903, 16
        %v5008 = vrot.slane %v5006, 4
        %v5009 = vor.u32 %v5008, %v5004
        %v5010 = vrot.slane %v5009, 4
        %v5012 = vshll.u32 %v4904, 16
        %v5014 = vrot.slane %v5012, 5
        %v5015 = vsel %vm1443, %v5010, %v5014
        %v5017 = vshrl.u32 %v4905, 16
        %v5019 = vrot.slane %v5017, 4
        %v5020 = vshll.u32 %v4905, 16
        %v5022 = vrot.slane %v5020, 5
        %v5023 = vor.u32 %v5019, %v5022
        %v5024 = vrot.slane %v5023, 4
        %v5026 = vshll.u32 %v4906, 16
        %v5028 = vrot.slane %v5026, 5
        %v5029 = vsel %vm1443, %v5024, %v5028
        %v5030 = vshrl.u32 %v4906, 16
        %v5032 = vrot.slane %v5030, 4
        %v5033 = vor.u32 %v5032, %v5028
        %v5034 = vrot.slane %v5033, 4
        %v5036 = vshll.u32 %v4907, 16
        %v5038 = vrot.slane %v5036, 5
        %v5039 = vsel %vm1443, %v5034, %v5038
        %v5041 = vshrl.u32 %v4908, 16
        %v5043 = vrot.slane %v5041, 4
        %v5044 = vshll.u32 %v4908, 16
        %v5046 = vrot.slane %v5044, 5
        %v5047 = vor.u32 %v5043, %v5046
        %v5048 = vrot.slane %v5047, 4
        %v5050 = vshll.u32 %v4909, 16
        %v5052 = vrot.slane %v5050, 5
        %v5053 = vsel %vm1443, %v5048, %v5052
        %v5054 = vshrl.u32 %v4909, 16
        %v5056 = vrot.slane %v5054, 4
        %v5057 = vor.u32 %v5056, %v5052
        %v5058 = vrot.slane %v5057, 4
        %v5060 = vshll.u32 %v4910, 16
        %v5062 = vrot.slane %v5060, 5
        %v5063 = vsel %vm1443, %v5058, %v5062
        %v5065 = vshrl.u32 %v4911, 16
        %v5067 = vrot.slane %v5065, 4
        %v5068 = vshll.u32 %v4911, 16
        %v5070 = vrot.slane %v5068, 5
        %v5071 = vor.u32 %v5067, %v5070
        %v5072 = vrot.slane %v5071, 4
        %v5074 = vshll.u32 %v4912, 16
        %v5076 = vrot.slane %v5074, 5
        %v5077 = vsel %vm1443, %v5072, %v5076
        %v5078 = vshrl.u32 %v4912, 16
        %v5080 = vrot.slane %v5078, 4
        %v5081 = vor.u32 %v5080, %v5076
        %v5082 = vrot.slane %v5081, 4
        %v5084 = vshll.u32 %v4913, 16
        %v5086 = vrot.slane %v5084, 5
        %v5087 = vsel %vm1443, %v5082, %v5086
        %v5089 = vshrl.u32 %v4914, 16
        %v5091 = vrot.slane %v5089, 4
        %v5092 = vshll.u32 %v4914, 16
        %v5094 = vrot.slane %v5092, 5
        %v5095 = vor.u32 %v5091, %v5094
        %v5096 = vrot.slane %v5095, 4
        %v5098 = vshll.u32 %v4915, 16
        %v5100 = vrot.slane %v5098, 5
        %v5101 = vsel %vm1443, %v5096, %v5100
        %v5102 = vshrl.u32 %v4915, 16
        %v5104 = vrot.slane %v5102, 4
        %v5105 = vor.u32 %v5104, %v5100
        %v5106 = vrot.slane %v5105, 4
        %v5108 = vshll.u32 %v4916, 16
        %v5110 = vrot.slane %v5108, 5
        %v5111 = vsel %vm1443, %v5106, %v5110
        %v5113 = vshrl.u32 %v4917, 16
        %v5115 = vrot.slane %v5113, 4
        %v5116 = vshll.u32 %v4917, 16
        %v5118 = vrot.slane %v5116, 5
        %v5119 = vor.u32 %v5115, %v5118
        %v5120 = vrot.slane %v5119, 4
        %v5122 = vshll.u32 %v4918, 16
        %v5124 = vrot.slane %v5122, 5
        %v5125 = vsel %vm1443, %v5120, %v5124
        %v5126 = vshrl.u32 %v4918, 16
        %v5128 = vrot.slane %v5126, 4
        %v5129 = vor.u32 %v5128, %v5124
        %v5130 = vrot.slane %v5129, 4
        %v5132 = vshll.u32 %v4919, 16
        %v5134 = vrot.slane %v5132, 5
        %v5135 = vsel %vm1443, %v5130, %v5134
        %v5137 = vshrl.u32 %v4920, 16
        %v5139 = vrot.slane %v5137, 4
        %v5140 = vshll.u32 %v4920, 16
        %v5142 = vrot.slane %v5140, 5
        %v5143 = vor.u32 %v5139, %v5142
        %v5144 = vrot.slane %v5143, 4
        %v5146 = vshll.u32 %v4921, 16
        %v5148 = vrot.slane %v5146, 5
        %v5149 = vsel %vm1443, %v5144, %v5148
        %v5150 = vshrl.u32 %v4921, 16
        %v5152 = vrot.slane %v5150, 4
        %v5153 = vor.u32 %v5152, %v5148
        %v5154 = vrot.slane %v5153, 4
        %v5156 = vshll.u32 %v4922, 16
        %v5158 = vrot.slane %v5156, 5
        %v5159 = vsel %vm1443, %v5154, %v5158
        %v5161 = vshrl.u32 %v4923, 16
        %v5163 = vrot.slane %v5161, 4
        %v5164 = vshll.u32 %v4923, 16
        %v5166 = vrot.slane %v5164, 5
        %v5167 = vor.u32 %v5163, %v5166
        %v5168 = vrot.slane %v5167, 4
        %v5170 = vshll.u32 %v4924, 16
        %v5172 = vrot.slane %v5170, 5
        %v5173 = vsel %vm1443, %v5168, %v5172
        %v5174 = vshrl.u32 %v4924, 16
        %v5176 = vrot.slane %v5174, 4
        %v5177 = vor.u32 %v5176, %v5172
        %v5178 = vrot.slane %v5177, 4
        %v5180 = vshll.u32 %v4925, 16
        %v5182 = vrot.slane %v5180, 5
        %v5183 = vsel %vm1443, %v5178, %v5182
        %v5185 = vshrl.u32 %v4926, 16
        %v5187 = vrot.slane %v5185, 4
        %v5188 = vshll.u32 %v4926, 16
        %v5190 = vrot.slane %v5188, 5
        %v5191 = vor.u32 %v5187, %v5190
        %v5192 = vrot.slane %v5191, 4
        %v5194 = vshll.u32 %v4927, 16
        %v5196 = vrot.slane %v5194, 5
        %v5197 = vsel %vm1443, %v5192, %v5196
        %v5198 = vshrl.u32 %v4927, 16
        %v5200 = vrot.slane %v5198, 4
        %v5201 = vor.u32 %v5200, %v5196
        %v5202 = vrot.slane %v5201, 4
        %v5204 = vshll.u32 %v4928, 16
        %v5206 = vrot.slane %v5204, 5
        %v5207 = vsel %vm1443, %v5202, %v5206
        %v5209 = vshrl.u32 %v4929, 16
        %v5211 = vrot.slane %v5209, 4
        %v5212 = vshll.u32 %v4929, 16
        %v5214 = vrot.slane %v5212, 5
        %v5215 = vor.u32 %v5211, %v5214
        %v5216 = vrot.slane %v5215, 4
        %v5218 = vshll.u32 %v4930, 16
        %v5220 = vrot.slane %v5218, 5
        %v5221 = vsel %vm1443, %v5216, %v5220
        %v5222 = vshrl.u32 %v4930, 16
        %v5224 = vrot.slane %v5222, 4
        %v5225 = vor.u32 %v5224, %v5220
        %v5226 = vrot.slane %v5225, 4
        %v5228 = vshll.u32 %v4931, 16
        %v5230 = vrot.slane %v5228, 5
        %v5231 = vsel %vm1443, %v5226, %v5230
        %v5233 = vshrl.u32 %v4932, 16
        %v5235 = vrot.slane %v5233, 4
        %v5236 = vshll.u32 %v4932, 16
        %v5238 = vrot.slane %v5236, 5
        %v5239 = vor.u32 %v5235, %v5238
        %v5240 = vrot.slane %v5239, 4
        %v5242 = vshll.u32 %v4933, 16
        %v5244 = vrot.slane %v5242, 5
        %v5245 = vsel %vm1443, %v5240, %v5244
        %v5246 = vshrl.u32 %v4933, 16
        %v5248 = vrot.slane %v5246, 4
        %v5249 = vor.u32 %v5248, %v5244
        %v5250 = vrot.slane %v5249, 4
        %v5252 = vshll.u32 %v4934, 16
        %v5254 = vrot.slane %v5252, 5
        %v5255 = vsel %vm1443, %v5250, %v5254
        %v5257 = vshrl.u32 %v4935, 16
        %v5259 = vrot.slane %v5257, 4
        %v5260 = vshll.u32 %v4935, 16
        %v5262 = vrot.slane %v5260, 5
        %v5263 = vor.u32 %v5259, %v5262
        %v5264 = vrot.slane %v5263, 4
        %v5266 = vshll.u32 %v4936, 16
        %v5268 = vrot.slane %v5266, 5
        %v5269 = vsel %vm1443, %v5264, %v5268
        %v5270 = vshrl.u32 %v4936, 16
        %v5272 = vrot.slane %v5270, 4
        %v5273 = vor.u32 %v5272, %v5268
        %v5274 = vrot.slane %v5273, 4
        %v5276 = vshll.u32 %v4937, 16
        %v5278 = vrot.slane %v5276, 5
        %v5279 = vsel %vm1443, %v5274, %v5278
        %v5281 = vshrl.u32 %v4938, 16
        %v5283 = vrot.slane %v5281, 4
        %v5284 = vshll.u32 %v4938, 16
        %v5286 = vrot.slane %v5284, 5
        %v5287 = vor.u32 %v5283, %v5286
        %v5288 = vrot.slane %v5287, 4
        %v5290 = vshll.u32 %v4939, 16
        %v5292 = vrot.slane %v5290, 5
        %v5293 = vsel %vm1443, %v5288, %v5292
        %v5294 = vshrl.u32 %v4939, 16
        %v5296 = vrot.slane %v5294, 4
        %v5297 = vor.u32 %v5296, %v5292
        %v5298 = vrot.slane %v5297, 4
        %v5300 = vshll.u32 %v4940, 16
        %v5302 = vrot.slane %v5300, 5
        %v5303 = vsel %vm1443, %v5298, %v5302
        %v5305 = vshrl.u32 %v4941, 16
        %v5307 = vrot.slane %v5305, 4
        %v5308 = vshll.u32 %v4941, 16
        %v5310 = vrot.slane %v5308, 5
        %v5311 = vor.u32 %v5307, %v5310
        %v5312 = vrot.slane %v5311, 4
        %v5314 = vshll.u32 %v4942, 16
        %v5316 = vrot.slane %v5314, 5
        %v5317 = vsel %vm1443, %v5312, %v5316
        %v5318 = vshrl.u32 %v4942, 16
        %v5320 = vrot.slane %v5318, 4
        %v5321 = vor.u32 %v5320, %v5316
        %v5322 = vrot.slane %v5321, 4
        %v5324 = vshll.u32 %v4943, 16
        %v5326 = vrot.slane %v5324, 5
        %v5327 = vsel %vm1443, %v5322, %v5326
        %s5328 = scalar_lea.vmem %s219, 16
        %v5329 = vld [vmem:[%s5328] sm:$0x3]
        %v5330 = vunpack.c.l.b16 %v4957
        %v5331 = vunpack.c.l.b16 %v4967
        %v5332 = vunpack.c.l.b16 %v4981
        %v5333 = vunpack.c.l.b16 %v4991
        %v5334 = vunpack.c.l.b16 %v5005
        %v5335 = vunpack.c.l.b16 %v5015
        %v5336 = vunpack.c.l.b16 %v5029
        %v5337 = vunpack.c.l.b16 %v5039
        %v5338 = vunpack.c.l.b16 %v5053
        %v5339 = vunpack.c.l.b16 %v5063
        %v5340 = vunpack.c.l.b16 %v5077
        %v5341 = vunpack.c.l.b16 %v5087
        %v5342 = vunpack.c.l.b16 %v5101
        %v5343 = vunpack.c.l.b16 %v5111
        %v5344 = vunpack.c.l.b16 %v5125
        %v5345 = vunpack.c.l.b16 %v5135
        %v5346 = vunpack.c.l.b16 %v5149
        %v5347 = vunpack.c.l.b16 %v5159
        %v5348 = vunpack.c.l.b16 %v5173
        %v5349 = vunpack.c.l.b16 %v5183
        %v5350 = vunpack.c.l.b16 %v5197
        %v5351 = vunpack.c.l.b16 %v5207
        %v5352 = vunpack.c.l.b16 %v5221
        %v5353 = vunpack.c.l.b16 %v5231
        %v5354 = vunpack.c.l.b16 %v5245
        %v5355 = vunpack.c.l.b16 %v5255
        %v5356 = vunpack.c.l.b16 %v5269
        %v5357 = vunpack.c.l.b16 %v5279
        %v5358 = vunpack.c.l.b16 %v5293
        %v5359 = vunpack.c.l.b16 %v5303
        %v5360 = vunpack.c.l.b16 %v5317
        %v5361 = vunpack.c.l.b16 %v5327
        %v5362 = vpack.c.b16 %v5331, %v5330
        %v5363 = vpack.c.b16 %v5333, %v5332
        %v5364 = vpack.c.b16 %v5335, %v5334
        %v5365 = vpack.c.b16 %v5337, %v5336
        %v5366 = vpack.c.b16 %v5339, %v5338
        %v5367 = vpack.c.b16 %v5341, %v5340
        %v5368 = vpack.c.b16 %v5343, %v5342
        %v5369 = vpack.c.b16 %v5345, %v5344
        %v5370 = vpack.c.b16 %v5347, %v5346
        %v5371 = vpack.c.b16 %v5349, %v5348
        %v5372 = vpack.c.b16 %v5351, %v5350
        %v5373 = vpack.c.b16 %v5353, %v5352
        %v5374 = vpack.c.b16 %v5355, %v5354
        %v5375 = vpack.c.b16 %v5357, %v5356
        %v5376 = vpack.c.b16 %v5359, %v5358
        %v5377 = vpack.c.b16 %v5361, %v5360
        %v5379 = vsel %vm916, %v5362, 0
        %v5382 = vsel %vm916, %v5363, 0
        %v5385 = vsel %vm916, %v5364, 0
        %v5388 = vsel %vm916, %v5365, 0
        %v5391 = vsel %vm916, %v5366, 0
        %v5394 = vsel %vm916, %v5367, 0
        %v5397 = vsel %vm916, %v5368, 0
        %v5400 = vsel %vm916, %v5369, 0
        %v5403 = vsel %vm916, %v5370, 0
        %v5406 = vsel %vm916, %v5371, 0
        %v5409 = vsel %vm916, %v5372, 0
        %v5412 = vsel %vm916, %v5373, 0
        %v5415 = vsel %vm916, %v5374, 0
        %v5418 = vsel %vm916, %v5375, 0
        %v5421 = vsel %vm916, %v5376, 0
        %v5424 = vsel %vm916, %v5377, 0
        %v5427 = vand.u32 %v5329, %v968
        %5429 = vmatprep.subr.bf16.mxu0 0
        %5430 = vmatpush1.bf16.msra.mxu0 %v5427
        %5431 = vmatprep.subr.bf16.mxu0 0
        %5432 = vmatpush1.bf16.msra.mxu0 0
        %5433 = vmatprep.subr.bf16.mxu0 0
        %5434 = vmatpush1.bf16.msra.mxu0 0
        %5435 = vmatprep.subr.bf16.mxu0 0
        %5436 = vmatpush1.bf16.msra.mxu0 0
        %5437 = vmatprep.subr.bf16.mxu0 0
        %5438 = vmatpush1.bf16.msra.mxu0 0
        %5439 = vmatprep.subr.bf16.mxu0 0
        %5440 = vmatpush1.bf16.msra.mxu0 0
        %5441 = vmatprep.subr.bf16.mxu0 0
        %5442 = vmatpush1.bf16.msra.mxu0 0
        %5443 = vmatprep.subr.bf16.mxu0 0
        %5444 = vmatpush1.bf16.msra.mxu0 0
        %5445 = vmatprep.subr.bf16.mxu0 0
        %5446 = vmatpush1.bf16.msra.mxu0 0
        %5447 = vmatprep.subr.bf16.mxu0 0
        %5448 = vmatpush1.bf16.msra.mxu0 0
        %5449 = vmatprep.subr.bf16.mxu0 0
        %5450 = vmatpush1.bf16.msra.mxu0 0
        %5451 = vmatprep.subr.bf16.mxu0 0
        %5452 = vmatpush1.bf16.msra.mxu0 0
        %5453 = vmatprep.subr.bf16.mxu0 0
        %5454 = vmatpush1.bf16.msra.mxu0 0
        %5455 = vmatprep.subr.bf16.mxu0 0
        %5456 = vmatpush1.bf16.msra.mxu0 0
        %5457 = vmatprep.subr.bf16.mxu0 0
        %5458 = vmatpush1.bf16.msra.mxu0 0
        %5459 = vmatprep.subr.bf16.mxu0 0
        %5460 = vmatpush1.bf16.msra.mxu0 0
        %5461 = vmatprep.mubr.bf16.mxu0 0
        %5462 = vmatmul.mubr.bf16.gmra.mrb[0].mxu0 %v5379
        %v5463 = vpop.f32.mrb[0].mxu0
        %v5464 = vadd.f32 0.0, %v5463
        %v5465 = vpop.f32.mrb[0].mxu0
        %v5466 = vpop.f32.mrb[0].mxu0
        %v5467 = vadd.f32 0.0, %v5466
        %v5468 = vpop.f32.mrb[0].mxu0
        %5469 = vmatprep.mubr.bf16.mxu0 0
        %5470 = vmatmul.mubr.bf16.gmra.mrb[0].mxu0 %v5382
        %v5471 = vpop.f32.mrb[0].mxu0
        %v5472 = vadd.f32 0.0, %v5471
        %v5473 = vpop.f32.mrb[0].mxu0
        %v5474 = vpop.f32.mrb[0].mxu0
        %v5475 = vadd.f32 0.0, %v5474
        %v5476 = vpop.f32.mrb[0].mxu0
        %5477 = vmatprep.mubr.bf16.mxu0 0
        %5478 = vmatmul.mubr.bf16.gmra.mrb[0].mxu0 %v5385
        %v5479 = vpop.f32.mrb[0].mxu0
        %v5480 = vadd.f32 0.0, %v5479
        %v5481 = vpop.f32.mrb[0].mxu0
        %v5482 = vpop.f32.mrb[0].mxu0
        %v5483 = vadd.f32 0.0, %v5482
        %v5484 = vpop.f32.mrb[0].mxu0
        %5485 = vmatprep.mubr.bf16.mxu0 0
        %5486 = vmatmul.mubr.bf16.gmra.mrb[0].mxu0 %v5388
        %v5487 = vpop.f32.mrb[0].mxu0
        %v5488 = vadd.f32 0.0, %v5487
        %v5489 = vpop.f32.mrb[0].mxu0
        %v5490 = vpop.f32.mrb[0].mxu0
        %v5491 = vadd.f32 0.0, %v5490
        %v5492 = vpop.f32.mrb[0].mxu0
        %5493 = vmatprep.mubr.bf16.mxu0 0
        %5494 = vmatmul.mubr.bf16.gmra.mrb[0].mxu0 %v5391
        %v5495 = vpop.f32.mrb[0].mxu0
        %v5496 = vadd.f32 0.0, %v5495
        %v5497 = vpop.f32.mrb[0].mxu0
        %v5498 = vpop.f32.mrb[0].mxu0
        %v5499 = vadd.f32 0.0, %v5498
        %v5500 = vpop.f32.mrb[0].mxu0
        %5501 = vmatprep.mubr.bf16.mxu0 0
        %5502 = vmatmul.mubr.bf16.gmra.mrb[0].mxu0 %v5394
        %v5503 = vpop.f32.mrb[0].mxu0
        %v5504 = vadd.f32 0.0, %v5503
        %v5505 = vpop.f32.mrb[0].mxu0
        %v5506 = vpop.f32.mrb[0].mxu0
        %v5507 = vadd.f32 0.0, %v5506
        %v5508 = vpop.f32.mrb[0].mxu0
        %5509 = vmatprep.mubr.bf16.mxu0 0
        %5510 = vmatmul.mubr.bf16.gmra.mrb[0].mxu0 %v5397
        %v5511 = vpop.f32.mrb[0].mxu0
        %v5512 = vadd.f32 0.0, %v5511
        %v5513 = vpop.f32.mrb[0].mxu0
        %v5514 = vpop.f32.mrb[0].mxu0
        %v5515 = vadd.f32 0.0, %v5514
        %v5516 = vpop.f32.mrb[0].mxu0
        %5517 = vmatprep.mubr.bf16.mxu0 0
        %5518 = vmatmul.mubr.bf16.gmra.mrb[0].mxu0 %v5400
        %v5519 = vpop.f32.mrb[0].mxu0
        %v5520 = vadd.f32 0.0, %v5519
        %v5521 = vpop.f32.mrb[0].mxu0
        %v5522 = vpop.f32.mrb[0].mxu0
        %v5523 = vadd.f32 0.0, %v5522
        %v5524 = vpop.f32.mrb[0].mxu0
        %5525 = vmatprep.mubr.bf16.mxu0 0
        %5526 = vmatmul.mubr.bf16.gmra.mrb[0].mxu0 %v5403
        %v5527 = vpop.f32.mrb[0].mxu0
        %v5528 = vadd.f32 0.0, %v5527
        %v5529 = vpop.f32.mrb[0].mxu0
        %v5530 = vpop.f32.mrb[0].mxu0
        %v5531 = vadd.f32 0.0, %v5530
        %v5532 = vpop.f32.mrb[0].mxu0
        %5533 = vmatprep.mubr.bf16.mxu0 0
        %5534 = vmatmul.mubr.bf16.gmra.mrb[0].mxu0 %v5406
        %v5535 = vpop.f32.mrb[0].mxu0
        %v5536 = vadd.f32 0.0, %v5535
        %v5537 = vpop.f32.mrb[0].mxu0
        %v5538 = vpop.f32.mrb[0].mxu0
        %v5539 = vadd.f32 0.0, %v5538
        %v5540 = vpop.f32.mrb[0].mxu0
        %5541 = vmatprep.mubr.bf16.mxu0 0
        %5542 = vmatmul.mubr.bf16.gmra.mrb[0].mxu0 %v5409
        %v5543 = vpop.f32.mrb[0].mxu0
        %v5544 = vadd.f32 0.0, %v5543
        %v5545 = vpop.f32.mrb[0].mxu0
        %v5546 = vpop.f32.mrb[0].mxu0
        %v5547 = vadd.f32 0.0, %v5546
        %v5548 = vpop.f32.mrb[0].mxu0
        %5549 = vmatprep.mubr.bf16.mxu0 0
        %5550 = vmatmul.mubr.bf16.gmra.mrb[0].mxu0 %v5412
        %v5551 = vpop.f32.mrb[0].mxu0
        %v5552 = vadd.f32 0.0, %v5551
        %v5553 = vpop.f32.mrb[0].mxu0
        %v5554 = vpop.f32.mrb[0].mxu0
        %v5555 = vadd.f32 0.0, %v5554
        %v5556 = vpop.f32.mrb[0].mxu0
        %5557 = vmatprep.mubr.bf16.mxu0 0
        %5558 = vmatmul.mubr.bf16.gmra.mrb[0].mxu0 %v5415
        %v5559 = vpop.f32.mrb[0].mxu0
        %v5560 = vadd.f32 0.0, %v5559
        %v5561 = vpop.f32.mrb[0].mxu0
        %v5562 = vpop.f32.mrb[0].mxu0
        %v5563 = vadd.f32 0.0, %v5562
        %v5564 = vpop.f32.mrb[0].mxu0
        %5565 = vmatprep.mubr.bf16.mxu0 0
        %5566 = vmatmul.mubr.bf16.gmra.mrb[0].mxu0 %v5418
        %v5567 = vpop.f32.mrb[0].mxu0
        %v5568 = vadd.f32 0.0, %v5567
        %v5569 = vpop.f32.mrb[0].mxu0
        %v5570 = vpop.f32.mrb[0].mxu0
        %v5571 = vadd.f32 0.0, %v5570
        %v5572 = vpop.f32.mrb[0].mxu0
        %5573 = vmatprep.mubr.bf16.mxu0 0
        %5574 = vmatmul.mubr.bf16.gmra.mrb[0].mxu0 %v5421
        %v5575 = vpop.f32.mrb[0].mxu0
        %v5576 = vadd.f32 0.0, %v5575
        %v5577 = vpop.f32.mrb[0].mxu0
        %v5578 = vpop.f32.mrb[0].mxu0
        %v5579 = vadd.f32 0.0, %v5578
        %v5580 = vpop.f32.mrb[0].mxu0
        %5581 = vmatprep.mubr.bf16.mxu0 0
        %5582 = vmatmul.mubr.bf16.gmra.mrb[0].mxu0 %v5424
        %v5583 = vpop.f32.mrb[0].mxu0
        %v5584 = vadd.f32 0.0, %v5583
        %v5585 = vpop.f32.mrb[0].mxu0
        %v5586 = vpop.f32.mrb[0].mxu0
        %v5587 = vadd.f32 0.0, %v5586
        %v5588 = vpop.f32.mrb[0].mxu0
        %5589 = vdwg.mxu0
        %v5590 = vadd.f32 %v4864, %v5464
        %v5591 = vadd.f32 %v4865, %v5467
        %v5592 = vadd.f32 %v4866, %v5472
        %v5593 = vadd.f32 %v4867, %v5475
        %v5594 = vadd.f32 %v4868, %v5480
        %v5595 = vadd.f32 %v4869, %v5483
        %v5596 = vadd.f32 %v4870, %v5488
        %v5597 = vadd.f32 %v4871, %v5491
        %v5598 = vadd.f32 %v4872, %v5496
        %v5599 = vadd.f32 %v4873, %v5499
        %v5600 = vadd.f32 %v4874, %v5504
        %v5601 = vadd.f32 %v4875, %v5507
        %v5602 = vadd.f32 %v4876, %v5512
        %v5603 = vadd.f32 %v4877, %v5515
        %v5604 = vadd.f32 %v4878, %v5520
        %v5605 = vadd.f32 %v4879, %v5523
        %v5606 = vadd.f32 %v4880, %v5528
        %v5607 = vadd.f32 %v4881, %v5531
        %v5608 = vadd.f32 %v4882, %v5536
        %v5609 = vadd.f32 %v4883, %v5539
        %v5610 = vadd.f32 %v4884, %v5544
        %v5611 = vadd.f32 %v4885, %v5547
        %v5612 = vadd.f32 %v4886, %v5552
        %v5613 = vadd.f32 %v4887, %v5555
        %v5614 = vadd.f32 %v4888, %v5560
        %v5615 = vadd.f32 %v4889, %v5563
        %v5616 = vadd.f32 %v4890, %v5568
        %v5617 = vadd.f32 %v4891, %v5571
        %v5618 = vadd.f32 %v4892, %v5576
        %v5619 = vadd.f32 %v4893, %v5579
        %v5620 = vadd.f32 %v4894, %v5584
        %v5621 = vadd.f32 %v4895, %v5587
        %v5622 = vld [vmem:[%s222] sm:$0x1]
        %v5624 = vlaneseq
        %v5625 = vshrl.u32 %v5624, 7
        %v5626 = vsub.s32 0, %v5625
        %v5627 = vrot.slane %v5622, %v5626
        %v5629 = vadd.f32 %v5590, %v5627
        %v5630 = vadd.f32 %v5591, %v5627
        %v5631 = vadd.f32 %v5592, %v5627
        %v5632 = vadd.f32 %v5593, %v5627
        %v5633 = vadd.f32 %v5594, %v5627
        %v5634 = vadd.f32 %v5595, %v5627
        %v5635 = vadd.f32 %v5596, %v5627
        %v5636 = vadd.f32 %v5597, %v5627
        %v5637 = vadd.f32 %v5598, %v5627
        %v5638 = vadd.f32 %v5599, %v5627
        %v5639 = vadd.f32 %v5600, %v5627
        %v5640 = vadd.f32 %v5601, %v5627
        %v5641 = vadd.f32 %v5602, %v5627
        %v5642 = vadd.f32 %v5603, %v5627
        %v5643 = vadd.f32 %v5604, %v5627
        %v5644 = vadd.f32 %v5605, %v5627
        %v5645 = vadd.f32 %v5606, %v5627
        %v5646 = vadd.f32 %v5607, %v5627
        %v5647 = vadd.f32 %v5608, %v5627
        %v5648 = vadd.f32 %v5609, %v5627
        %v5649 = vadd.f32 %v5610, %v5627
        %v5650 = vadd.f32 %v5611, %v5627
        %v5651 = vadd.f32 %v5612, %v5627
        %v5652 = vadd.f32 %v5613, %v5627
        %v5653 = vadd.f32 %v5614, %v5627
        %v5654 = vadd.f32 %v5615, %v5627
        %v5655 = vadd.f32 %v5616, %v5627
        %v5656 = vadd.f32 %v5617, %v5627
        %v5657 = vadd.f32 %v5618, %v5627
        %v5658 = vadd.f32 %v5619, %v5627
        %v5659 = vadd.f32 %v5620, %v5627
        %v5660 = vadd.f32 %v5621, %v5627
        %v5661 = vmax.f32 %v5629, 0.0
        %v5662 = vmax.f32 %v5630, 0.0
        %v5663 = vmax.f32 %v5631, 0.0
        %v5664 = vmax.f32 %v5632, 0.0
        %v5665 = vmax.f32 %v5633, 0.0
        %v5666 = vmax.f32 %v5634, 0.0
        %v5667 = vmax.f32 %v5635, 0.0
        %v5668 = vmax.f32 %v5636, 0.0
        %v5669 = vmax.f32 %v5637, 0.0
        %v5670 = vmax.f32 %v5638, 0.0
        %v5671 = vmax.f32 %v5639, 0.0
        %v5672 = vmax.f32 %v5640, 0.0
        %v5673 = vmax.f32 %v5641, 0.0
        %v5674 = vmax.f32 %v5642, 0.0
        %v5675 = vmax.f32 %v5643, 0.0
        %v5676 = vmax.f32 %v5644, 0.0
        %v5677 = vmax.f32 %v5645, 0.0
        %v5678 = vmax.f32 %v5646, 0.0
        %v5679 = vmax.f32 %v5647, 0.0
        %v5680 = vmax.f32 %v5648, 0.0
        %v5681 = vmax.f32 %v5649, 0.0
        %v5682 = vmax.f32 %v5650, 0.0
        %v5683 = vmax.f32 %v5651, 0.0
        %v5684 = vmax.f32 %v5652, 0.0
        %v5685 = vmax.f32 %v5653, 0.0
        %v5686 = vmax.f32 %v5654, 0.0
        %v5687 = vmax.f32 %v5655, 0.0
        %v5688 = vmax.f32 %v5656, 0.0
        %v5689 = vmax.f32 %v5657, 0.0
        %v5690 = vmax.f32 %v5658, 0.0
        %v5691 = vmax.f32 %v5659, 0.0
        %v5692 = vmax.f32 %v5660, 0.0
        %v5693 = vpack.c.bf16 %v5662, %v5661
        %v5694 = vpack.c.bf16 %v5664, %v5663
        %v5695 = vpack.c.bf16 %v5666, %v5665
        %v5696 = vpack.c.bf16 %v5668, %v5667
        %v5697 = vpack.c.bf16 %v5670, %v5669
        %v5698 = vpack.c.bf16 %v5672, %v5671
        %v5699 = vpack.c.bf16 %v5674, %v5673
        %v5700 = vpack.c.bf16 %v5676, %v5675
        %v5701 = vpack.c.bf16 %v5678, %v5677
        %v5702 = vpack.c.bf16 %v5680, %v5679
        %v5703 = vpack.c.bf16 %v5682, %v5681
        %v5704 = vpack.c.bf16 %v5684, %v5683
        %v5705 = vpack.c.bf16 %v5686, %v5685
        %v5706 = vpack.c.bf16 %v5688, %v5687
        %v5707 = vpack.c.bf16 %v5690, %v5689
        %v5708 = vpack.c.bf16 %v5692, %v5691
        %v5725 = vunpack.c.l.b16 %v5693
        %v5726 = vunpack.c.h.b16 %v5693
        %v5727 = vunpack.c.l.b16 %v5694
        %v5728 = vunpack.c.h.b16 %v5694
        %v5729 = vunpack.c.l.b16 %v5695
        %v5730 = vunpack.c.h.b16 %v5695
        %v5731 = vunpack.c.l.b16 %v5696
        %v5732 = vunpack.c.h.b16 %v5696
        %v5733 = vunpack.c.l.b16 %v5697
        %v5734 = vunpack.c.h.b16 %v5697
        %v5735 = vunpack.c.l.b16 %v5698
        %v5736 = vunpack.c.h.b16 %v5698
        %v5737 = vunpack.c.l.b16 %v5699
        %v5738 = vunpack.c.h.b16 %v5699
        %v5739 = vunpack.c.l.b16 %v5700
        %v5740 = vunpack.c.h.b16 %v5700
        %v5741 = vunpack.c.l.b16 %v5701
        %v5742 = vunpack.c.h.b16 %v5701
        %v5743 = vunpack.c.l.b16 %v5702
        %v5744 = vunpack.c.h.b16 %v5702
        %v5745 = vunpack.c.l.b16 %v5703
        %v5746 = vunpack.c.h.b16 %v5703
        %v5747 = vunpack.c.l.b16 %v5704
        %v5748 = vunpack.c.h.b16 %v5704
        %v5749 = vunpack.c.l.b16 %v5705
        %v5750 = vunpack.c.h.b16 %v5705
        %v5751 = vunpack.c.l.b16 %v5706
        %v5752 = vunpack.c.h.b16 %v5706
        %v5753 = vunpack.c.l.b16 %v5707
        %v5754 = vunpack.c.h.b16 %v5707
        %v5755 = vunpack.c.l.b16 %v5708
        %v5756 = vunpack.c.h.b16 %v5708
        %v5757 = vpack.c.b16 %v5725, %v5725
        %v5758 = vpack.c.b16 %v5726, %v5726
        %v5759 = vpack.c.b16 %v5727, %v5727
        %v5760 = vpack.c.b16 %v5728, %v5728
        %v5761 = vpack.c.b16 %v5729, %v5729
        %v5762 = vpack.c.b16 %v5730, %v5730
        %v5763 = vpack.c.b16 %v5731, %v5731
        %v5764 = vpack.c.b16 %v5732, %v5732
        %v5765 = vpack.c.b16 %v5733, %v5733
        %v5766 = vpack.c.b16 %v5734, %v5734
        %v5767 = vpack.c.b16 %v5735, %v5735
        %v5768 = vpack.c.b16 %v5736, %v5736
        %v5769 = vpack.c.b16 %v5737, %v5737
        %v5770 = vpack.c.b16 %v5738, %v5738
        %v5771 = vpack.c.b16 %v5739, %v5739
        %v5772 = vpack.c.b16 %v5740, %v5740
        %v5773 = vpack.c.b16 %v5741, %v5741
        %v5774 = vpack.c.b16 %v5742, %v5742
        %v5775 = vpack.c.b16 %v5743, %v5743
        %v5776 = vpack.c.b16 %v5744, %v5744
        %v5777 = vpack.c.b16 %v5745, %v5745
        %v5778 = vpack.c.b16 %v5746, %v5746
        %v5779 = vpack.c.b16 %v5747, %v5747
        %v5780 = vpack.c.b16 %v5748, %v5748
        %v5781 = vpack.c.b16 %v5749, %v5749
        %v5782 = vpack.c.b16 %v5750, %v5750
        %v5783 = vpack.c.b16 %v5751, %v5751
        %v5784 = vpack.c.b16 %v5752, %v5752
        %v5785 = vpack.c.b16 %v5753, %v5753
        %v5786 = vpack.c.b16 %v5754, %v5754
        %v5787 = vpack.c.b16 %v5755, %v5755
        %v5788 = vpack.c.b16 %v5756, %v5756
        %vm5821 = vcmask 519168
        %5822 = vst.msk [vmem:[%s210] sm:$0xf] %vm5821, %v5757
        %5823 = vst.msk [vmem:[%s210 + $0x4] sm:$0xf] %vm5821, %v5758
        %5824 = vst.msk [vmem:[%s210 + $0x8] sm:$0xf] %vm5821, %v5759
        %5825 = vst.msk [vmem:[%s210 + $0xc] sm:$0xf] %vm5821, %v5760
        %5826 = vst.msk [vmem:[%s210 + $0x10] sm:$0xf] %vm5821, %v5761
        %5827 = vst.msk [vmem:[%s210 + $0x14] sm:$0xf] %vm5821, %v5762
        %5828 = vst.msk [vmem:[%s210 + $0x18] sm:$0xf] %vm5821, %v5763
        %5829 = vst.msk [vmem:[%s210 + $0x1c] sm:$0xf] %vm5821, %v5764
        %5830 = vst.msk [vmem:[%s210 + $0x20] sm:$0xf] %vm5821, %v5765
        %5831 = vst.msk [vmem:[%s210 + $0x24] sm:$0xf] %vm5821, %v5766
        %5832 = vst.msk [vmem:[%s210 + $0x28] sm:$0xf] %vm5821, %v5767
        %5833 = vst.msk [vmem:[%s210 + $0x2c] sm:$0xf] %vm5821, %v5768
        %5834 = vst.msk [vmem:[%s210 + $0x30] sm:$0xf] %vm5821, %v5769
        %5835 = vst.msk [vmem:[%s210 + $0x34] sm:$0xf] %vm5821, %v5770
        %5836 = vst.msk [vmem:[%s210 + $0x38] sm:$0xf] %vm5821, %v5771
        %5837 = vst.msk [vmem:[%s210 + $0x3c] sm:$0xf] %vm5821, %v5772
        %5838 = vst.msk [vmem:[%s210 + $0x40] sm:$0xf] %vm5821, %v5773
        %5839 = vst.msk [vmem:[%s210 + $0x44] sm:$0xf] %vm5821, %v5774
        %5840 = vst.msk [vmem:[%s210 + $0x48] sm:$0xf] %vm5821, %v5775
        %5841 = vst.msk [vmem:[%s210 + $0x4c] sm:$0xf] %vm5821, %v5776
        %5842 = vst.msk [vmem:[%s210 + $0x50] sm:$0xf] %vm5821, %v5777
        %5843 = vst.msk [vmem:[%s210 + $0x54] sm:$0xf] %vm5821, %v5778
        %5844 = vst.msk [vmem:[%s210 + $0x58] sm:$0xf] %vm5821, %v5779
        %5845 = vst.msk [vmem:[%s210 + $0x5c] sm:$0xf] %vm5821, %v5780
        %5846 = vst.msk [vmem:[%s210 + $0x60] sm:$0xf] %vm5821, %v5781
        %5847 = vst.msk [vmem:[%s210 + $0x64] sm:$0xf] %vm5821, %v5782
        %5848 = vst.msk [vmem:[%s210 + $0x68] sm:$0xf] %vm5821, %v5783
        %5849 = vst.msk [vmem:[%s210 + $0x6c] sm:$0xf] %vm5821, %v5784
        %5850 = vst.msk [vmem:[%s210 + $0x70] sm:$0xf] %vm5821, %v5785
        %5851 = vst.msk [vmem:[%s210 + $0x74] sm:$0xf] %vm5821, %v5786
        %5852 = vst.msk [vmem:[%s210 + $0x78] sm:$0xf] %vm5821, %v5787
        %5853 = vst.msk [vmem:[%s210 + $0x7c] sm:$0xf] %vm5821, %v5788
        %s5854 = sand.u32 %s126, 1
        %s5855 = scalar_lea.sflag [#allocation4], %s5854
        %s5856 = sand.u32 %s126, 1
        %s5857 = smul.addr %s5856, 128
        %s5858 = scalar_lea.vmem [#allocation3], %s5857
        // Predicated region
        $region37: #{tpu_custom_call.1} parent=31 // pred_check
          %p5859 = pneg %p136
        $region38: #{tpu_custom_call.1} parent=31 // pred_check_branch
          %5861 = sbr.rel (%p5859) target = $region40
        $region39: #{tpu_custom_call.1} parent=31 // pred_region
          %s5862 = smul.u32 16, %s24
          %s5864 = ssub.s32 2048, 2048
          %5865 = vsyncadd %s5855, %s5864
          %s5866 = smul.addr %s5862, 2
          %s5867 = sadd.s32 %s23, %s5866
          %s5868 = smul.addr %s22, 32
          %s5869 = sadd.s32 %s5867, %s5868
          %s5870 = smul.addr %s5869, 64
          %s5871 = scalar_lea.hbm %s3, %s5870
          %s5872 = sshll.u32 %s5858, 4
          %s5873 = int_to_ptr.vmem [resolvable:$true] %s5872
          %5878 = dma.vmem_to_hbm [thread:$0]  %s5873, 2048, %s5871, %s5855, 64, 64, 4
        $region40: #{tpu_custom_call.1} parent=31 // pred_fallthru
          _
      $region32: #{tpu_custom_call.1} parent=5 // pred_fallthru
        _
      %p5879 = scmp.le.s32.totalorder 2, %s12
      // Predicated region
      $region41: #{tpu_custom_call.1} parent=5 // pred_check
        %p5880 = pneg %p5879
      $region42: #{tpu_custom_call.1} parent=5 // pred_check_branch
        %5882 = sbr.rel (%p5880) target = $region44
      $region43: #{tpu_custom_call.1} parent=5 // pred_region
        %s5883 = ssub.s32 %s12, 2
        // Predicated region
        $region45: #{tpu_custom_call.1} parent=43 // pred_check
          %p5884 = pneg %p142
        $region46: #{tpu_custom_call.1} parent=43 // pred_check_branch
          %5886 = sbr.rel (%p5884) target = $region48
        $region47: #{tpu_custom_call.1} parent=43 // pred_region
          %s5887 = sand.u32 %s127, 1
          %s5888 = scalar_lea.sflag [#allocation4], %s5887
          %s5889 = sand.u32 %s127, 1
          %s5890 = smul.addr %s5889, 128
          %s5891 = scalar_lea.vmem [#allocation3], %s5890
          %5892 = dma.done %s5888, 2048
        $region48: #{tpu_custom_call.1} parent=43 // pred_fallthru
          _
      $region44: #{tpu_custom_call.1} parent=5 // pred_fallthru
        _
    $region6: #{tpu_custom_call.1} parent=1 // loop_footer
      %s16 = sadd.s32 1, %s12
    $region7: #{tpu_custom_call.1} parent=1 // loop_footer_branch
      %11 = sbr.rel target = $region3
    $region8: #{tpu_custom_call.1} parent=1 // loop_exit
      _
    %5893 = vsyncpa [#allocation4], 1
    %s5894 = scalar_lea.sflag [#allocation4], 1
    %5895 = vsyncpa %s5894, 1

</llo_original>
